<compile_context>
chip_gen: v7x
topology: tpu7x:2x2x1
jax: 0.10.0
libtpu: 0.0.40
codegen_flags: <defaults>
</compile_context>

<pallas_src>
import functools

import numpy as np
import jax
import jax.numpy as jnp
from jax.experimental import pallas as pl
from jax.experimental.pallas import tpu as pltpu

_CROP = 40            # the [:, :, 0:40, 0:40] crop in the PyTorch forward
_LEAKY_SLOPE = 0.01   # F.leaky_relu default negative_slope
_LANE = 128
_DEFAULT_B_TILE = 16  # images per grid step (cap)


def _round_up(n, m):
    return -(-n // m) * m


def _leaky(x):
    return jnp.where(x >= 0, x, _LEAKY_SLOPE * x)


# ---------------------------------------------------------------------------
# Row-shift helper.  The kernel needs result[g] = x[g + i] (rows wrap; wrapped
# rows only ever land in never-selected slots).  pltpu.roll's sign convention
# is probed once on-device so the kernel is robust across jax versions; if the
# roll primitive is unavailable we fall back to a slice+concat shift.
# ---------------------------------------------------------------------------

_SHIFT_MODE = None  # "down" (jnp.roll convention), "up", or "slice"


def _probe_shift_mode():
    global _SHIFT_MODE
    if _SHIFT_MODE is not None:
        return _SHIFT_MODE
    try:
        def k(x_ref, o_ref):
            o_ref[...] = pltpu.roll(x_ref[...], 1, 0)

        x = jnp.tile(jnp.arange(8, dtype=jnp.float32)[:, None], (1, _LANE))
        y = pl.pallas_call(
            k, out_shape=jax.ShapeDtypeStruct((8, _LANE), jnp.float32))(x)
        v = float(np.asarray(jax.device_get(y))[0, 0])
        if v == 7.0:
            _SHIFT_MODE = "down"   # roll(x, s)[g] == x[g - s]  (jnp.roll-like)
        elif v == 1.0:
            _SHIFT_MODE = "up"     # roll(x, s)[g] == x[g + s]
        else:
            _SHIFT_MODE = "slice"
    except Exception:
        _SHIFT_MODE = "slice"
    return _SHIFT_MODE


def _shift_up(x, i):
    """result[g] = x[(g + i) % n] along the sublane (row) axis."""
    if i == 0:
        return x
    n = x.shape[0]
    mode = _SHIFT_MODE or "down"
    if mode == "down":
        return pltpu.roll(x, (n - i) % n, 0)
    if mode == "up":
        return pltpu.roll(x, i, 0)
    # TODO(synk): slice+concat fallback costs a relayout copy; only used if
    # pltpu.roll is unavailable on this jax version.
    return jnp.concatenate([x[i:], x[:i]], axis=0)


# ---------------------------------------------------------------------------
# Fused kernel (traced once; all shapes static, one batch tile per grid step)
# ---------------------------------------------------------------------------

def _fused_kernel(x_ref, t0_ref, b0_ref, s0_ref, t1_ref, b1_ref, s1_ref,
                  t2_ref, b2_ref, wf1_ref, dsel_ref,
                  bf1_ref, wf2_ref, bf2_ref, wf3_ref, bf3_ref, o_ref):
    cdt = t0_ref.dtype  # matmul-operand dtype (bf16 in production, f32 for check)

    def band_conv(x_op, t_ref):
        # conv(k=4, s=1, pad=2): 4 unshifted banded-Toeplitz matmuls, outputs
        # re-aligned with XLU row rotations (no unaligned sublane slices).
        y = jnp.dot(x_op, t_ref[0], preferred_element_type=jnp.float32)
        for i in range(1, t_ref.shape[0]):
            z = jnp.dot(x_op, t_ref[i], preferred_element_type=jnp.float32)
            y = y + _shift_up(z, i)
        return y

    def conv_pool(x_op, t_ref, b_ref, s_ref):
        y = band_conv(x_op, t_ref)                       # (M, 2*nh) f32
        nh = y.shape[1] // 2
        y = jnp.maximum(y[:, :nh], y[:, nh:])            # W pool (even/odd cols fused in T)
        y = jnp.maximum(y, _shift_up(y, 1))              # H pool (adjacent rows)
        a = _leaky(y + b_ref[...])                       # bias + leaky (commutes with max)
        # [:40] row crop + pooled-row compaction + zero re-padding for the next
        # conv: one 0/1 block-diagonal matmul (MXU is otherwise idle).
        xn = jnp.dot(s_ref[...], a.astype(cdt),
                     preferred_element_type=jnp.float32)
        return xn.astype(cdt)

    x = x_ref[0]                                         # (B*P0, W*Cin)
    x = conv_pool(x, t0_ref, b0_ref, s0_ref)             # (B*P1, nh0)
    x = conv_pool(x, t1_ref, b1_ref, s1_ref)             # (B*P2, nh1)
    a2 = _leaky(band_conv(x, t2_ref) + b2_ref[...]).astype(cdt)   # (B*P2, wc2*C2)

    # fc1: NCHW flatten + row gather folded into wf1_ref / dsel_ref.  Full-M
    # matmuls + rolls + one tiny 0/1 selection matmul (no M=1 row slices).
    g = jnp.dot(a2, wf1_ref[0], preferred_element_type=jnp.float32)
    for p in range(1, wf1_ref.shape[0]):
        gp = jnp.dot(a2, wf1_ref[p], preferred_element_type=jnp.float32)
        g = g + _shift_up(gp, p)
    h = jnp.dot(dsel_ref[...], g, preferred_element_type=jnp.float32) + bf1_ref[...]
    h = jnp.maximum(h, 0.0)                              # relu(fc1); drop1 p=0.0
    h = jnp.dot(h.astype(cdt), wf2_ref[...],
                preferred_element_type=jnp.float32) + bf2_ref[...]
    h = jnp.maximum(h, 0.0)                              # relu(fc2); drop2 p=0.0
    out = jnp.dot(h.astype(cdt), wf3_ref[...],
                  preferred_element_type=jnp.float32) + bf3_ref[...]
    o_ref[0] = out.astype(o_ref.dtype)                   # (B, n_classes padded to 128)


# ---------------------------------------------------------------------------
# One-time host-side weight repacking (numpy glue, not per-call work)
# ---------------------------------------------------------------------------

def _band_mats_pooled(w_oihw, win, k_lanes, wp, nh):
    """T[i]: (k_lanes, 2*nh).  Lanes [0:nh) = even output columns of the 2x2
    pool, [nh:2*nh) = odd; W zero-pad, the [:40] width crop and the pool's
    column selection are folded in (nh padded up to a multiple of 128)."""
    w = np.asarray(w_oihw, np.float32)
    cout, cin, kh, kw = w.shape
    assert win * cin <= k_lanes
    T = np.zeros((kh, k_lanes, 2 * nh), np.float32)
    for e in range(2):
        for q in range(wp):
            o_w = 2 * q + e
            dst = e * nh + q * cout
            for i in range(kh):
                for j in range(kw):
                    wi = o_w + j - 2
                    if 0 <= wi < win:
                        T[i, wi * cin:(wi + 1) * cin, dst:dst + cout] = w[:, :, i, j].T
    return T


def _band_mats_plain(w_oihw, win, k_lanes, wc):
    w = np.asarray(w_oihw, np.float32)
    cout, cin, kh, kw = w.shape
    assert win * cin <= k_lanes
    T = np.zeros((kh, k_lanes, wc * cout), np.float32)
    for q in range(wc):
        for i in range(kh):
            for j in range(kw):
                wi = q + j - 2
                if 0 <= wi < win:
                    T[i, wi * cin:(wi + 1) * cin, q * cout:(q + 1) * cout] = w[:, :, i, j].T
    return T


def _tile_bias(bias, reps, n):
    b = np.tile(np.asarray(bias, np.float32), reps)
    out = np.zeros((1, n), np.float32)
    out[0, :b.size] = b
    return out


def prepare_params(params, signal_dim, compute_dtype=jnp.bfloat16):
    """Repack PyTorch-style weights for the fused kernel (one-time, host side).

    NOTE: fc weights are expected as (in_features, out_features), i.e. the
    transpose of a PyTorch state_dict `weight`; transpose real checkpoints.
    """
    _probe_shift_mode()  # resolve pltpu.roll direction before any tracing

    H, W = signal_dim

    def crop(n):
        return min(n + 1, _CROP)

    w0 = np.asarray(params["w_conv0"], np.float32)
    w1 = np.asarray(params["w_conv1"], np.float32)
    w2 = np.asarray(params["w_conv2"], np.float32)
    c0, cin = w0.shape[0], w0.shape[1]
    c1, c2 = w1.shape[0], w2.shape[0]

    # conv0 (+ 2x2 pool)
    hc0, wc0 = crop(H), crop(W)
    hp0, wp0 = hc0 // 2, wc0 // 2
    k0 = W * cin
    nh0 = _round_up(wp0 * c0, _LANE)
    T0 = _band_mats_pooled(w0, W, k0, wp0, nh0)
    b0 = _tile_bias(params["b_conv0"], wp0, nh0)

    # conv1 (+ 2x2 pool) -- pooled half padded to 128 lanes (aligned split)
    hc1, wc1 = crop(hp0), crop(wp0)
    hp1, wp1 = hc1 // 2, wc1 // 2
    nh1 = _round_up(wp1 * c1, _LANE)
    T1 = _band_mats_pooled(w1, wp0, nh0, wp1, nh1)
    b1 = _tile_bias(params["b_conv1"], wp1, nh1)

    # conv2 (no pool)
    hc2, wc2 = crop(hp1), crop(wp1)
    T2 = _band_mats_plain(w2, wp1, nh1, wc2)
    b2 = _tile_bias(params["b_conv2"], wc2, wc2 * c2)

    # fc1: fold the NCHW flatten permutation; one (wc2*c2, 32) block per row.
    wf1 = np.asarray(params["w_fc1"], np.float32)
    nhid = wf1.shape[1]
    assert wf1.shape[0] == c2 * hc2 * wc2
    Wf1 = (wf1.reshape(c2, hc2, wc2, nhid)
              .transpose(1, 2, 0, 3)
              .reshape(hc2, wc2 * c2, nhid))

    # fc3 padded to a lane-dense (multiple-of-128) logits slab.
    wf3 = np.asarray(params["w_fc3"], np.float32)
    n_classes = wf3.shape[1]
    npad = _round_up(n_classes, _LANE)
    wf3p = np.zeros((wf3.shape[0], npad), np.float32)
    wf3p[:, :n_classes] = wf3
    bf3p = np.zeros((1, npad), np.float32)
    bf3p[0, :n_classes] = np.asarray(params["b_fc3"], np.float32)

    geom = dict(
        H=H, W=W, cin=cin,
        P0=_round_up(H + 4, 8), P1=_round_up(hp0 + 4, 8), P2=_round_up(hp1 + 4, 8),
        hp0=hp0, hp1=hp1, n_classes=n_classes, npad=npad)

    def cd(a):
        return jnp.asarray(np.asarray(a, np.float32), compute_dtype)

    def f32(a):
        return jnp.asarray(np.asarray(a, np.float32))

    weights = dict(
        T0=cd(T0), b0=f32(b0), T1=cd(T1), b1=f32(b1), T2=cd(T2), b2=f32(b2),
        Wf1=cd(Wf1),
        bf1=f32(np.asarray(params["b_fc1"], np.float32)[None, :]),
        wf2=cd(params["w_fc2"]),
        bf2=f32(np.asarray(params["b_fc2"], np.float32)[None, :]),
        wf3=cd(wf3p), bf3=f32(bf3p))
    return dict(weights=weights, geom=geom, compute_dtype=compute_dtype)


@functools.lru_cache(maxsize=None)
def _selection_mats(b_tile, p0, p1, p2, hp0, hp1):
    """0/1 block-diagonal matrices for `b_tile` sublane-stacked images:
    pooled-row selection + [:40] row crop + zero re-padding (S0, S1) and the
    final per-image row gather for fc1 (D)."""
    s0 = np.zeros((b_tile * p1, b_tile * p0), np.float32)
    s1 = np.zeros((b_tile * p2, b_tile * p1), np.float32)
    d = np.zeros((b_tile, b_tile * p2), np.float32)
    for b in range(b_tile):
        for q in range(hp0):
            s0[b * p1 + 2 + q, b * p0 + 2 * q] = 1.0
        for q in range(hp1):
            s1[b * p2 + 2 + q, b * p1 + 2 * q] = 1.0
        d[b, b * p2] = 1.0
    return s0, s1, d


def _pick_b_tile(batch):
    # Keep >=2 grid steps when possible (v7x has 2 TensorCores) and cap the
    # per-step tile so the block-diagonal selection matrices stay small.
    if batch < 2:
        return 1
    return max(1, min(_DEFAULT_B_TILE, batch // 2))


# ---------------------------------------------------------------------------
# Fused forward: one pallas_call, grid over batch tiles
# ---------------------------------------------------------------------------

def conv_classifier_forward(prep, x_nchw, b_tile=None):
    weights, geom = prep["weights"], prep["geom"]
    cdt = prep["compute_dtype"]
    b, c, h, w = x_nchw.shape
    assert (h, w, c) == (geom["H"], geom["W"], geom["cin"])
    p0 = geom["P0"]
    npad = geom["npad"]

    if b_tile is None:
        b_tile = _pick_b_tile(b)
    num_tiles = -(-b // b_tile)
    b_pad = num_tiles * b_tile

    s0_np, s1_np, d_np = _selection_mats(
        b_tile, p0, geom["P1"], geom["P2"], geom["hp0"], geom["hp1"])
    s0 = jnp.asarray(s0_np, cdt)
    s1 = jnp.asarray(s1_np, cdt)
    dsel = jnp.asarray(d_np, jnp.float32)

    # NCHW -> per-tile stacked slab (b_tile*P0 rows, W*C lanes) in the compute
    # dtype; each image occupies P0 rows with its conv zero padding already in
    # place (no concat / zero-fill inside the kernel).  Zero-pad the batch up
    # to a multiple of b_tile; padded images are sliced away below.
    x = jnp.transpose(x_nchw.astype(cdt), (0, 2, 3, 1)).reshape(b, h, w * c)
    x = jnp.pad(x, ((0, b_pad - b), (2, p0 - h - 2), (0, 0)))
    x = x.reshape(num_tiles, b_tile * p0, w * c)

    ops = (weights["T0"], weights["b0"], s0,
           weights["T1"], weights["b1"], s1,
           weights["T2"], weights["b2"],
           weights["Wf1"], dsel,
           weights["bf1"], weights["wf2"], weights["bf2"],
           weights["wf3"], weights["bf3"])

    def const_spec(a):
        nd = a.ndim
        return pl.BlockSpec(a.shape, lambda t: (0,) * nd)

    out = pl.pallas_call(
        _fused_kernel,
        grid=(num_tiles,),
        out_shape=jax.ShapeDtypeStruct((num_tiles, b_tile, npad), jnp.float32),
        in_specs=[pl.BlockSpec((1, b_tile * p0, w * c), lambda t: (t, 0, 0))]
                 + [const_spec(a) for a in ops],
        out_specs=pl.BlockSpec((1, b_tile, npad), lambda t: (t, 0, 0)),
        compiler_params=pltpu.CompilerParams(
            dimension_semantics=("parallel",),
            vmem_limit_bytes=32 * 1024 * 1024),
    )(x, *ops)
    return out.reshape(b_pad, npad)[:b, :geom["n_classes"]]


# ---------------------------------------------------------------------------
# Deterministic synthetic parameters (same shapes as the nn.Module __init__)
# ---------------------------------------------------------------------------

def init_params(key, n_features, n_classes, signal_dim):
    flat = 8 * (signal_dim[0] // 4 + 1) * (signal_dim[1] // 4 + 1)
    ks = jax.random.split(key, 12)

    def rnd(k, shape, fan_in):
        return jax.random.normal(k, shape, jnp.float32) * (1.0 / np.sqrt(fan_in))

    return {
        "w_conv0": rnd(ks[0], (16, n_features, 4, 4), n_features * 16),
        "b_conv0": rnd(ks[1], (16,), n_features * 16),
        "w_conv1": rnd(ks[2], (16, 16, 4, 4), 16 * 16),
        "b_conv1": rnd(ks[3], (16,), 16 * 16),
        "w_conv2": rnd(ks[4], (8, 16, 4, 4), 16 * 16),
        "b_conv2": rnd(ks[5], (8,), 16 * 16),
        # Linear weights stored as (in, out) == PyTorch weight.T (synthetic init).
        "w_fc1": rnd(ks[6], (flat, 32), flat),
        "b_fc1": rnd(ks[7], (32,), flat),
        "w_fc2": rnd(ks[8], (32, 32), 32),
        "b_fc2": rnd(ks[9], (32,), 32),
        "w_fc3": rnd(ks[10], (32, n_classes), 32),
        "b_fc3": rnd(ks[11], (n_classes,), 32),
    }


# ---------------------------------------------------------------------------
# Pure-JAX reference (numerical sanity check of the fused kernel)
# ---------------------------------------------------------------------------

def _reference_forward(params, x_nchw):
    def conv(x, w, b):
        y = jax.lax.conv_general_dilated(
            x, w, window_strides=(1, 1), padding=((2, 2), (2, 2)),
            dimension_numbers=("NCHW", "OIHW", "NCHW"))
        return y + b[None, :, None, None]

    def lrelu(x):
        return jnp.where(x >= 0, x, 0.01 * x)

    def pool(x):
        return jax.lax.reduce_window(x, -jnp.inf, jax.lax.max,
                                     (1, 1, 2, 2), (1, 1, 2, 2), "VALID")

    b = x_nchw.shape[0]
    x = pool(lrelu(conv(x_nchw, params["w_conv0"], params["b_conv0"])[:, :, :40, :40]))
    x = pool(lrelu(conv(x, params["w_conv1"], params["b_conv1"])[:, :, :40, :40]))
    x = lrelu(conv(x, params["w_conv2"], params["b_conv2"])[:, :, :40, :40])
    x = x.reshape(b, -1)
    x = jnp.maximum(x @ params["w_fc1"] + params["b_fc1"], 0.0)
    x = jnp.maximum(x @ params["w_fc2"] + params["b_fc2"], 0.0)
    return x @ params["w_fc3"] + params["b_fc3"]


if __name__ == "__main__":
    signal_dim = (16, 16)
    n_features, n_classes = 4, 5

    key = jax.random.PRNGKey(0)
    pkey, xkey, xkey2 = jax.random.split(key, 3)
    params = init_params(pkey, n_features, n_classes, signal_dim)

    x = jax.random.normal(xkey, (2, n_features, *signal_dim), jnp.float32)
    x_big = jax.random.normal(xkey2, (10, n_features, *signal_dim), jnp.float32)

    ref = jax.block_until_ready(_reference_forward(params, x))

    # 1) f32 operand pack: exact-algorithm check (tight tolerance).
    prep32 = prepare_params(params, signal_dim, compute_dtype=jnp.float32)
    out32 = jax.block_until_ready(
        jax.jit(lambda v: conv_classifier_forward(prep32, v))(x))
    assert out32.shape == (2, n_classes), out32.shape
    np.testing.assert_allclose(np.asarray(out32), np.asarray(ref),
                               rtol=2e-3, atol=2e-3)

    # 2) bf16 operand pack (production path; f32 accumulation) -> looser tol.
    prep = prepare_params(params, signal_dim)  # bf16
    out = jax.block_until_ready(
        jax.jit(lambda v: conv_classifier_forward(prep, v))(x))
    np.testing.assert_allclose(np.asarray(out), np.asarray(ref),
                               rtol=3e-2, atol=3e-2)

    # 3) multi-image batch tiles + batch padding + multi-step grid.
    out_big = jax.block_until_ready(
        jax.jit(lambda v: conv_classifier_forward(prep, v, b_tile=4))(x_big))
    ref_big = jax.block_until_ready(_reference_forward(params, x_big))
    np.testing.assert_allclose(np.asarray(out_big), np.asarray(ref_big),
                               rtol=3e-2, atol=3e-2)

    print("KERNEL_OK")
</pallas_src>

<mosaic_0001>
module attributes {stable_mosaic.version = 11 : i64} {
  func.func @k(%arg0: memref<8x128xf32, #tpu.memory_space<vmem>>, %arg1: memref<8x128xf32, #tpu.memory_space<vmem>>) attributes {dimension_semantics = [], scalar_prefetch = 0 : i64, scratch_operands = 0 : i64, tpu.core_type = #tpu.core_type<tc>} {
    %c0 = arith.constant 0 : index
    %c0_0 = arith.constant 0 : index
    %0 = vector.load %arg0[%c0, %c0_0] : memref<8x128xf32, #tpu.memory_space<vmem>>, vector<8x128xf32>
    %c1_i32 = arith.constant 1 : i32
    %1 = tpu.dynamic_rotate %0 by %c1_i32 dim 0 : vector<8x128xf32>, i32 -> vector<8x128xf32>
    %c0_1 = arith.constant 0 : index
    %c0_2 = arith.constant 0 : index
    %2 = vector.load %arg1[%c0_1, %c0_2] : memref<8x128xf32, #tpu.memory_space<vmem>>, vector<8x128xf32>
    tpu.vector_store %arg1[%c0_1, %c0_2], %1 {strides = array<i32>} : memref<8x128xf32, #tpu.memory_space<vmem>>, vector<8x128xf32>,
    return
  }
}

module attributes {stable_mosaic.version = 11 : i64} {
  func.func @_fused_kernel(%arg0: i32, %arg1: memref<1x24x64xf32, #tpu.memory_space<vmem>>, %arg2: memref<4x64x256xf32, #tpu.memory_space<vmem>>, %arg3: memref<1x128xf32, #tpu.memory_space<vmem>>, %arg4: memref<16x24xf32, #tpu.memory_space<vmem>>, %arg5: memref<4x128x256xf32, #tpu.memory_space<vmem>>, %arg6: memref<1x128xf32, #tpu.memory_space<vmem>>, %arg7: memref<8x16xf32, #tpu.memory_space<vmem>>, %arg8: memref<4x128x40xf32, #tpu.memory_space<vmem>>, %arg9: memref<1x40xf32, #tpu.memory_space<vmem>>, %arg10: memref<5x40x32xf32, #tpu.memory_space<vmem>>, %arg11: memref<1x8xf32, #tpu.memory_space<vmem>>, %arg12: memref<1x32xf32, #tpu.memory_space<vmem>>, %arg13: memref<32x32xf32, #tpu.memory_space<vmem>>, %arg14: memref<1x32xf32, #tpu.memory_space<vmem>>, %arg15: memref<32x128xf32, #tpu.memory_space<vmem>>, %arg16: memref<1x128xf32, #tpu.memory_space<vmem>>, %arg17: memref<1x1x128xf32, #tpu.memory_space<vmem>>) attributes {dimension_semantics = [#tpu.dimension_semantics<parallel>], iteration_bounds = array<i64: 2>, scalar_prefetch = 0 : i64, scratch_operands = 0 : i64, tpu.core_type = #tpu.core_type<tc>, window_params = [{transform_indices = @transform_0, window_bounds = array<i64: 1, 24, 64>}, {pipeline_mode = #tpu.pipeline_mode<synchronous>, transform_indices = @transform_1, window_bounds = array<i64: 4, 64, 256>}, {pipeline_mode = #tpu.pipeline_mode<synchronous>, transform_indices = @transform_2, window_bounds = array<i64: 1, 128>}, {pipeline_mode = #tpu.pipeline_mode<synchronous>, transform_indices = @transform_3, window_bounds = array<i64: 16, 24>}, {pipeline_mode = #tpu.pipeline_mode<synchronous>, transform_indices = @transform_4, window_bounds = array<i64: 4, 128, 256>}, {pipeline_mode = #tpu.pipeline_mode<synchronous>, transform_indices = @transform_5, window_bounds = array<i64: 1, 128>}, {pipeline_mode = #tpu.pipeline_mode<synchronous>, transform_indices = @transform_6, window_bounds = array<i64: 8, 16>}, {pipeline_mode = #tpu.pipeline_mode<synchronous>, transform_indices = @transform_7, window_bounds = array<i64: 4, 128, 40>}, {pipeline_mode = #tpu.pipeline_mode<synchronous>, transform_indices = @transform_8, window_bounds = array<i64: 1, 40>}, {pipeline_mode = #tpu.pipeline_mode<synchronous>, transform_indices = @transform_9, window_bounds = array<i64: 5, 40, 32>}, {pipeline_mode = #tpu.pipeline_mode<synchronous>, transform_indices = @transform_10, window_bounds = array<i64: 1, 8>}, {pipeline_mode = #tpu.pipeline_mode<synchronous>, transform_indices = @transform_11, window_bounds = array<i64: 1, 32>}, {pipeline_mode = #tpu.pipeline_mode<synchronous>, transform_indices = @transform_12, window_bounds = array<i64: 32, 32>}, {pipeline_mode = #tpu.pipeline_mode<synchronous>, transform_indices = @transform_13, window_bounds = array<i64: 1, 32>}, {pipeline_mode = #tpu.pipeline_mode<synchronous>, transform_indices = @transform_14, window_bounds = array<i64: 32, 128>}, {pipeline_mode = #tpu.pipeline_mode<synchronous>, transform_indices = @transform_15, window_bounds = array<i64: 1, 128>}, {transform_indices = @transform_16, window_bounds = array<i64: 1, 1, 128>}]} {
    %c0 = arith.constant 0 : index
    %c0_0 = arith.constant 0 : index
    %c0_1 = arith.constant 0 : index
    %0 = vector.load %arg1[%c0, %c0_0, %c0_1] : memref<1x24x64xf32, #tpu.memory_space<vmem>>, vector<1x24x64xf32>
    %1 = vector.shape_cast %0 : vector<1x24x64xf32> to vector<24x64xf32>
    %c0_2 = arith.constant 0 : index
    %c0_3 = arith.constant 0 : index
    %c0_4 = arith.constant 0 : index
    %2 = vector.load %arg2[%c0_2, %c0_3, %c0_4] : memref<4x64x256xf32, #tpu.memory_space<vmem>>, vector<1x64x256xf32>
    %3 = vector.shape_cast %2 : vector<1x64x256xf32> to vector<64x256xf32>
    %cst = arith.constant dense<0.000000e+00> : vector<24x256xf32>
    %4 = tpu.matmul %1, %3, %cst {dimension_numbers = #tpu.dot_dimension_numbers<[1], [0], [0], [1], [0, 0, 1, 1], [], []>} : vector<24x64xf32>, vector<64x256xf32>, vector<24x256xf32> -> vector<24x256xf32>
    %c1 = arith.constant 1 : index
    %c0_5 = arith.constant 0 : index
    %c0_6 = arith.constant 0 : index
    %5 = vector.load %arg2[%c1, %c0_5, %c0_6] : memref<4x64x256xf32, #tpu.memory_space<vmem>>, vector<1x64x256xf32>
    %6 = vector.shape_cast %5 : vector<1x64x256xf32> to vector<64x256xf32>
    %cst_7 = arith.constant dense<0.000000e+00> : vector<24x256xf32>
    %7 = tpu.matmul %1, %6, %cst_7 {dimension_numbers = #tpu.dot_dimension_numbers<[1], [0], [0], [1], [0, 0, 1, 1], [], []>} : vector<24x64xf32>, vector<64x256xf32>, vector<24x256xf32> -> vector<24x256xf32>
    %8 = vector.extract_strided_slice %7 {offsets = [1, 0], sizes = [23, 256], strides = [1, 1]} : vector<24x256xf32> to vector<23x256xf32>
    %9 = vector.extract_strided_slice %7 {offsets = [0, 0], sizes = [1, 256], strides = [1, 1]} : vector<24x256xf32> to vector<1x256xf32>
    %10 = tpu.concatenate %8, %9 in 0 : vector<23x256xf32>, vector<1x256xf32> -> vector<24x256xf32>
    %11 = arith.addf %4, %10 : vector<24x256xf32>
    %c2 = arith.constant 2 : index
    %c0_8 = arith.constant 0 : index
    %c0_9 = arith.constant 0 : index
    %12 = vector.load %arg2[%c2, %c0_8, %c0_9] : memref<4x64x256xf32, #tpu.memory_space<vmem>>, vector<1x64x256xf32>
    %13 = vector.shape_cast %12 : vector<1x64x256xf32> to vector<64x256xf32>
    %cst_10 = arith.constant dense<0.000000e+00> : vector<24x256xf32>
    %14 = tpu.matmul %1, %13, %cst_10 {dimension_numbers = #tpu.dot_dimension_numbers<[1], [0], [0], [1], [0, 0, 1, 1], [], []>} : vector<24x64xf32>, vector<64x256xf32>, vector<24x256xf32> -> vector<24x256xf32>
    %15 = vector.extract_strided_slice %14 {offsets = [2, 0], sizes = [22, 256], strides = [1, 1]} : vector<24x256xf32> to vector<22x256xf32>
    %16 = vector.extract_strided_slice %14 {offsets = [0, 0], sizes = [2, 256], strides = [1, 1]} : vector<24x256xf32> to vector<2x256xf32>
    %17 = tpu.concatenate %15, %16 in 0 : vector<22x256xf32>, vector<2x256xf32> -> vector<24x256xf32>
    %18 = arith.addf %11, %17 : vector<24x256xf32>
    %c3 = arith.constant 3 : index
    %c0_11 = arith.constant 0 : index
    %c0_12 = arith.constant 0 : index
    %19 = vector.load %arg2[%c3, %c0_11, %c0_12] : memref<4x64x256xf32, #tpu.memory_space<vmem>>, vector<1x64x256xf32>
    %20 = vector.shape_cast %19 : vector<1x64x256xf32> to vector<64x256xf32>
    %cst_13 = arith.constant dense<0.000000e+00> : vector<24x256xf32>
    %21 = tpu.matmul %1, %20, %cst_13 {dimension_numbers = #tpu.dot_dimension_numbers<[1], [0], [0], [1], [0, 0, 1, 1], [], []>} : vector<24x64xf32>, vector<64x256xf32>, vector<24x256xf32> -> vector<24x256xf32>
    %22 = vector.extract_strided_slice %21 {offsets = [3, 0], sizes = [21, 256], strides = [1, 1]} : vector<24x256xf32> to vector<21x256xf32>
    %23 = vector.extract_strided_slice %21 {offsets = [0, 0], sizes = [3, 256], strides = [1, 1]} : vector<24x256xf32> to vector<3x256xf32>
    %24 = tpu.concatenate %22, %23 in 0 : vector<21x256xf32>, vector<3x256xf32> -> vector<24x256xf32>
    %25 = arith.addf %18, %24 : vector<24x256xf32>
    %26 = vector.extract_strided_slice %25 {offsets = [0, 0], sizes = [24, 128], strides = [1, 1]} : vector<24x256xf32> to vector<24x128xf32>
    %27 = vector.extract_strided_slice %25 {offsets = [0, 128], sizes = [24, 128], strides = [1, 1]} : vector<24x256xf32> to vector<24x128xf32>
    %28 = arith.maximumf %26, %27 : vector<24x128xf32>
    %29 = vector.extract_strided_slice %28 {offsets = [1, 0], sizes = [23, 128], strides = [1, 1]} : vector<24x128xf32> to vector<23x128xf32>
    %30 = vector.extract_strided_slice %28 {offsets = [0, 0], sizes = [1, 128], strides = [1, 1]} : vector<24x128xf32> to vector<1x128xf32>
    %31 = tpu.concatenate %29, %30 in 0 : vector<23x128xf32>, vector<1x128xf32> -> vector<24x128xf32>
    %32 = arith.maximumf %28, %31 : vector<24x128xf32>
    %c0_14 = arith.constant 0 : index
    %c0_15 = arith.constant 0 : index
    %33 = vector.load %arg3[%c0_14, %c0_15] : memref<1x128xf32, #tpu.memory_space<vmem>>, vector<1x128xf32>
    %34 = vector.broadcast %33 : vector<1x128xf32> to vector<24x128xf32>
    %35 = arith.addf %32, %34 : vector<24x128xf32>
    %cst_16 = arith.constant 0.000000e+00 : f32
    %36 = vector.broadcast %cst_16 : f32 to vector<24x128xf32>
    %37 = arith.cmpf oge, %35, %36 : vector<24x128xf32>
    %cst_17 = arith.constant 0.00999999977 : f32
    %38 = vector.broadcast %cst_17 : f32 to vector<24x128xf32>
    %39 = arith.mulf %38, %35 : vector<24x128xf32>
    %40 = arith.select %37, %35, %39 : vector<24x128xi1>, vector<24x128xf32>
    %c0_18 = arith.constant 0 : index
    %c0_19 = arith.constant 0 : index
    %41 = vector.load %arg4[%c0_18, %c0_19] : memref<16x24xf32, #tpu.memory_space<vmem>>, vector<16x24xf32>
    %cst_20 = arith.constant dense<0.000000e+00> : vector<16x128xf32>
    %42 = tpu.matmul %41, %40, %cst_20 {dimension_numbers = #tpu.dot_dimension_numbers<[1], [0], [0], [1], [0, 0, 1, 1], [], []>} : vector<16x24xf32>, vector<24x128xf32>, vector<16x128xf32> -> vector<16x128xf32>
    %c0_21 = arith.constant 0 : index
    %c0_22 = arith.constant 0 : index
    %c0_23 = arith.constant 0 : index
    %43 = vector.load %arg5[%c0_21, %c0_22, %c0_23] : memref<4x128x256xf32, #tpu.memory_space<vmem>>, vector<1x128x256xf32>
    %44 = vector.shape_cast %43 : vector<1x128x256xf32> to vector<128x256xf32>
    %cst_24 = arith.constant dense<0.000000e+00> : vector<16x256xf32>
    %45 = tpu.matmul %42, %44, %cst_24 {dimension_numbers = #tpu.dot_dimension_numbers<[1], [0], [0], [1], [0, 0, 1, 1], [], []>} : vector<16x128xf32>, vector<128x256xf32>, vector<16x256xf32> -> vector<16x256xf32>
    %c1_25 = arith.constant 1 : index
    %c0_26 = arith.constant 0 : index
    %c0_27 = arith.constant 0 : index
    %46 = vector.load %arg5[%c1_25, %c0_26, %c0_27] : memref<4x128x256xf32, #tpu.memory_space<vmem>>, vector<1x128x256xf32>
    %47 = vector.shape_cast %46 : vector<1x128x256xf32> to vector<128x256xf32>
    %cst_28 = arith.constant dense<0.000000e+00> : vector<16x256xf32>
    %48 = tpu.matmul %42, %47, %cst_28 {dimension_numbers = #tpu.dot_dimension_numbers<[1], [0], [0], [1], [0, 0, 1, 1], [], []>} : vector<16x128xf32>, vector<128x256xf32>, vector<16x256xf32> -> vector<16x256xf32>
    %49 = vector.extract_strided_slice %48 {offsets = [1, 0], sizes = [15, 256], strides = [1, 1]} : vector<16x256xf32> to vector<15x256xf32>
    %50 = vector.extract_strided_slice %48 {offsets = [0, 0], sizes = [1, 256], strides = [1, 1]} : vector<16x256xf32> to vector<1x256xf32>
    %51 = tpu.concatenate %49, %50 in 0 : vector<15x256xf32>, vector<1x256xf32> -> vector<16x256xf32>
    %52 = arith.addf %45, %51 : vector<16x256xf32>
    %c2_29 = arith.constant 2 : index
    %c0_30 = arith.constant 0 : index
    %c0_31 = arith.constant 0 : index
    %53 = vector.load %arg5[%c2_29, %c0_30, %c0_31] : memref<4x128x256xf32, #tpu.memory_space<vmem>>, vector<1x128x256xf32>
    %54 = vector.shape_cast %53 : vector<1x128x256xf32> to vector<128x256xf32>
    %cst_32 = arith.constant dense<0.000000e+00> : vector<16x256xf32>
    %55 = tpu.matmul %42, %54, %cst_32 {dimension_numbers = #tpu.dot_dimension_numbers<[1], [0], [0], [1], [0, 0, 1, 1], [], []>} : vector<16x128xf32>, vector<128x256xf32>, vector<16x256xf32> -> vector<16x256xf32>
    %56 = vector.extract_strided_slice %55 {offsets = [2, 0], sizes = [14, 256], strides = [1, 1]} : vector<16x256xf32> to vector<14x256xf32>
    %57 = vector.extract_strided_slice %55 {offsets = [0, 0], sizes = [2, 256], strides = [1, 1]} : vector<16x256xf32> to vector<2x256xf32>
    %58 = tpu.concatenate %56, %57 in 0 : vector<14x256xf32>, vector<2x256xf32> -> vector<16x256xf32>
    %59 = arith.addf %52, %58 : vector<16x256xf32>
    %c3_33 = arith.constant 3 : index
    %c0_34 = arith.constant 0 : index
    %c0_35 = arith.constant 0 : index
    %60 = vector.load %arg5[%c3_33, %c0_34, %c0_35] : memref<4x128x256xf32, #tpu.memory_space<vmem>>, vector<1x128x256xf32>
    %61 = vector.shape_cast %60 : vector<1x128x256xf32> to vector<128x256xf32>
    %cst_36 = arith.constant dense<0.000000e+00> : vector<16x256xf32>
    %62 = tpu.matmul %42, %61, %cst_36 {dimension_numbers = #tpu.dot_dimension_numbers<[1], [0], [0], [1], [0, 0, 1, 1], [], []>} : vector<16x128xf32>, vector<128x256xf32>, vector<16x256xf32> -> vector<16x256xf32>
    %63 = vector.extract_strided_slice %62 {offsets = [3, 0], sizes = [13, 256], strides = [1, 1]} : vector<16x256xf32> to vector<13x256xf32>
    %64 = vector.extract_strided_slice %62 {offsets = [0, 0], sizes = [3, 256], strides = [1, 1]} : vector<16x256xf32> to vector<3x256xf32>
    %65 = tpu.concatenate %63, %64 in 0 : vector<13x256xf32>, vector<3x256xf32> -> vector<16x256xf32>
    %66 = arith.addf %59, %65 : vector<16x256xf32>
    %67 = vector.extract_strided_slice %66 {offsets = [0, 0], sizes = [16, 128], strides = [1, 1]} : vector<16x256xf32> to vector<16x128xf32>
    %68 = vector.extract_strided_slice %66 {offsets = [0, 128], sizes = [16, 128], strides = [1, 1]} : vector<16x256xf32> to vector<16x128xf32>
    %69 = arith.maximumf %67, %68 : vector<16x128xf32>
    %70 = vector.extract_strided_slice %69 {offsets = [1, 0], sizes = [15, 128], strides = [1, 1]} : vector<16x128xf32> to vector<15x128xf32>
    %71 = vector.extract_strided_slice %69 {offsets = [0, 0], sizes = [1, 128], strides = [1, 1]} : vector<16x128xf32> to vector<1x128xf32>
    %72 = tpu.concatenate %70, %71 in 0 : vector<15x128xf32>, vector<1x128xf32> -> vector<16x128xf32>
    %73 = arith.maximumf %69, %72 : vector<16x128xf32>
    %c0_37 = arith.constant 0 : index
    %c0_38 = arith.constant 0 : index
    %74 = vector.load %arg6[%c0_37, %c0_38] : memref<1x128xf32, #tpu.memory_space<vmem>>, vector<1x128xf32>
    %75 = vector.broadcast %74 : vector<1x128xf32> to vector<16x128xf32>
    %76 = arith.addf %73, %75 : vector<16x128xf32>
    %cst_39 = arith.constant 0.000000e+00 : f32
    %77 = vector.broadcast %cst_39 : f32 to vector<16x128xf32>
    %78 = arith.cmpf oge, %76, %77 : vector<16x128xf32>
    %cst_40 = arith.constant 0.00999999977 : f32
    %79 = vector.broadcast %cst_40 : f32 to vector<16x128xf32>
    %80 = arith.mulf %79, %76 : vector<16x128xf32>
    %81 = arith.select %78, %76, %80 : vector<16x128xi1>, vector<16x128xf32>
    %c0_41 = arith.constant 0 : index
    %c0_42 = arith.constant 0 : index
    %82 = vector.load %arg7[%c0_41, %c0_42] : memref<8x16xf32, #tpu.memory_space<vmem>>, vector<8x16xf32>
    %cst_43 = arith.constant dense<0.000000e+00> : vector<8x128xf32>
    %83 = tpu.matmul %82, %81, %cst_43 {dimension_numbers = #tpu.dot_dimension_numbers<[1], [0], [0], [1], [0, 0, 1, 1], [], []>} : vector<8x16xf32>, vector<16x128xf32>, vector<8x128xf32> -> vector<8x128xf32>
    %c0_44 = arith.constant 0 : index
    %c0_45 = arith.constant 0 : index
    %c0_46 = arith.constant 0 : index
    %84 = vector.load %arg8[%c0_44, %c0_45, %c0_46] : memref<4x128x40xf32, #tpu.memory_space<vmem>>, vector<1x128x40xf32>
    %85 = vector.shape_cast %84 : vector<1x128x40xf32> to vector<128x40xf32>
    %cst_47 = arith.constant dense<0.000000e+00> : vector<8x40xf32>
    %86 = tpu.matmul %83, %85, %cst_47 {dimension_numbers = #tpu.dot_dimension_numbers<[1], [0], [0], [1], [0, 0, 1, 1], [], []>} : vector<8x128xf32>, vector<128x40xf32>, vector<8x40xf32> -> vector<8x40xf32>
    %c1_48 = arith.constant 1 : index
    %c0_49 = arith.constant 0 : index
    %c0_50 = arith.constant 0 : index
    %87 = vector.load %arg8[%c1_48, %c0_49, %c0_50] : memref<4x128x40xf32, #tpu.memory_space<vmem>>, vector<1x128x40xf32>
    %88 = vector.shape_cast %87 : vector<1x128x40xf32> to vector<128x40xf32>
    %cst_51 = arith.constant dense<0.000000e+00> : vector<8x40xf32>
    %89 = tpu.matmul %83, %88, %cst_51 {dimension_numbers = #tpu.dot_dimension_numbers<[1], [0], [0], [1], [0, 0, 1, 1], [], []>} : vector<8x128xf32>, vector<128x40xf32>, vector<8x40xf32> -> vector<8x40xf32>
    %90 = vector.extract_strided_slice %89 {offsets = [1, 0], sizes = [7, 40], strides = [1, 1]} : vector<8x40xf32> to vector<7x40xf32>
    %91 = vector.extract_strided_slice %89 {offsets = [0, 0], sizes = [1, 40], strides = [1, 1]} : vector<8x40xf32> to vector<1x40xf32>
    %92 = tpu.concatenate %90, %91 in 0 : vector<7x40xf32>, vector<1x40xf32> -> vector<8x40xf32>
    %93 = arith.addf %86, %92 : vector<8x40xf32>
    %c2_52 = arith.constant 2 : index
    %c0_53 = arith.constant 0 : index
    %c0_54 = arith.constant 0 : index
    %94 = vector.load %arg8[%c2_52, %c0_53, %c0_54] : memref<4x128x40xf32, #tpu.memory_space<vmem>>, vector<1x128x40xf32>
    %95 = vector.shape_cast %94 : vector<1x128x40xf32> to vector<128x40xf32>
    %cst_55 = arith.constant dense<0.000000e+00> : vector<8x40xf32>
    %96 = tpu.matmul %83, %95, %cst_55 {dimension_numbers = #tpu.dot_dimension_numbers<[1], [0], [0], [1], [0, 0, 1, 1], [], []>} : vector<8x128xf32>, vector<128x40xf32>, vector<8x40xf32> -> vector<8x40xf32>
    %97 = vector.extract_strided_slice %96 {offsets = [2, 0], sizes = [6, 40], strides = [1, 1]} : vector<8x40xf32> to vector<6x40xf32>
    %98 = vector.extract_strided_slice %96 {offsets = [0, 0], sizes = [2, 40], strides = [1, 1]} : vector<8x40xf32> to vector<2x40xf32>
    %99 = tpu.concatenate %97, %98 in 0 : vector<6x40xf32>, vector<2x40xf32> -> vector<8x40xf32>
    %100 = arith.addf %93, %99 : vector<8x40xf32>
    %c3_56 = arith.constant 3 : index
    %c0_57 = arith.constant 0 : index
    %c0_58 = arith.constant 0 : index
    %101 = vector.load %arg8[%c3_56, %c0_57, %c0_58] : memref<4x128x40xf32, #tpu.memory_space<vmem>>, vector<1x128x40xf32>
    %102 = vector.shape_cast %101 : vector<1x128x40xf32> to vector<128x40xf32>
    %cst_59 = arith.constant dense<0.000000e+00> : vector<8x40xf32>
    %103 = tpu.matmul %83, %102, %cst_59 {dimension_numbers = #tpu.dot_dimension_numbers<[1], [0], [0], [1], [0, 0, 1, 1], [], []>} : vector<8x128xf32>, vector<128x40xf32>, vector<8x40xf32> -> vector<8x40xf32>
    %104 = vector.extract_strided_slice %103 {offsets = [3, 0], sizes = [5, 40], strides = [1, 1]} : vector<8x40xf32> to vector<5x40xf32>
    %105 = vector.extract_strided_slice %103 {offsets = [0, 0], sizes = [3, 40], strides = [1, 1]} : vector<8x40xf32> to vector<3x40xf32>
    %106 = tpu.concatenate %104, %105 in 0 : vector<5x40xf32>, vector<3x40xf32> -> vector<8x40xf32>
    %107 = arith.addf %100, %106 : vector<8x40xf32>
    %c0_60 = arith.constant 0 : index
    %c0_61 = arith.constant 0 : index
    %108 = vector.load %arg9[%c0_60, %c0_61] : memref<1x40xf32, #tpu.memory_space<vmem>>, vector<1x40xf32>
    %109 = vector.broadcast %108 : vector<1x40xf32> to vector<8x40xf32>
    %110 = arith.addf %107, %109 : vector<8x40xf32>
    %cst_62 = arith.constant 0.000000e+00 : f32
    %111 = vector.broadcast %cst_62 : f32 to vector<8x40xf32>
    %112 = arith.cmpf oge, %110, %111 : vector<8x40xf32>
    %cst_63 = arith.constant 0.00999999977 : f32
    %113 = vector.broadcast %cst_63 : f32 to vector<8x40xf32>
    %114 = arith.mulf %113, %110 : vector<8x40xf32>
    %115 = arith.select %112, %110, %114 : vector<8x40xi1>, vector<8x40xf32>
    %c0_64 = arith.constant 0 : index
    %c0_65 = arith.constant 0 : index
    %c0_66 = arith.constant 0 : index
    %116 = vector.load %arg10[%c0_64, %c0_65, %c0_66] : memref<5x40x32xf32, #tpu.memory_space<vmem>>, vector<1x40x32xf32>
    %117 = vector.shape_cast %116 : vector<1x40x32xf32> to vector<40x32xf32>
    %cst_67 = arith.constant dense<0.000000e+00> : vector<8x32xf32>
    %118 = tpu.matmul %115, %117, %cst_67 {dimension_numbers = #tpu.dot_dimension_numbers<[1], [0], [0], [1], [0, 0, 1, 1], [], []>} : vector<8x40xf32>, vector<40x32xf32>, vector<8x32xf32> -> vector<8x32xf32>
    %c1_68 = arith.constant 1 : index
    %c0_69 = arith.constant 0 : index
    %c0_70 = arith.constant 0 : index
    %119 = vector.load %arg10[%c1_68, %c0_69, %c0_70] : memref<5x40x32xf32, #tpu.memory_space<vmem>>, vector<1x40x32xf32>
    %120 = vector.shape_cast %119 : vector<1x40x32xf32> to vector<40x32xf32>
    %cst_71 = arith.constant dense<0.000000e+00> : vector<8x32xf32>
    %121 = tpu.matmul %115, %120, %cst_71 {dimension_numbers = #tpu.dot_dimension_numbers<[1], [0], [0], [1], [0, 0, 1, 1], [], []>} : vector<8x40xf32>, vector<40x32xf32>, vector<8x32xf32> -> vector<8x32xf32>
    %122 = vector.extract_strided_slice %121 {offsets = [1, 0], sizes = [7, 32], strides = [1, 1]} : vector<8x32xf32> to vector<7x32xf32>
    %123 = vector.extract_strided_slice %121 {offsets = [0, 0], sizes = [1, 32], strides = [1, 1]} : vector<8x32xf32> to vector<1x32xf32>
    %124 = tpu.concatenate %122, %123 in 0 : vector<7x32xf32>, vector<1x32xf32> -> vector<8x32xf32>
    %125 = arith.addf %118, %124 : vector<8x32xf32>
    %c2_72 = arith.constant 2 : index
    %c0_73 = arith.constant 0 : index
    %c0_74 = arith.constant 0 : index
    %126 = vector.load %arg10[%c2_72, %c0_73, %c0_74] : memref<5x40x32xf32, #tpu.memory_space<vmem>>, vector<1x40x32xf32>
    %127 = vector.shape_cast %126 : vector<1x40x32xf32> to vector<40x32xf32>
    %cst_75 = arith.constant dense<0.000000e+00> : vector<8x32xf32>
    %128 = tpu.matmul %115, %127, %cst_75 {dimension_numbers = #tpu.dot_dimension_numbers<[1], [0], [0], [1], [0, 0, 1, 1], [], []>} : vector<8x40xf32>, vector<40x32xf32>, vector<8x32xf32> -> vector<8x32xf32>
    %129 = vector.extract_strided_slice %128 {offsets = [2, 0], sizes = [6, 32], strides = [1, 1]} : vector<8x32xf32> to vector<6x32xf32>
    %130 = vector.extract_strided_slice %128 {offsets = [0, 0], sizes = [2, 32], strides = [1, 1]} : vector<8x32xf32> to vector<2x32xf32>
    %131 = tpu.concatenate %129, %130 in 0 : vector<6x32xf32>, vector<2x32xf32> -> vector<8x32xf32>
    %132 = arith.addf %125, %131 : vector<8x32xf32>
    %c3_76 = arith.constant 3 : index
    %c0_77 = arith.constant 0 : index
    %c0_78 = arith.constant 0 : index
    %133 = vector.load %arg10[%c3_76, %c0_77, %c0_78] : memref<5x40x32xf32, #tpu.memory_space<vmem>>, vector<1x40x32xf32>
    %134 = vector.shape_cast %133 : vector<1x40x32xf32> to vector<40x32xf32>
    %cst_79 = arith.constant dense<0.000000e+00> : vector<8x32xf32>
    %135 = tpu.matmul %115, %134, %cst_79 {dimension_numbers = #tpu.dot_dimension_numbers<[1], [0], [0], [1], [0, 0, 1, 1], [], []>} : vector<8x40xf32>, vector<40x32xf32>, vector<8x32xf32> -> vector<8x32xf32>
    %136 = vector.extract_strided_slice %135 {offsets = [3, 0], sizes = [5, 32], strides = [1, 1]} : vector<8x32xf32> to vector<5x32xf32>
    %137 = vector.extract_strided_slice %135 {offsets = [0, 0], sizes = [3, 32], strides = [1, 1]} : vector<8x32xf32> to vector<3x32xf32>
    %138 = tpu.concatenate %136, %137 in 0 : vector<5x32xf32>, vector<3x32xf32> -> vector<8x32xf32>
    %139 = arith.addf %132, %138 : vector<8x32xf32>
    %c4 = arith.constant 4 : index
    %c0_80 = arith.constant 0 : index
    %c0_81 = arith.constant 0 : index
    %140 = vector.load %arg10[%c4, %c0_80, %c0_81] : memref<5x40x32xf32, #tpu.memory_space<vmem>>, vector<1x40x32xf32>
    %141 = vector.shape_cast %140 : vector<1x40x32xf32> to vector<40x32xf32>
    %cst_82 = arith.constant dense<0.000000e+00> : vector<8x32xf32>
    %142 = tpu.matmul %115, %141, %cst_82 {dimension_numbers = #tpu.dot_dimension_numbers<[1], [0], [0], [1], [0, 0, 1, 1], [], []>} : vector<8x40xf32>, vector<40x32xf32>, vector<8x32xf32> -> vector<8x32xf32>
    %143 = vector.extract_strided_slice %142 {offsets = [4, 0], sizes = [4, 32], strides = [1, 1]} : vector<8x32xf32> to vector<4x32xf32>
    %144 = vector.extract_strided_slice %142 {offsets = [0, 0], sizes = [4, 32], strides = [1, 1]} : vector<8x32xf32> to vector<4x32xf32>
    %145 = tpu.concatenate %143, %144 in 0 : vector<4x32xf32>, vector<4x32xf32> -> vector<8x32xf32>
    %146 = arith.addf %139, %145 : vector<8x32xf32>
    %c0_83 = arith.constant 0 : index
    %c0_84 = arith.constant 0 : index
    %147 = vector.load %arg11[%c0_83, %c0_84] : memref<1x8xf32, #tpu.memory_space<vmem>>, vector<1x8xf32>
    %cst_85 = arith.constant dense<0.000000e+00> : vector<1x32xf32>
    %148 = tpu.matmul %147, %146, %cst_85 {dimension_numbers = #tpu.dot_dimension_numbers<[1], [0], [0], [1], [0, 0, 1, 1], [], []>} : vector<1x8xf32>, vector<8x32xf32>, vector<1x32xf32> -> vector<1x32xf32>
    %c0_86 = arith.constant 0 : index
    %c0_87 = arith.constant 0 : index
    %149 = vector.load %arg12[%c0_86, %c0_87] : memref<1x32xf32, #tpu.memory_space<vmem>>, vector<1x32xf32>
    %150 = arith.addf %148, %149 : vector<1x32xf32>
    %cst_88 = arith.constant 0.000000e+00 : f32
    %151 = vector.broadcast %cst_88 : f32 to vector<1x32xf32>
    %152 = arith.maximumf %150, %151 : vector<1x32xf32>
    %c0_89 = arith.constant 0 : index
    %c0_90 = arith.constant 0 : index
    %153 = vector.load %arg13[%c0_89, %c0_90] : memref<32x32xf32, #tpu.memory_space<vmem>>, vector<32x32xf32>
    %cst_91 = arith.constant dense<0.000000e+00> : vector<1x32xf32>
    %154 = tpu.matmul %152, %153, %cst_91 {dimension_numbers = #tpu.dot_dimension_numbers<[1], [0], [0], [1], [0, 0, 1, 1], [], []>} : vector<1x32xf32>, vector<32x32xf32>, vector<1x32xf32> -> vector<1x32xf32>
    %c0_92 = arith.constant 0 : index
    %c0_93 = arith.constant 0 : index
    %155 = vector.load %arg14[%c0_92, %c0_93] : memref<1x32xf32, #tpu.memory_space<vmem>>, vector<1x32xf32>
    %156 = arith.addf %154, %155 : vector<1x32xf32>
    %cst_94 = arith.constant 0.000000e+00 : f32
    %157 = vector.broadcast %cst_94 : f32 to vector<1x32xf32>
    %158 = arith.maximumf %156, %157 : vector<1x32xf32>
    %c0_95 = arith.constant 0 : index
    %c0_96 = arith.constant 0 : index
    %159 = vector.load %arg15[%c0_95, %c0_96] : memref<32x128xf32, #tpu.memory_space<vmem>>, vector<32x128xf32>
    %cst_97 = arith.constant dense<0.000000e+00> : vector<1x128xf32>
    %160 = tpu.matmul %158, %159, %cst_97 {dimension_numbers = #tpu.dot_dimension_numbers<[1], [0], [0], [1], [0, 0, 1, 1], [], []>} : vector<1x32xf32>, vector<32x128xf32>, vector<1x128xf32> -> vector<1x128xf32>
    %c0_98 = arith.constant 0 : index
    %c0_99 = arith.constant 0 : index
    %161 = vector.load %arg16[%c0_98, %c0_99] : memref<1x128xf32, #tpu.memory_space<vmem>>, vector<1x128xf32>
    %162 = arith.addf %160, %161 : vector<1x128xf32>
    %c0_100 = arith.constant 0 : index
    %c0_101 = arith.constant 0 : index
    %c0_102 = arith.constant 0 : index
    %163 = vector.load %arg17[%c0_100, %c0_101, %c0_102] : memref<1x1x128xf32, #tpu.memory_space<vmem>>, vector<1x1x128xf32>
    %164 = vector.shape_cast %163 : vector<1x1x128xf32> to vector<1x128xf32>
    %165 = vector.shape_cast %162 : vector<1x128xf32> to vector<1x1x128xf32>
    tpu.vector_store %arg17[%c0_100, %c0_101, %c0_102], %165 {strides = array<i32>} : memref<1x1x128xf32, #tpu.memory_space<vmem>>, vector<1x1x128xf32>,
    return
  }
  func.func @transform_0(%arg0: i32) -> (i32, i32, i32) {
    %c0_i32 = arith.constant 0 : i32
    %c0_i32_0 = arith.constant 0 : i32
    %c0_i32_1 = arith.constant 0 : i32
    return %arg0, %c0_i32, %c0_i32_0 : i32, i32, i32
  }
  func.func @transform_1(%arg0: i32) -> (i32, i32, i32) {
    %c0_i32 = arith.constant 0 : i32
    %c0_i32_0 = arith.constant 0 : i32
    %c0_i32_1 = arith.constant 0 : i32
    %c0_i32_2 = arith.constant 0 : i32
    return %c0_i32, %c0_i32_0, %c0_i32_1 : i32, i32, i32
  }
  func.func @transform_2(%arg0: i32) -> (i32, i32) {
    %c0_i32 = arith.constant 0 : i32
    %c0_i32_0 = arith.constant 0 : i32
    %c0_i32_1 = arith.constant 0 : i32
    return %c0_i32, %c0_i32_0 : i32, i32
  }
  func.func @transform_3(%arg0: i32) -> (i32, i32) {
    %c0_i32 = arith.constant 0 : i32
    %c0_i32_0 = arith.constant 0 : i32
    %c0_i32_1 = arith.constant 0 : i32
    return %c0_i32, %c0_i32_0 : i32, i32
  }
  func.func @transform_4(%arg0: i32) -> (i32, i32, i32) {
    %c0_i32 = arith.constant 0 : i32
    %c0_i32_0 = arith.constant 0 : i32
    %c0_i32_1 = arith.constant 0 : i32
    %c0_i32_2 = arith.constant 0 : i32
    return %c0_i32, %c0_i32_0, %c0_i32_1 : i32, i32, i32
  }
  func.func @transform_5(%arg0: i32) -> (i32, i32) {
    %c0_i32 = arith.constant 0 : i32
    %c0_i32_0 = arith.constant 0 : i32
    %c0_i32_1 = arith.constant 0 : i32
    return %c0_i32, %c0_i32_0 : i32, i32
  }
  func.func @transform_6(%arg0: i32) -> (i32, i32) {
    %c0_i32 = arith.constant 0 : i32
    %c0_i32_0 = arith.constant 0 : i32
    %c0_i32_1 = arith.constant 0 : i32
    return %c0_i32, %c0_i32_0 : i32, i32
  }
  func.func @transform_7(%arg0: i32) -> (i32, i32, i32) {
    %c0_i32 = arith.constant 0 : i32
    %c0_i32_0 = arith.constant 0 : i32
    %c0_i32_1 = arith.constant 0 : i32
    %c0_i32_2 = arith.constant 0 : i32
    return %c0_i32, %c0_i32_0, %c0_i32_1 : i32, i32, i32
  }
  func.func @transform_8(%arg0: i32) -> (i32, i32) {
    %c0_i32 = arith.constant 0 : i32
    %c0_i32_0 = arith.constant 0 : i32
    %c0_i32_1 = arith.constant 0 : i32
    return %c0_i32, %c0_i32_0 : i32, i32
  }
  func.func @transform_9(%arg0: i32) -> (i32, i32, i32) {
    %c0_i32 = arith.constant 0 : i32
    %c0_i32_0 = arith.constant 0 : i32
    %c0_i32_1 = arith.constant 0 : i32
    %c0_i32_2 = arith.constant 0 : i32
    return %c0_i32, %c0_i32_0, %c0_i32_1 : i32, i32, i32
  }
  func.func @transform_10(%arg0: i32) -> (i32, i32) {
    %c0_i32 = arith.constant 0 : i32
    %c0_i32_0 = arith.constant 0 : i32
    %c0_i32_1 = arith.constant 0 : i32
    return %c0_i32, %c0_i32_0 : i32, i32
  }
  func.func @transform_11(%arg0: i32) -> (i32, i32) {
    %c0_i32 = arith.constant 0 : i32
    %c0_i32_0 = arith.constant 0 : i32
    %c0_i32_1 = arith.constant 0 : i32
    return %c0_i32, %c0_i32_0 : i32, i32
  }
  func.func @transform_12(%arg0: i32) -> (i32, i32) {
    %c0_i32 = arith.constant 0 : i32
    %c0_i32_0 = arith.constant 0 : i32
    %c0_i32_1 = arith.constant 0 : i32
    return %c0_i32, %c0_i32_0 : i32, i32
  }
  func.func @transform_13(%arg0: i32) -> (i32, i32) {
    %c0_i32 = arith.constant 0 : i32
    %c0_i32_0 = arith.constant 0 : i32
    %c0_i32_1 = arith.constant 0 : i32
    return %c0_i32, %c0_i32_0 : i32, i32
  }
  func.func @transform_14(%arg0: i32) -> (i32, i32) {
    %c0_i32 = arith.constant 0 : i32
    %c0_i32_0 = arith.constant 0 : i32
    %c0_i32_1 = arith.constant 0 : i32
    return %c0_i32, %c0_i32_0 : i32, i32
  }
  func.func @transform_15(%arg0: i32) -> (i32, i32) {
    %c0_i32 = arith.constant 0 : i32
    %c0_i32_0 = arith.constant 0 : i32
    %c0_i32_1 = arith.constant 0 : i32
    return %c0_i32, %c0_i32_0 : i32, i32
  }
  func.func @transform_16(%arg0: i32) -> (i32, i32, i32) {
    %c0_i32 = arith.constant 0 : i32
    %c0_i32_0 = arith.constant 0 : i32
    %c0_i32_1 = arith.constant 0 : i32
    return %arg0, %c0_i32, %c0_i32_0 : i32, i32, i32
  }
}

</mosaic_0001>

<llo_original>
// kernel: tpu_custom_call.1
$region0: #{tpu_custom_call.1}
  #allocation0 [shape = 'u32[]', space=smem, size = 0x4, offset = 0x4, fixed_abs, tag = 'smem constant byte address 0x4 - core index']
  #allocation1 [shape = 'u32[144,128]{1,0:T(1,128)}', space=vmem, size = 0x12000, scoped, tag = 'internal scratch']
  %s0 = inlined_call_operand.hbm [shape: f32[8,128], index: 0, kind: input, shape index: {}]
  %s1 = inlined_call_operand.hbm [shape: f32[8,128], index: 1, kind: output, shape index: {}]
  %s2 = sld [smem:[#allocation0]]
  $region18: #{tpu_custom_call.1} parent=0
    _
  %s4 = ssub.s32 1, %s2
  %s5 = scalar_select 0, %s4, %s2
  $region1: #{tpu_custom_call.1} parent=0
    #allocation2 [shape = 'u8[4096]{0}', space=vmem, size = 0x1000, scoped, tag = 'input window, operand 0, single buffered']
    #allocation3 [shape = 's32[1]{0}', space=sflag, size = 0x4, scoped, tag = 'scoped memory for tpu_custom_call.1']
    #allocation4 [shape = 's32[1]{0}', space=sflag, size = 0x4, scoped, tag = 'scoped memory for tpu_custom_call.1']
    #allocation5 [shape = 'u8[4096]{0}', space=vmem, size = 0x1000, scoped, tag = 'output window, operand 0, single buffered']
    %6 = vsyncpa [#allocation3], 0
    %7 = vsyncpa [#allocation4], 0
    // Predicated region
    $region2: #{tpu_custom_call.1} parent=1 // pred_check
      _
    $region3: #{tpu_custom_call.1} parent=1 // pred_check_branch
      %9 = sbr.rel (0) target = $region5
    $region4: #{tpu_custom_call.1} parent=1 // pred_region
      %s11 = ssub.s32 128, 128
      %12 = vsyncadd [#allocation3], %s11
      %s14 = sshll.u32 [#allocation2], 4
      %s15 = int_to_ptr.vmem [resolvable:$true] %s14
      %17 = dma.hbm_to_vmem [thread:$0]  %s0, 128, %s15, [#allocation3]
    $region5: #{tpu_custom_call.1} parent=1 // pred_fallthru
      _
    // Predicated region
    $region6: #{tpu_custom_call.1} parent=1 // pred_check
      _
    $region7: #{tpu_custom_call.1} parent=1 // pred_check_branch
      %19 = sbr.rel (0) target = $region9
    $region8: #{tpu_custom_call.1} parent=1 // pred_region
      %20 = dma.done [#allocation3], 128
    $region9: #{tpu_custom_call.1} parent=1 // pred_fallthru
      _
    %v21 = vld [vmem:[#allocation2] sm:$0xff]
    %v22 = vrot.slane %v21, 7
    %23 = vst [vmem:[#allocation5] sm:$0xff] %v22
    // Predicated region
    $region10: #{tpu_custom_call.1} parent=1 // pred_check
      _
    $region11: #{tpu_custom_call.1} parent=1 // pred_check_branch
      %25 = sbr.rel (0) target = $region13
    $region12: #{tpu_custom_call.1} parent=1 // pred_region
      %s27 = ssub.s32 128, 128
      %28 = vsyncadd [#allocation4], %s27
      %s30 = sshll.u32 [#allocation5], 4
      %s31 = int_to_ptr.vmem [resolvable:$true] %s30
      %33 = dma.vmem_to_hbm [thread:$0]  %s31, 128, %s1, [#allocation4]
    $region13: #{tpu_custom_call.1} parent=1 // pred_fallthru
      _
    // Predicated region
    $region14: #{tpu_custom_call.1} parent=1 // pred_check
      _
    $region15: #{tpu_custom_call.1} parent=1 // pred_check_branch
      %35 = sbr.rel (0) target = $region17
    $region16: #{tpu_custom_call.1} parent=1 // pred_region
      %36 = dma.done [#allocation4], 128
    $region17: #{tpu_custom_call.1} parent=1 // pred_fallthru
      _
    %37 = vsyncpa [#allocation3], 1
    %38 = vsyncpa [#allocation4], 1

// kernel: _lambda_.1
$region0: #{_lambda_.1}
  #allocation0 [shape = 'u32[]', space=smem, size = 0x4, offset = 0x4, fixed_abs, tag = 'smem constant byte address 0x4 - core index']
  #allocation1 [shape = 'u32[144,128]{1,0:T(1,128)}', space=vmem, size = 0x12000, scoped, tag = 'internal scratch']
  %s0 = inlined_call_operand.vmem [shape: f32[2,24,64], index: 0, kind: input, shape index: {}]
  %s1 = inlined_call_operand.hbm [shape: f32[4,64,256], index: 1, kind: input, shape index: {}]
  %s2 = inlined_call_operand.hbm [shape: f32[1,128], index: 2, kind: input, shape index: {}]
  %s3 = inlined_call_operand.hbm [shape: f32[16,24], index: 3, kind: input, shape index: {}]
  %s4 = inlined_call_operand.hbm [shape: f32[4,128,256], index: 4, kind: input, shape index: {}]
  %s5 = inlined_call_operand.hbm [shape: f32[1,128], index: 5, kind: input, shape index: {}]
  %s6 = inlined_call_operand.hbm [shape: f32[8,16], index: 6, kind: input, shape index: {}]
  %s7 = inlined_call_operand.vmem [shape: f32[4,128,40], index: 7, kind: input, shape index: {}]
  %s8 = inlined_call_operand.hbm [shape: f32[1,40], index: 8, kind: input, shape index: {}]
  %s9 = inlined_call_operand.hbm [shape: f32[5,40,32], index: 9, kind: input, shape index: {}]
  %s10 = inlined_call_operand.hbm [shape: f32[1,8], index: 10, kind: input, shape index: {}]
  %s11 = inlined_call_operand.hbm [shape: f32[1,32], index: 11, kind: input, shape index: {}]
  %s12 = inlined_call_operand.hbm [shape: f32[32,32], index: 12, kind: input, shape index: {}]
  %s13 = inlined_call_operand.vmem [shape: f32[1,32], index: 13, kind: input, shape index: {}]
  %s14 = inlined_call_operand.vmem [shape: f32[32,128], index: 14, kind: input, shape index: {}]
  %s15 = inlined_call_operand.vmem [shape: f32[1,128], index: 15, kind: input, shape index: {}]
  %s16 = inlined_call_operand.hbm [shape: f32[2,1,128], index: 16, kind: output, shape index: {}]
  %s17 = sld [smem:[#allocation0]]
  $region141: #{_lambda_.1} parent=0
    _
  %s19 = ssub.s32 1, %s17
  %s20 = scalar_select 0, %s19, %s17
  $region1: #{_lambda_.1} parent=0
    #allocation2 [shape = 'u8[262144]{0}', space=vmem, size = 0x40000, scoped, tag = 'input window, operand 1, single buffered']
    #allocation3 [shape = 's32[2]{0}', space=sflag, size = 0x8, scoped, tag = 'scoped memory for _lambda_.1']
    #allocation4 [shape = 's32[2]{0}', space=sflag, size = 0x8, scoped, tag = 'scoped memory for _lambda_.1']
    #allocation5 [shape = 'u8[512]{0}', space=vmem, size = 0x400, scoped, tag = 'input window, operand 2, single buffered']
    #allocation6 [shape = 's32[1]{0}', space=sflag, size = 0x4, scoped, tag = 'scoped memory for _lambda_.1']
    #allocation7 [shape = 'u8[8192]{0}', space=vmem, size = 0x2000, scoped, tag = 'input window, operand 3, single buffered']
    #allocation8 [shape = 'u8[524288]{0}', space=vmem, size = 0x80000, scoped, tag = 'input window, operand 4, single buffered']
    #allocation9 [shape = 's32[1]{0}', space=sflag, size = 0x4, scoped, tag = 'scoped memory for _lambda_.1']
    #allocation10 [shape = 'u8[512]{0}', space=vmem, size = 0x400, scoped, tag = 'input window, operand 5, single buffered']
    #allocation11 [shape = 'u8[4096]{0}', space=vmem, size = 0x1000, scoped, tag = 'input window, operand 6, single buffered']
    #allocation12 [shape = 's32[1]{0}', space=sflag, size = 0x4, scoped, tag = 'scoped memory for _lambda_.1']
    #allocation13 [shape = 'u8[512]{0}', space=vmem, size = 0x400, scoped, tag = 'input window, operand 8, single buffered']
    #allocation14 [shape = 'u8[102400]{0}', space=vmem, size = 0x19000, scoped, tag = 'input window, operand 9, single buffered']
    #allocation15 [shape = 's32[1]{0}', space=sflag, size = 0x4, scoped, tag = 'scoped memory for _lambda_.1']
    #allocation16 [shape = 'u8[512]{0}', space=vmem, size = 0x400, scoped, tag = 'input window, operand 10, single buffered']
    #allocation17 [shape = 'u8[512]{0}', space=vmem, size = 0x400, scoped, tag = 'input window, operand 11, single buffered']
    #allocation18 [shape = 's32[1]{0}', space=sflag, size = 0x4, scoped, tag = 'scoped memory for _lambda_.1']
    #allocation19 [shape = 'u8[16384]{0}', space=vmem, size = 0x4000, scoped, tag = 'input window, operand 12, single buffered']
    #allocation20 [shape = 'u8[1024]{0}', space=vmem, size = 0x400, scoped, tag = 'output window, operand 0']
    %21 = vsyncpa [#allocation3], 0
    %22 = vsyncpa [#allocation6], 0
    %23 = vsyncpa [#allocation9], 0
    %24 = vsyncpa [#allocation12], 0
    %25 = vsyncpa [#allocation15], 0
    %26 = vsyncpa [#allocation18], 0
    %27 = vsyncpa [#allocation4], 0
    %s28 = scalar_lea.sflag [#allocation4], 1
    %29 = vsyncpa %s28, 0
    loop: start=0, step=1, limit=4
    $region2: #{_lambda_.1} parent=1 // loop_pre_header
      _
    $region3: #{_lambda_.1} parent=1 // loop_header
      %s31 = sphi 0, %s35
      %p32 = scmp.ge.s32.totalorder %s31, 4
      %s41 = sphi 0, %s43
      %s44 = sphi 0, %s41
      %s45 = sphi 0, %s44
      %s61 = sphi 0, %s45
      %s65 = sphi 0, %s65
      %s67 = sphi 0, %s65
      %s68 = sphi 0, %s67
      %s82 = sphi 0, %s68
      %s86 = sphi 0, %s86
      %s88 = sphi 0, %s86
      %s89 = sphi 0, %s88
      %s103 = sphi 0, %s89
      %s107 = sphi 0, %s107
      %s109 = sphi 0, %s107
      %s110 = sphi 0, %s109
      %s124 = sphi 0, %s110
      %s128 = sphi 0, %s128
      %s130 = sphi 0, %s128
      %s131 = sphi 0, %s130
      %s145 = sphi 0, %s131
      %s149 = sphi 0, %s149
      %s151 = sphi 0, %s149
      %s152 = sphi 0, %s151
      %s166 = sphi 0, %s152
      %s170 = sphi 0, %s170
      %s172 = sphi 0, %s170
      %s173 = sphi 0, %s172
      %s187 = sphi 0, %s173
      %s191 = sphi 0, %s191
      %s193 = sphi 0, %s191
      %s194 = sphi 0, %s193
      %s208 = sphi 0, %s194
      %s212 = sphi 0, %s212
      %s214 = sphi 0, %s212
      %s215 = sphi 0, %s214
      %s229 = sphi 0, %s215
      %s233 = sphi 0, %s233
      %s235 = sphi 0, %s233
      %s236 = sphi 0, %s235
      %s250 = sphi 0, %s236
      %s254 = sphi 0, %s254
      %s256 = sphi 0, %s254
      %s257 = sphi 0, %s256
      %s271 = sphi 0, %s257
      %s275 = sphi 0, %s275
      %s277 = sphi 0, %s275
      %s278 = sphi 0, %s277
      %s292 = sphi 0, %s278
      %s296 = sphi 0, %s296
      %s298 = sphi 0, %s296
      %s299 = sphi 0, %s298
      %s313 = sphi 0, %s299
      %s317 = sphi 0, %s317
      %s319 = sphi 0, %s317
      %s320 = sphi 0, %s319
      %s334 = sphi 0, %s320
      %s338 = sphi 0, %s338
      %s340 = sphi 0, %s338
      %s341 = sphi 0, %s340
      %s355 = sphi 0, %s341
      %s359 = sphi 0, %s359
      %s361 = sphi 0, %s359
      %s362 = sphi 0, %s361
      %s376 = sphi 0, %s362
      %s382 = sphi 0, %s384
      %s385 = sphi 0, %s382
      %s386 = sphi 0, %s385
      %s402 = sphi 0, %s386
    $region4: #{_lambda_.1} parent=1 // loop_header_branch
      %34 = sbr.rel (%p32) target = $region8
    $region5: #{_lambda_.1} parent=1 // loop_body
      %s36 = ssub.s32 %s31, 1
      %s37 = ssub.s32 %s31, 2
      %s38 = sadd.s32 %s31, 1
      %s39 = ssub.s32 %s31, %s38
      %p40 = scmp.eq.s32.totalorder %s39, 0
      %s42 = sadd.s32 %s41, 1
      %s43 = scalar_select %p40, %s41, %s42
      %p46 = pneg %p40
      %p47 = scmp.eq.s32.totalorder %s31, 1
      %p48 = por %p46, %p47
      %p49 = scmp.ne.s32.totalorder %s41, %s44
      %p50 = scmp.eq.s32.totalorder %s31, 0
      %p51 = por %p49, %p50
      %p52 = scmp.ne.s32.totalorder %s41, %s44
      %p53 = scmp.eq.s32.totalorder %s36, 1
      %p54 = por %p52, %p53
      %p55 = scmp.ne.s32.totalorder %s44, %s45
      %p56 = scmp.eq.s32.totalorder %s36, 0
      %p57 = por %p55, %p56
      %p58 = scmp.ne.s32.totalorder %s44, %s45
      %p59 = scmp.eq.s32.totalorder %s37, 1
      %p60 = por %p58, %p59
      %p62 = scmp.ne.s32.totalorder %s45, %s61
      %p63 = scmp.eq.s32.totalorder %s37, 0
      %p64 = por %p62, %p63
      %s66 = sadd.s32 %s65, 1
      %p69 = scmp.eq.s32.totalorder %s31, 1
      %p70 = scmp.ne.s32.totalorder %s65, %s67
      %p71 = scmp.eq.s32.totalorder %s31, 0
      %p72 = por %p70, %p71
      %p73 = scmp.ne.s32.totalorder %s65, %s67
      %p74 = scmp.eq.s32.totalorder %s36, 1
      %p75 = por %p73, %p74
      %p76 = scmp.ne.s32.totalorder %s67, %s68
      %p77 = scmp.eq.s32.totalorder %s36, 0
      %p78 = por %p76, %p77
      %p79 = scmp.ne.s32.totalorder %s67, %s68
      %p80 = scmp.eq.s32.totalorder %s37, 1
      %p81 = por %p79, %p80
      %p83 = scmp.ne.s32.totalorder %s68, %s82
      %p84 = scmp.eq.s32.totalorder %s37, 0
      %p85 = por %p83, %p84
      %s87 = sadd.s32 %s86, 1
      %p90 = scmp.eq.s32.totalorder %s31, 1
      %p91 = scmp.ne.s32.totalorder %s86, %s88
      %p92 = scmp.eq.s32.totalorder %s31, 0
      %p93 = por %p91, %p92
      %p94 = scmp.ne.s32.totalorder %s86, %s88
      %p95 = scmp.eq.s32.totalorder %s36, 1
      %p96 = por %p94, %p95
      %p97 = scmp.ne.s32.totalorder %s88, %s89
      %p98 = scmp.eq.s32.totalorder %s36, 0
      %p99 = por %p97, %p98
      %p100 = scmp.ne.s32.totalorder %s88, %s89
      %p101 = scmp.eq.s32.totalorder %s37, 1
      %p102 = por %p100, %p101
      %p104 = scmp.ne.s32.totalorder %s89, %s103
      %p105 = scmp.eq.s32.totalorder %s37, 0
      %p106 = por %p104, %p105
      %s108 = sadd.s32 %s107, 1
      %p111 = scmp.eq.s32.totalorder %s31, 1
      %p112 = scmp.ne.s32.totalorder %s107, %s109
      %p113 = scmp.eq.s32.totalorder %s31, 0
      %p114 = por %p112, %p113
      %p115 = scmp.ne.s32.totalorder %s107, %s109
      %p116 = scmp.eq.s32.totalorder %s36, 1
      %p117 = por %p115, %p116
      %p118 = scmp.ne.s32.totalorder %s109, %s110
      %p119 = scmp.eq.s32.totalorder %s36, 0
      %p120 = por %p118, %p119
      %p121 = scmp.ne.s32.totalorder %s109, %s110
      %p122 = scmp.eq.s32.totalorder %s37, 1
      %p123 = por %p121, %p122
      %p125 = scmp.ne.s32.totalorder %s110, %s124
      %p126 = scmp.eq.s32.totalorder %s37, 0
      %p127 = por %p125, %p126
      %s129 = sadd.s32 %s128, 1
      %p132 = scmp.eq.s32.totalorder %s31, 1
      %p133 = scmp.ne.s32.totalorder %s128, %s130
      %p134 = scmp.eq.s32.totalorder %s31, 0
      %p135 = por %p133, %p134
      %p136 = scmp.ne.s32.totalorder %s128, %s130
      %p137 = scmp.eq.s32.totalorder %s36, 1
      %p138 = por %p136, %p137
      %p139 = scmp.ne.s32.totalorder %s130, %s131
      %p140 = scmp.eq.s32.totalorder %s36, 0
      %p141 = por %p139, %p140
      %p142 = scmp.ne.s32.totalorder %s130, %s131
      %p143 = scmp.eq.s32.totalorder %s37, 1
      %p144 = por %p142, %p143
      %p146 = scmp.ne.s32.totalorder %s131, %s145
      %p147 = scmp.eq.s32.totalorder %s37, 0
      %p148 = por %p146, %p147
      %s150 = sadd.s32 %s149, 1
      %p153 = scmp.eq.s32.totalorder %s31, 1
      %p154 = scmp.ne.s32.totalorder %s149, %s151
      %p155 = scmp.eq.s32.totalorder %s31, 0
      %p156 = por %p154, %p155
      %p157 = scmp.ne.s32.totalorder %s149, %s151
      %p158 = scmp.eq.s32.totalorder %s36, 1
      %p159 = por %p157, %p158
      %p160 = scmp.ne.s32.totalorder %s151, %s152
      %p161 = scmp.eq.s32.totalorder %s36, 0
      %p162 = por %p160, %p161
      %p163 = scmp.ne.s32.totalorder %s151, %s152
      %p164 = scmp.eq.s32.totalorder %s37, 1
      %p165 = por %p163, %p164
      %p167 = scmp.ne.s32.totalorder %s152, %s166
      %p168 = scmp.eq.s32.totalorder %s37, 0
      %p169 = por %p167, %p168
      %s171 = sadd.s32 %s170, 1
      %p174 = scmp.eq.s32.totalorder %s31, 1
      %p175 = scmp.ne.s32.totalorder %s170, %s172
      %p176 = scmp.eq.s32.totalorder %s31, 0
      %p177 = por %p175, %p176
      %p178 = scmp.ne.s32.totalorder %s170, %s172
      %p179 = scmp.eq.s32.totalorder %s36, 1
      %p180 = por %p178, %p179
      %p181 = scmp.ne.s32.totalorder %s172, %s173
      %p182 = scmp.eq.s32.totalorder %s36, 0
      %p183 = por %p181, %p182
      %p184 = scmp.ne.s32.totalorder %s172, %s173
      %p185 = scmp.eq.s32.totalorder %s37, 1
      %p186 = por %p184, %p185
      %p188 = scmp.ne.s32.totalorder %s173, %s187
      %p189 = scmp.eq.s32.totalorder %s37, 0
      %p190 = por %p188, %p189
      %s192 = sadd.s32 %s191, 1
      %p195 = scmp.eq.s32.totalorder %s31, 1
      %p196 = scmp.ne.s32.totalorder %s191, %s193
      %p197 = scmp.eq.s32.totalorder %s31, 0
      %p198 = por %p196, %p197
      %p199 = scmp.ne.s32.totalorder %s191, %s193
      %p200 = scmp.eq.s32.totalorder %s36, 1
      %p201 = por %p199, %p200
      %p202 = scmp.ne.s32.totalorder %s193, %s194
      %p203 = scmp.eq.s32.totalorder %s36, 0
      %p204 = por %p202, %p203
      %p205 = scmp.ne.s32.totalorder %s193, %s194
      %p206 = scmp.eq.s32.totalorder %s37, 1
      %p207 = por %p205, %p206
      %p209 = scmp.ne.s32.totalorder %s194, %s208
      %p210 = scmp.eq.s32.totalorder %s37, 0
      %p211 = por %p209, %p210
      %s213 = sadd.s32 %s212, 1
      %p216 = scmp.eq.s32.totalorder %s31, 1
      %p217 = scmp.ne.s32.totalorder %s212, %s214
      %p218 = scmp.eq.s32.totalorder %s31, 0
      %p219 = por %p217, %p218
      %p220 = scmp.ne.s32.totalorder %s212, %s214
      %p221 = scmp.eq.s32.totalorder %s36, 1
      %p222 = por %p220, %p221
      %p223 = scmp.ne.s32.totalorder %s214, %s215
      %p224 = scmp.eq.s32.totalorder %s36, 0
      %p225 = por %p223, %p224
      %p226 = scmp.ne.s32.totalorder %s214, %s215
      %p227 = scmp.eq.s32.totalorder %s37, 1
      %p228 = por %p226, %p227
      %p230 = scmp.ne.s32.totalorder %s215, %s229
      %p231 = scmp.eq.s32.totalorder %s37, 0
      %p232 = por %p230, %p231
      %s234 = sadd.s32 %s233, 1
      %p237 = scmp.eq.s32.totalorder %s31, 1
      %p238 = scmp.ne.s32.totalorder %s233, %s235
      %p239 = scmp.eq.s32.totalorder %s31, 0
      %p240 = por %p238, %p239
      %p241 = scmp.ne.s32.totalorder %s233, %s235
      %p242 = scmp.eq.s32.totalorder %s36, 1
      %p243 = por %p241, %p242
      %p244 = scmp.ne.s32.totalorder %s235, %s236
      %p245 = scmp.eq.s32.totalorder %s36, 0
      %p246 = por %p244, %p245
      %p247 = scmp.ne.s32.totalorder %s235, %s236
      %p248 = scmp.eq.s32.totalorder %s37, 1
      %p249 = por %p247, %p248
      %p251 = scmp.ne.s32.totalorder %s236, %s250
      %p252 = scmp.eq.s32.totalorder %s37, 0
      %p253 = por %p251, %p252
      %s255 = sadd.s32 %s254, 1
      %p258 = scmp.eq.s32.totalorder %s31, 1
      %p259 = scmp.ne.s32.totalorder %s254, %s256
      %p260 = scmp.eq.s32.totalorder %s31, 0
      %p261 = por %p259, %p260
      %p262 = scmp.ne.s32.totalorder %s254, %s256
      %p263 = scmp.eq.s32.totalorder %s36, 1
      %p264 = por %p262, %p263
      %p265 = scmp.ne.s32.totalorder %s256, %s257
      %p266 = scmp.eq.s32.totalorder %s36, 0
      %p267 = por %p265, %p266
      %p268 = scmp.ne.s32.totalorder %s256, %s257
      %p269 = scmp.eq.s32.totalorder %s37, 1
      %p270 = por %p268, %p269
      %p272 = scmp.ne.s32.totalorder %s257, %s271
      %p273 = scmp.eq.s32.totalorder %s37, 0
      %p274 = por %p272, %p273
      %s276 = sadd.s32 %s275, 1
      %p279 = scmp.eq.s32.totalorder %s31, 1
      %p280 = scmp.ne.s32.totalorder %s275, %s277
      %p281 = scmp.eq.s32.totalorder %s31, 0
      %p282 = por %p280, %p281
      %p283 = scmp.ne.s32.totalorder %s275, %s277
      %p284 = scmp.eq.s32.totalorder %s36, 1
      %p285 = por %p283, %p284
      %p286 = scmp.ne.s32.totalorder %s277, %s278
      %p287 = scmp.eq.s32.totalorder %s36, 0
      %p288 = por %p286, %p287
      %p289 = scmp.ne.s32.totalorder %s277, %s278
      %p290 = scmp.eq.s32.totalorder %s37, 1
      %p291 = por %p289, %p290
      %p293 = scmp.ne.s32.totalorder %s278, %s292
      %p294 = scmp.eq.s32.totalorder %s37, 0
      %p295 = por %p293, %p294
      %s297 = sadd.s32 %s296, 1
      %p300 = scmp.eq.s32.totalorder %s31, 1
      %p301 = scmp.ne.s32.totalorder %s296, %s298
      %p302 = scmp.eq.s32.totalorder %s31, 0
      %p303 = por %p301, %p302
      %p304 = scmp.ne.s32.totalorder %s296, %s298
      %p305 = scmp.eq.s32.totalorder %s36, 1
      %p306 = por %p304, %p305
      %p307 = scmp.ne.s32.totalorder %s298, %s299
      %p308 = scmp.eq.s32.totalorder %s36, 0
      %p309 = por %p307, %p308
      %p310 = scmp.ne.s32.totalorder %s298, %s299
      %p311 = scmp.eq.s32.totalorder %s37, 1
      %p312 = por %p310, %p311
      %p314 = scmp.ne.s32.totalorder %s299, %s313
      %p315 = scmp.eq.s32.totalorder %s37, 0
      %p316 = por %p314, %p315
      %s318 = sadd.s32 %s317, 1
      %p321 = scmp.eq.s32.totalorder %s31, 1
      %p322 = scmp.ne.s32.totalorder %s317, %s319
      %p323 = scmp.eq.s32.totalorder %s31, 0
      %p324 = por %p322, %p323
      %p325 = scmp.ne.s32.totalorder %s317, %s319
      %p326 = scmp.eq.s32.totalorder %s36, 1
      %p327 = por %p325, %p326
      %p328 = scmp.ne.s32.totalorder %s319, %s320
      %p329 = scmp.eq.s32.totalorder %s36, 0
      %p330 = por %p328, %p329
      %p331 = scmp.ne.s32.totalorder %s319, %s320
      %p332 = scmp.eq.s32.totalorder %s37, 1
      %p333 = por %p331, %p332
      %p335 = scmp.ne.s32.totalorder %s320, %s334
      %p336 = scmp.eq.s32.totalorder %s37, 0
      %p337 = por %p335, %p336
      %s339 = sadd.s32 %s338, 1
      %p342 = scmp.eq.s32.totalorder %s31, 1
      %p343 = scmp.ne.s32.totalorder %s338, %s340
      %p344 = scmp.eq.s32.totalorder %s31, 0
      %p345 = por %p343, %p344
      %p346 = scmp.ne.s32.totalorder %s338, %s340
      %p347 = scmp.eq.s32.totalorder %s36, 1
      %p348 = por %p346, %p347
      %p349 = scmp.ne.s32.totalorder %s340, %s341
      %p350 = scmp.eq.s32.totalorder %s36, 0
      %p351 = por %p349, %p350
      %p352 = scmp.ne.s32.totalorder %s340, %s341
      %p353 = scmp.eq.s32.totalorder %s37, 1
      %p354 = por %p352, %p353
      %p356 = scmp.ne.s32.totalorder %s341, %s355
      %p357 = scmp.eq.s32.totalorder %s37, 0
      %p358 = por %p356, %p357
      %s360 = sadd.s32 %s359, 1
      %p363 = scmp.eq.s32.totalorder %s31, 1
      %p364 = scmp.ne.s32.totalorder %s359, %s361
      %p365 = scmp.eq.s32.totalorder %s31, 0
      %p366 = por %p364, %p365
      %p367 = scmp.ne.s32.totalorder %s359, %s361
      %p368 = scmp.eq.s32.totalorder %s36, 1
      %p369 = por %p367, %p368
      %p370 = scmp.ne.s32.totalorder %s361, %s362
      %p371 = scmp.eq.s32.totalorder %s36, 0
      %p372 = por %p370, %p371
      %p373 = scmp.ne.s32.totalorder %s361, %s362
      %p374 = scmp.eq.s32.totalorder %s37, 1
      %p375 = por %p373, %p374
      %p377 = scmp.ne.s32.totalorder %s362, %s376
      %p378 = scmp.eq.s32.totalorder %s37, 0
      %p379 = por %p377, %p378
      %s380 = ssub.s32 %s31, %s38
      %p381 = scmp.eq.s32.totalorder %s380, 0
      %s383 = sadd.s32 %s382, 1
      %s384 = scalar_select %p381, %s382, %s383
      %p387 = pneg %p381
      %p388 = scmp.eq.s32.totalorder %s31, 1
      %p389 = por %p387, %p388
      %p390 = scmp.ne.s32.totalorder %s382, %s385
      %p391 = scmp.eq.s32.totalorder %s31, 0
      %p392 = por %p390, %p391
      %p393 = scmp.ne.s32.totalorder %s382, %s385
      %p394 = scmp.eq.s32.totalorder %s36, 1
      %p395 = por %p393, %p394
      %p396 = scmp.ne.s32.totalorder %s385, %s386
      %p397 = scmp.eq.s32.totalorder %s36, 0
      %p398 = por %p396, %p397
      %p399 = scmp.ne.s32.totalorder %s385, %s386
      %p400 = scmp.eq.s32.totalorder %s37, 1
      %p401 = por %p399, %p400
      %p403 = scmp.ne.s32.totalorder %s386, %s402
      %p404 = scmp.eq.s32.totalorder %s37, 0
      %p405 = por %p403, %p404
      %p406 = scmp.le.s32.totalorder 1, %s31
      %p407 = scmp.lt.s32.totalorder %s31, 3
      %p408 = pnand %p406, %p407
      %p409 = pneg %p408
      // Predicated region
      $region9: #{_lambda_.1} parent=5 // pred_check
        _
      $region10: #{_lambda_.1} parent=5 // pred_check_branch
        %411 = sbr.rel (%p408) target = $region12
      $region11: #{_lambda_.1} parent=5 // pred_region
        %s412 = ssub.s32 %s31, 1
        // Predicated region
        $region13: #{_lambda_.1} parent=11 // pred_check
          %p413 = pneg %p78
        $region14: #{_lambda_.1} parent=11 // pred_check_branch
          %415 = sbr.rel (%p413) target = $region16
        $region15: #{_lambda_.1} parent=11 // pred_region
          %s417 = ssub.s32 8192, 8192
          %418 = vsyncadd [#allocation3], %s417
          %s419 = sshll.u32 [#allocation2], 4
          %s420 = int_to_ptr.vmem [resolvable:$true] %s419
          %425 = dma.hbm_to_vmem [thread:$0]  %s1, 8192, %s420, [#allocation3], 256, 256, 16
        $region16: #{_lambda_.1} parent=11 // pred_fallthru
          _
        // Predicated region
        $region17: #{_lambda_.1} parent=11 // pred_check
          %p426 = pneg %p99
        $region18: #{_lambda_.1} parent=11 // pred_check_branch
          %428 = sbr.rel (%p426) target = $region20
        $region19: #{_lambda_.1} parent=11 // pred_region
          %s430 = ssub.s32 16, 16
          %431 = vsyncadd [#allocation6], %s430
          %s433 = sshll.u32 [#allocation5], 4
          %s434 = int_to_ptr.vmem [resolvable:$true] %s433
          %436 = dma.hbm_to_vmem [thread:$0]  %s2, 16, %s434, [#allocation6]
        $region20: #{_lambda_.1} parent=11 // pred_fallthru
          _
        // Predicated region
        $region21: #{_lambda_.1} parent=11 // pred_check
          %p437 = pneg %p120
        $region22: #{_lambda_.1} parent=11 // pred_check_branch
          %439 = sbr.rel (%p437) target = $region24
        $region23: #{_lambda_.1} parent=11 // pred_region
          %s441 = ssub.s32 256, 256
          %442 = vsyncadd [#allocation6], %s441
          %s443 = sshll.u32 [#allocation7], 4
          %s444 = int_to_ptr.vmem [resolvable:$true] %s443
          %449 = dma.hbm_to_vmem [thread:$0]  %s3, 256, %s444, [#allocation6], 128, 128, 8
        $region24: #{_lambda_.1} parent=11 // pred_fallthru
          _
        // Predicated region
        $region25: #{_lambda_.1} parent=11 // pred_check
          %p450 = pneg %p141
        $region26: #{_lambda_.1} parent=11 // pred_check_branch
          %452 = sbr.rel (%p450) target = $region28
        $region27: #{_lambda_.1} parent=11 // pred_region
          %s454 = ssub.s32 16384, 16384
          %455 = vsyncadd [#allocation9], %s454
          %s456 = sshll.u32 [#allocation8], 4
          %s457 = int_to_ptr.vmem [resolvable:$true] %s456
          %462 = dma.hbm_to_vmem [thread:$0]  %s4, 16384, %s457, [#allocation9], 256, 256, 16
        $region28: #{_lambda_.1} parent=11 // pred_fallthru
          _
        // Predicated region
        $region29: #{_lambda_.1} parent=11 // pred_check
          %p463 = pneg %p162
        $region30: #{_lambda_.1} parent=11 // pred_check_branch
          %465 = sbr.rel (%p463) target = $region32
        $region31: #{_lambda_.1} parent=11 // pred_region
          %s467 = ssub.s32 16, 16
          %468 = vsyncadd [#allocation9], %s467
          %s470 = sshll.u32 [#allocation10], 4
          %s471 = int_to_ptr.vmem [resolvable:$true] %s470
          %473 = dma.hbm_to_vmem [thread:$0]  %s5, 16, %s471, [#allocation9]
        $region32: #{_lambda_.1} parent=11 // pred_fallthru
          _
        // Predicated region
        $region33: #{_lambda_.1} parent=11 // pred_check
          %p474 = pneg %p183
        $region34: #{_lambda_.1} parent=11 // pred_check_branch
          %476 = sbr.rel (%p474) target = $region36
        $region35: #{_lambda_.1} parent=11 // pred_region
          %s478 = ssub.s32 128, 128
          %479 = vsyncadd [#allocation12], %s478
          %s481 = sshll.u32 [#allocation11], 4
          %s482 = int_to_ptr.vmem [resolvable:$true] %s481
          %484 = dma.hbm_to_vmem [thread:$0]  %s6, 128, %s482, [#allocation12]
        $region36: #{_lambda_.1} parent=11 // pred_fallthru
          _
        // Predicated region
        $region37: #{_lambda_.1} parent=11 // pred_check
          %p485 = pneg %p204
        $region38: #{_lambda_.1} parent=11 // pred_check_branch
          %487 = sbr.rel (%p485) target = $region40
        $region39: #{_lambda_.1} parent=11 // pred_region
          _
        $region40: #{_lambda_.1} parent=11 // pred_fallthru
          _
        // Predicated region
        $region41: #{_lambda_.1} parent=11 // pred_check
          %p488 = pneg %p225
        $region42: #{_lambda_.1} parent=11 // pred_check_branch
          %490 = sbr.rel (%p488) target = $region44
        $region43: #{_lambda_.1} parent=11 // pred_region
          %s492 = ssub.s32 16, 16
          %493 = vsyncadd [#allocation12], %s492
          %s495 = sshll.u32 [#allocation13], 4
          %s496 = int_to_ptr.vmem [resolvable:$true] %s495
          %498 = dma.hbm_to_vmem [thread:$0]  %s8, 16, %s496, [#allocation12]
        $region44: #{_lambda_.1} parent=11 // pred_fallthru
          _
        // Predicated region
        $region45: #{_lambda_.1} parent=11 // pred_check
          %p499 = pneg %p246
        $region46: #{_lambda_.1} parent=11 // pred_check_branch
          %501 = sbr.rel (%p499) target = $region48
        $region47: #{_lambda_.1} parent=11 // pred_region
          %s503 = ssub.s32 3200, 3200
          %504 = vsyncadd [#allocation15], %s503
          %s505 = sshll.u32 [#allocation14], 4
          %s506 = int_to_ptr.vmem [resolvable:$true] %s505
          %511 = dma.hbm_to_vmem [thread:$0]  %s9, 3200, %s506, [#allocation15], 128, 128, 8
        $region48: #{_lambda_.1} parent=11 // pred_fallthru
          _
        // Predicated region
        $region49: #{_lambda_.1} parent=11 // pred_check
          %p512 = pneg %p267
        $region50: #{_lambda_.1} parent=11 // pred_check_branch
          %514 = sbr.rel (%p512) target = $region52
        $region51: #{_lambda_.1} parent=11 // pred_region
          %s516 = ssub.s32 16, 16
          %517 = vsyncadd [#allocation15], %s516
          %s519 = sshll.u32 [#allocation16], 4
          %s520 = int_to_ptr.vmem [resolvable:$true] %s519
          %522 = dma.hbm_to_vmem [thread:$0]  %s10, 16, %s520, [#allocation15]
        $region52: #{_lambda_.1} parent=11 // pred_fallthru
          _
        // Predicated region
        $region53: #{_lambda_.1} parent=11 // pred_check
          %p523 = pneg %p288
        $region54: #{_lambda_.1} parent=11 // pred_check_branch
          %525 = sbr.rel (%p523) target = $region56
        $region55: #{_lambda_.1} parent=11 // pred_region
          %s527 = ssub.s32 16, 16
          %528 = vsyncadd [#allocation18], %s527
          %s530 = sshll.u32 [#allocation17], 4
          %s531 = int_to_ptr.vmem [resolvable:$true] %s530
          %533 = dma.hbm_to_vmem [thread:$0]  %s11, 16, %s531, [#allocation18]
        $region56: #{_lambda_.1} parent=11 // pred_fallthru
          _
        // Predicated region
        $region57: #{_lambda_.1} parent=11 // pred_check
          %p534 = pneg %p309
        $region58: #{_lambda_.1} parent=11 // pred_check_branch
          %536 = sbr.rel (%p534) target = $region60
        $region59: #{_lambda_.1} parent=11 // pred_region
          %s538 = ssub.s32 512, 512
          %539 = vsyncadd [#allocation18], %s538
          %s540 = sshll.u32 [#allocation19], 4
          %s541 = int_to_ptr.vmem [resolvable:$true] %s540
          %546 = dma.hbm_to_vmem [thread:$0]  %s12, 512, %s541, [#allocation18], 128, 128, 8
        $region60: #{_lambda_.1} parent=11 // pred_fallthru
          _
        // Predicated region
        $region61: #{_lambda_.1} parent=11 // pred_check
          %p547 = pneg %p330
        $region62: #{_lambda_.1} parent=11 // pred_check_branch
          %549 = sbr.rel (%p547) target = $region64
        $region63: #{_lambda_.1} parent=11 // pred_region
          _
        $region64: #{_lambda_.1} parent=11 // pred_fallthru
          _
        // Predicated region
        $region65: #{_lambda_.1} parent=11 // pred_check
          %p550 = pneg %p351
        $region66: #{_lambda_.1} parent=11 // pred_check_branch
          %552 = sbr.rel (%p550) target = $region68
        $region67: #{_lambda_.1} parent=11 // pred_region
          _
        $region68: #{_lambda_.1} parent=11 // pred_fallthru
          _
        // Predicated region
        $region69: #{_lambda_.1} parent=11 // pred_check
          %p553 = pneg %p372
        $region70: #{_lambda_.1} parent=11 // pred_check_branch
          %555 = sbr.rel (%p553) target = $region72
        $region71: #{_lambda_.1} parent=11 // pred_region
          _
        $region72: #{_lambda_.1} parent=11 // pred_fallthru
          _
      $region12: #{_lambda_.1} parent=5 // pred_fallthru
        _
      %p556 = scmp.lt.s32.totalorder %s31, 2
      // Predicated region
      $region73: #{_lambda_.1} parent=5 // pred_check
        %p557 = pneg %p556
      $region74: #{_lambda_.1} parent=5 // pred_check_branch
        %559 = sbr.rel (%p557) target = $region76
      $region75: #{_lambda_.1} parent=5 // pred_region
        // Predicated region
        $region77: #{_lambda_.1} parent=75 // pred_check
          %p560 = pneg %p51
        $region78: #{_lambda_.1} parent=75 // pred_check_branch
          %562 = sbr.rel (%p560) target = $region80
        $region79: #{_lambda_.1} parent=75 // pred_region
          %p563 = scmp.lt.s32.totalorder %s31, 1
          %s564 = scalar_select %p563, %s31, 1
          %s565 = smul.addr %s564, 3
          %s566 = smul.addr %s565, 8
          %s567 = scalar_lea.vmem %s0, %s566
        $region80: #{_lambda_.1} parent=75 // pred_fallthru
          _
      $region76: #{_lambda_.1} parent=5 // pred_fallthru
        _
      %p568 = scmp.le.s32.totalorder 1, %s31
      %p569 = scmp.lt.s32.totalorder %s31, 3
      %p570 = pnand %p568, %p569
      %p571 = pneg %p570
      // Predicated region
      $region81: #{_lambda_.1} parent=5 // pred_check
        _
      $region82: #{_lambda_.1} parent=5 // pred_check_branch
        %573 = sbr.rel (%p570) target = $region84
      $region83: #{_lambda_.1} parent=5 // pred_region
        %s574 = ssub.s32 %s31, 1
        // Predicated region
        $region85: #{_lambda_.1} parent=83 // pred_check
          %p575 = pneg %p78
        $region86: #{_lambda_.1} parent=83 // pred_check_branch
          %577 = sbr.rel (%p575) target = $region88
        $region87: #{_lambda_.1} parent=83 // pred_region
          %578 = dma.done [#allocation3], 8192
        $region88: #{_lambda_.1} parent=83 // pred_fallthru
          _
        // Predicated region
        $region89: #{_lambda_.1} parent=83 // pred_check
          %p579 = pneg %p99
        $region90: #{_lambda_.1} parent=83 // pred_check_branch
          %581 = sbr.rel (%p579) target = $region92
        $region91: #{_lambda_.1} parent=83 // pred_region
          %582 = dma.done [#allocation6], 16
        $region92: #{_lambda_.1} parent=83 // pred_fallthru
          _
        // Predicated region
        $region93: #{_lambda_.1} parent=83 // pred_check
          %p583 = pneg %p120
        $region94: #{_lambda_.1} parent=83 // pred_check_branch
          %585 = sbr.rel (%p583) target = $region96
        $region95: #{_lambda_.1} parent=83 // pred_region
          %586 = dma.done [#allocation6], 256
        $region96: #{_lambda_.1} parent=83 // pred_fallthru
          _
        // Predicated region
        $region97: #{_lambda_.1} parent=83 // pred_check
          %p587 = pneg %p141
        $region98: #{_lambda_.1} parent=83 // pred_check_branch
          %589 = sbr.rel (%p587) target = $region100
        $region99: #{_lambda_.1} parent=83 // pred_region
          %590 = dma.done [#allocation9], 16384
        $region100: #{_lambda_.1} parent=83 // pred_fallthru
          _
        // Predicated region
        $region101: #{_lambda_.1} parent=83 // pred_check
          %p591 = pneg %p162
        $region102: #{_lambda_.1} parent=83 // pred_check_branch
          %593 = sbr.rel (%p591) target = $region104
        $region103: #{_lambda_.1} parent=83 // pred_region
          %594 = dma.done [#allocation9], 16
        $region104: #{_lambda_.1} parent=83 // pred_fallthru
          _
        // Predicated region
        $region105: #{_lambda_.1} parent=83 // pred_check
          %p595 = pneg %p183
        $region106: #{_lambda_.1} parent=83 // pred_check_branch
          %597 = sbr.rel (%p595) target = $region108
        $region107: #{_lambda_.1} parent=83 // pred_region
          %598 = dma.done [#allocation12], 128
        $region108: #{_lambda_.1} parent=83 // pred_fallthru
          _
        // Predicated region
        $region109: #{_lambda_.1} parent=83 // pred_check
          %p599 = pneg %p225
        $region110: #{_lambda_.1} parent=83 // pred_check_branch
          %601 = sbr.rel (%p599) target = $region112
        $region111: #{_lambda_.1} parent=83 // pred_region
          %602 = dma.done [#allocation12], 16
        $region112: #{_lambda_.1} parent=83 // pred_fallthru
          _
        // Predicated region
        $region113: #{_lambda_.1} parent=83 // pred_check
          %p603 = pneg %p246
        $region114: #{_lambda_.1} parent=83 // pred_check_branch
          %605 = sbr.rel (%p603) target = $region116
        $region115: #{_lambda_.1} parent=83 // pred_region
          %606 = dma.done [#allocation15], 3200
        $region116: #{_lambda_.1} parent=83 // pred_fallthru
          _
        // Predicated region
        $region117: #{_lambda_.1} parent=83 // pred_check
          %p607 = pneg %p267
        $region118: #{_lambda_.1} parent=83 // pred_check_branch
          %609 = sbr.rel (%p607) target = $region120
        $region119: #{_lambda_.1} parent=83 // pred_region
          %610 = dma.done [#allocation15], 16
        $region120: #{_lambda_.1} parent=83 // pred_fallthru
          _
        // Predicated region
        $region121: #{_lambda_.1} parent=83 // pred_check
          %p611 = pneg %p288
        $region122: #{_lambda_.1} parent=83 // pred_check_branch
          %613 = sbr.rel (%p611) target = $region124
        $region123: #{_lambda_.1} parent=83 // pred_region
          %614 = dma.done [#allocation18], 16
        $region124: #{_lambda_.1} parent=83 // pred_fallthru
          _
        // Predicated region
        $region125: #{_lambda_.1} parent=83 // pred_check
          %p615 = pneg %p309
        $region126: #{_lambda_.1} parent=83 // pred_check_branch
          %617 = sbr.rel (%p615) target = $region128
        $region127: #{_lambda_.1} parent=83 // pred_region
          %618 = dma.done [#allocation18], 512
        $region128: #{_lambda_.1} parent=83 // pred_fallthru
          _
        %p619 = scmp.lt.s32.totalorder %s36, 1
        %s620 = scalar_select %p619, %s36, 1
        %s621 = smul.addr %s620, 3
        %s622 = smul.addr %s621, 8
        %s623 = scalar_lea.vmem %s0, %s622
        %p624 = pneg %p57
        %p625 = pneg %p54
        %p626 = pneg %p78
        %p627 = pneg %p75
        %p628 = pneg %p99
        %p629 = pneg %p96
        %p630 = pneg %p120
        %p631 = pneg %p117
        %p632 = pneg %p141
        %p633 = pneg %p138
        %p634 = pneg %p162
        %p635 = pneg %p159
        %p636 = pneg %p183
        %p637 = pneg %p180
        %p638 = pneg %p204
        %p639 = pneg %p201
        %p640 = pneg %p225
        %p641 = pneg %p222
        %p642 = pneg %p246
        %p643 = pneg %p243
        %p644 = pneg %p267
        %p645 = pneg %p264
        %p646 = pneg %p288
        %p647 = pneg %p285
        %p648 = pneg %p309
        %p649 = pneg %p306
        %p650 = pneg %p330
        %p651 = pneg %p327
        %p652 = pneg %p351
        %p653 = pneg %p348
        %p654 = pneg %p372
        %p655 = pneg %p369
        %p656 = pneg %p398
        %p657 = pneg %p395
        %s658 = sand.u32 %s385, 1
        %s659 = scalar_lea.sflag [#allocation4], %s658
        %s660 = sand.u32 %s385, 1
        %s661 = scalar_lea.vmem [#allocation20], %s660
        %p662 = scmp.lt.s32.totalorder %s36, 1
        %s663 = scalar_select %p662, %s36, 1
        %s664 = smul.addr %s663, 3
        %s665 = smul.addr %s664, 8
        %s666 = scalar_lea.vmem %s0, %s665
        %v667 = vld [vmem:[%s666] sm:$0xff]
        %v668 = vld [vmem:[%s666 + $0x8] sm:$0xff]
        %v669 = vld [vmem:[%s666 + $0x10] sm:$0xff]
        %v670 = vld [vmem:[#allocation2] sm:$0xff]
        %v671 = vld [vmem:[#allocation2 + $0x8] sm:$0xff]
        %v672 = vld [vmem:[#allocation2 + $0x10] sm:$0xff]
        %v673 = vld [vmem:[#allocation2 + $0x18] sm:$0xff]
        %v674 = vld [vmem:[#allocation2 + $0x20] sm:$0xff]
        %v675 = vld [vmem:[#allocation2 + $0x28] sm:$0xff]
        %v676 = vld [vmem:[#allocation2 + $0x30] sm:$0xff]
        %v677 = vld [vmem:[#allocation2 + $0x38] sm:$0xff]
        %v678 = vld [vmem:[#allocation2 + $0x40] sm:$0xff]
        %v679 = vld [vmem:[#allocation2 + $0x48] sm:$0xff]
        %v680 = vld [vmem:[#allocation2 + $0x50] sm:$0xff]
        %v681 = vld [vmem:[#allocation2 + $0x58] sm:$0xff]
        %v682 = vld [vmem:[#allocation2 + $0x60] sm:$0xff]
        %v683 = vld [vmem:[#allocation2 + $0x68] sm:$0xff]
        %v684 = vld [vmem:[#allocation2 + $0x70] sm:$0xff]
        %v685 = vld [vmem:[#allocation2 + $0x78] sm:$0xff]
        %s686 = scalar_lea.vmem [#allocation2], 128
        %v687 = vld [vmem:[%s686] sm:$0xff]
        %v688 = vld [vmem:[%s686 + $0x8] sm:$0xff]
        %v689 = vld [vmem:[%s686 + $0x10] sm:$0xff]
        %v690 = vld [vmem:[%s686 + $0x18] sm:$0xff]
        %v691 = vld [vmem:[%s686 + $0x20] sm:$0xff]
        %v692 = vld [vmem:[%s686 + $0x28] sm:$0xff]
        %v693 = vld [vmem:[%s686 + $0x30] sm:$0xff]
        %v694 = vld [vmem:[%s686 + $0x38] sm:$0xff]
        %v695 = vld [vmem:[%s686 + $0x40] sm:$0xff]
        %v696 = vld [vmem:[%s686 + $0x48] sm:$0xff]
        %v697 = vld [vmem:[%s686 + $0x50] sm:$0xff]
        %v698 = vld [vmem:[%s686 + $0x58] sm:$0xff]
        %v699 = vld [vmem:[%s686 + $0x60] sm:$0xff]
        %v700 = vld [vmem:[%s686 + $0x68] sm:$0xff]
        %v701 = vld [vmem:[%s686 + $0x70] sm:$0xff]
        %v702 = vld [vmem:[%s686 + $0x78] sm:$0xff]
        %vm703 = vcmask 523264
        %v705 = vsel %vm703, %v667, 0
        %v708 = vsel %vm703, %v668, 0
        %v711 = vsel %vm703, %v669, 0
        %713 = vmatprep.subr.mxu0 %v688
        %714 = vmatpush1.msra.mxu0 %v687
        %715 = vmatprep.subr.mxu0 %v690
        %716 = vmatpush1.msra.mxu0 %v689
        %717 = vmatprep.subr.mxu0 %v692
        %718 = vmatpush1.msra.mxu0 %v691
        %719 = vmatprep.subr.mxu0 %v694
        %720 = vmatpush1.msra.mxu0 %v693
        %721 = vmatprep.subr.mxu0 %v696
        %722 = vmatpush1.msra.mxu0 %v695
        %723 = vmatprep.subr.mxu0 %v698
        %724 = vmatpush1.msra.mxu0 %v697
        %725 = vmatprep.subr.mxu0 %v700
        %726 = vmatpush1.msra.mxu0 %v699
        %727 = vmatprep.subr.mxu0 %v702
        %728 = vmatpush1.msra.mxu0 %v701
        %729 = vmatprep.subr.mxu0 0.0
        %730 = vmatpush1.msra.mxu0 0.0
        %731 = vmatprep.subr.mxu0 0.0
        %732 = vmatpush1.msra.mxu0 0.0
        %733 = vmatprep.subr.mxu0 0.0
        %734 = vmatpush1.msra.mxu0 0.0
        %735 = vmatprep.subr.mxu0 0.0
        %736 = vmatpush1.msra.mxu0 0.0
        %737 = vmatprep.subr.mxu0 0.0
        %738 = vmatpush1.msra.mxu0 0.0
        %739 = vmatprep.subr.mxu0 0.0
        %740 = vmatpush1.msra.mxu0 0.0
        %741 = vmatprep.subr.mxu0 0.0
        %742 = vmatpush1.msra.mxu0 0.0
        %743 = vmatprep.subr.mxu0 0.0
        %744 = vmatpush1.msra.mxu0 0.0
        %745 = vmatprep.subr.mxu0 0.0
        %746 = vmatpush1.msra.mxu0 0.0
        %747 = vmatprep.subr.mxu0 0.0
        %748 = vmatpush1.msra.mxu0 0.0
        %749 = vmatprep.subr.mxu0 0.0
        %750 = vmatpush1.msra.mxu0 0.0
        %751 = vmatprep.subr.mxu0 0.0
        %752 = vmatpush1.msra.mxu0 0.0
        %753 = vmatprep.subr.mxu0 0.0
        %754 = vmatpush1.msra.mxu0 0.0
        %755 = vmatprep.subr.mxu0 0.0
        %756 = vmatpush1.msra.mxu0 0.0
        %757 = vmatprep.subr.mxu0 0.0
        %758 = vmatpush1.msra.mxu0 0.0
        %759 = vmatprep.subr.mxu0 0.0
        %760 = vmatpush1.msra.mxu0 0.0
        %761 = vmatprep.subr.mxu0 0.0
        %762 = vmatpush1.msra.mxu0 0.0
        %763 = vmatprep.subr.mxu0 0.0
        %764 = vmatpush1.msra.mxu0 0.0
        %765 = vmatprep.subr.mxu0 0.0
        %766 = vmatpush1.msra.mxu0 0.0
        %767 = vmatprep.subr.mxu0 0.0
        %768 = vmatpush1.msra.mxu0 0.0
        %769 = vmatprep.subr.mxu0 0.0
        %770 = vmatpush1.msra.mxu0 0.0
        %771 = vmatprep.subr.mxu0 0.0
        %772 = vmatpush1.msra.mxu0 0.0
        %773 = vmatprep.subr.mxu0 0.0
        %774 = vmatpush1.msra.mxu0 0.0
        %775 = vmatprep.subr.mxu0 0.0
        %776 = vmatpush1.msra.mxu0 0.0
        %777 = vmatprep.mubr.f32.mxu0 0.0
        %778 = vmatmul.mubr.f32.gmra.mrb[0].mxu0 %v705
        %v779 = vpop.f32.mrb[0].mxu0
        %v780 = vadd.f32 0.0, %v779
        %v781 = vpop.f32.mrb[0].mxu0
        %v782 = vadd.f32 0.0, %v781
        %783 = vmatprep.mubr.f32.mxu0 0.0
        %784 = vmatmul.mubr.f32.gmra.mrb[0].mxu0 %v708
        %v785 = vpop.f32.mrb[0].mxu0
        %v786 = vadd.f32 0.0, %v785
        %v787 = vpop.f32.mrb[0].mxu0
        %v788 = vadd.f32 0.0, %v787
        %789 = vmatprep.mubr.f32.mxu0 0.0
        %790 = vmatmul.mubr.f32.gmra.mrb[0].mxu0 %v711
        %v791 = vpop.f32.mrb[0].mxu0
        %v792 = vadd.f32 0.0, %v791
        %v793 = vpop.f32.mrb[0].mxu0
        %v794 = vadd.f32 0.0, %v793
        %795 = vdwg.mxu0
        %vm802 = vcmask 1046528
        %v803 = vrot.slane %v780, 1
        %v804 = vrot.slane %v786, 1
        %v805 = vsel %vm802, %v803, %v804
        %v806 = vrot.slane %v782, 1
        %v807 = vrot.slane %v788, 1
        %v808 = vsel %vm802, %v806, %v807
        %v809 = vrot.slane %v792, 1
        %v810 = vsel %vm802, %v804, %v809
        %v811 = vrot.slane %v794, 1
        %v812 = vsel %vm802, %v807, %v811
        %v821 = vsel %vm802, %v809, %v803
        %v822 = vsel %vm802, %v811, %v806
        %823 = vmatprep.subr.mxu0 %v671
        %824 = vmatpush1.msra.mxu0 %v670
        %825 = vmatprep.subr.mxu0 %v673
        %826 = vmatpush1.msra.mxu0 %v672
        %827 = vmatprep.subr.mxu0 %v675
        %828 = vmatpush1.msra.mxu0 %v674
        %829 = vmatprep.subr.mxu0 %v677
        %830 = vmatpush1.msra.mxu0 %v676
        %831 = vmatprep.subr.mxu0 %v679
        %832 = vmatpush1.msra.mxu0 %v678
        %833 = vmatprep.subr.mxu0 %v681
        %834 = vmatpush1.msra.mxu0 %v680
        %835 = vmatprep.subr.mxu0 %v683
        %836 = vmatpush1.msra.mxu0 %v682
        %837 = vmatprep.subr.mxu0 %v685
        %838 = vmatpush1.msra.mxu0 %v684
        %839 = vmatprep.subr.mxu0 0.0
        %840 = vmatpush1.msra.mxu0 0.0
        %841 = vmatprep.subr.mxu0 0.0
        %842 = vmatpush1.msra.mxu0 0.0
        %843 = vmatprep.subr.mxu0 0.0
        %844 = vmatpush1.msra.mxu0 0.0
        %845 = vmatprep.subr.mxu0 0.0
        %846 = vmatpush1.msra.mxu0 0.0
        %847 = vmatprep.subr.mxu0 0.0
        %848 = vmatpush1.msra.mxu0 0.0
        %849 = vmatprep.subr.mxu0 0.0
        %850 = vmatpush1.msra.mxu0 0.0
        %851 = vmatprep.subr.mxu0 0.0
        %852 = vmatpush1.msra.mxu0 0.0
        %853 = vmatprep.subr.mxu0 0.0
        %854 = vmatpush1.msra.mxu0 0.0
        %855 = vmatprep.subr.mxu0 0.0
        %856 = vmatpush1.msra.mxu0 0.0
        %857 = vmatprep.subr.mxu0 0.0
        %858 = vmatpush1.msra.mxu0 0.0
        %859 = vmatprep.subr.mxu0 0.0
        %860 = vmatpush1.msra.mxu0 0.0
        %861 = vmatprep.subr.mxu0 0.0
        %862 = vmatpush1.msra.mxu0 0.0
        %863 = vmatprep.subr.mxu0 0.0
        %864 = vmatpush1.msra.mxu0 0.0
        %865 = vmatprep.subr.mxu0 0.0
        %866 = vmatpush1.msra.mxu0 0.0
        %867 = vmatprep.subr.mxu0 0.0
        %868 = vmatpush1.msra.mxu0 0.0
        %869 = vmatprep.subr.mxu0 0.0
        %870 = vmatpush1.msra.mxu0 0.0
        %871 = vmatprep.subr.mxu0 0.0
        %872 = vmatpush1.msra.mxu0 0.0
        %873 = vmatprep.subr.mxu0 0.0
        %874 = vmatpush1.msra.mxu0 0.0
        %875 = vmatprep.subr.mxu0 0.0
        %876 = vmatpush1.msra.mxu0 0.0
        %877 = vmatprep.subr.mxu0 0.0
        %878 = vmatpush1.msra.mxu0 0.0
        %879 = vmatprep.subr.mxu0 0.0
        %880 = vmatpush1.msra.mxu0 0.0
        %881 = vmatprep.subr.mxu0 0.0
        %882 = vmatpush1.msra.mxu0 0.0
        %883 = vmatprep.subr.mxu0 0.0
        %884 = vmatpush1.msra.mxu0 0.0
        %885 = vmatprep.subr.mxu0 0.0
        %886 = vmatpush1.msra.mxu0 0.0
        %887 = vmatprep.mubr.f32.mxu0 0.0
        %888 = vmatmul.mubr.f32.gmra.mrb[0].mxu0 %v705
        %v889 = vpop.f32.mrb[0].mxu0
        %v890 = vadd.f32 %v805, %v889
        %v891 = vpop.f32.mrb[0].mxu0
        %v892 = vadd.f32 %v808, %v891
        %893 = vmatprep.mubr.f32.mxu0 0.0
        %894 = vmatmul.mubr.f32.gmra.mrb[0].mxu0 %v708
        %v895 = vpop.f32.mrb[0].mxu0
        %v896 = vadd.f32 %v810, %v895
        %v897 = vpop.f32.mrb[0].mxu0
        %v898 = vadd.f32 %v812, %v897
        %899 = vmatprep.mubr.f32.mxu0 0.0
        %900 = vmatmul.mubr.f32.gmra.mrb[0].mxu0 %v711
        %v901 = vpop.f32.mrb[0].mxu0
        %v902 = vadd.f32 %v821, %v901
        %v903 = vpop.f32.mrb[0].mxu0
        %v904 = vadd.f32 %v822, %v903
        %905 = vdwg.mxu0
        %s906 = scalar_lea.vmem [#allocation2], 256
        %v907 = vld [vmem:[%s906] sm:$0xff]
        %v908 = vld [vmem:[%s906 + $0x8] sm:$0xff]
        %v909 = vld [vmem:[%s906 + $0x10] sm:$0xff]
        %v910 = vld [vmem:[%s906 + $0x18] sm:$0xff]
        %v911 = vld [vmem:[%s906 + $0x20] sm:$0xff]
        %v912 = vld [vmem:[%s906 + $0x28] sm:$0xff]
        %v913 = vld [vmem:[%s906 + $0x30] sm:$0xff]
        %v914 = vld [vmem:[%s906 + $0x38] sm:$0xff]
        %v915 = vld [vmem:[%s906 + $0x40] sm:$0xff]
        %v916 = vld [vmem:[%s906 + $0x48] sm:$0xff]
        %v917 = vld [vmem:[%s906 + $0x50] sm:$0xff]
        %v918 = vld [vmem:[%s906 + $0x58] sm:$0xff]
        %v919 = vld [vmem:[%s906 + $0x60] sm:$0xff]
        %v920 = vld [vmem:[%s906 + $0x68] sm:$0xff]
        %v921 = vld [vmem:[%s906 + $0x70] sm:$0xff]
        %v922 = vld [vmem:[%s906 + $0x78] sm:$0xff]
        %923 = vmatprep.subr.mxu0 %v908
        %924 = vmatpush1.msra.mxu0 %v907
        %925 = vmatprep.subr.mxu0 %v910
        %926 = vmatpush1.msra.mxu0 %v909
        %927 = vmatprep.subr.mxu0 %v912
        %928 = vmatpush1.msra.mxu0 %v911
        %929 = vmatprep.subr.mxu0 %v914
        %930 = vmatpush1.msra.mxu0 %v913
        %931 = vmatprep.subr.mxu0 %v916
        %932 = vmatpush1.msra.mxu0 %v915
        %933 = vmatprep.subr.mxu0 %v918
        %934 = vmatpush1.msra.mxu0 %v917
        %935 = vmatprep.subr.mxu0 %v920
        %936 = vmatpush1.msra.mxu0 %v919
        %937 = vmatprep.subr.mxu0 %v922
        %938 = vmatpush1.msra.mxu0 %v921
        %939 = vmatprep.subr.mxu0 0.0
        %940 = vmatpush1.msra.mxu0 0.0
        %941 = vmatprep.subr.mxu0 0.0
        %942 = vmatpush1.msra.mxu0 0.0
        %943 = vmatprep.subr.mxu0 0.0
        %944 = vmatpush1.msra.mxu0 0.0
        %945 = vmatprep.subr.mxu0 0.0
        %946 = vmatpush1.msra.mxu0 0.0
        %947 = vmatprep.subr.mxu0 0.0
        %948 = vmatpush1.msra.mxu0 0.0
        %949 = vmatprep.subr.mxu0 0.0
        %950 = vmatpush1.msra.mxu0 0.0
        %951 = vmatprep.subr.mxu0 0.0
        %952 = vmatpush1.msra.mxu0 0.0
        %953 = vmatprep.subr.mxu0 0.0
        %954 = vmatpush1.msra.mxu0 0.0
        %955 = vmatprep.subr.mxu0 0.0
        %956 = vmatpush1.msra.mxu0 0.0
        %957 = vmatprep.subr.mxu0 0.0
        %958 = vmatpush1.msra.mxu0 0.0
        %959 = vmatprep.subr.mxu0 0.0
        %960 = vmatpush1.msra.mxu0 0.0
        %961 = vmatprep.subr.mxu0 0.0
        %962 = vmatpush1.msra.mxu0 0.0
        %963 = vmatprep.subr.mxu0 0.0
        %964 = vmatpush1.msra.mxu0 0.0
        %965 = vmatprep.subr.mxu0 0.0
        %966 = vmatpush1.msra.mxu0 0.0
        %967 = vmatprep.subr.mxu0 0.0
        %968 = vmatpush1.msra.mxu0 0.0
        %969 = vmatprep.subr.mxu0 0.0
        %970 = vmatpush1.msra.mxu0 0.0
        %971 = vmatprep.subr.mxu0 0.0
        %972 = vmatpush1.msra.mxu0 0.0
        %973 = vmatprep.subr.mxu0 0.0
        %974 = vmatpush1.msra.mxu0 0.0
        %975 = vmatprep.subr.mxu0 0.0
        %976 = vmatpush1.msra.mxu0 0.0
        %977 = vmatprep.subr.mxu0 0.0
        %978 = vmatpush1.msra.mxu0 0.0
        %979 = vmatprep.subr.mxu0 0.0
        %980 = vmatpush1.msra.mxu0 0.0
        %981 = vmatprep.subr.mxu0 0.0
        %982 = vmatpush1.msra.mxu0 0.0
        %983 = vmatprep.subr.mxu0 0.0
        %984 = vmatpush1.msra.mxu0 0.0
        %985 = vmatprep.subr.mxu0 0.0
        %986 = vmatpush1.msra.mxu0 0.0
        %987 = vmatprep.mubr.f32.mxu0 0.0
        %988 = vmatmul.mubr.f32.gmra.mrb[0].mxu0 %v705
        %v989 = vpop.f32.mrb[0].mxu0
        %v990 = vadd.f32 0.0, %v989
        %v991 = vpop.f32.mrb[0].mxu0
        %v992 = vadd.f32 0.0, %v991
        %993 = vmatprep.mubr.f32.mxu0 0.0
        %994 = vmatmul.mubr.f32.gmra.mrb[0].mxu0 %v708
        %v995 = vpop.f32.mrb[0].mxu0
        %v996 = vadd.f32 0.0, %v995
        %v997 = vpop.f32.mrb[0].mxu0
        %v998 = vadd.f32 0.0, %v997
        %999 = vmatprep.mubr.f32.mxu0 0.0
        %1000 = vmatmul.mubr.f32.gmra.mrb[0].mxu0 %v711
        %v1001 = vpop.f32.mrb[0].mxu0
        %v1002 = vadd.f32 0.0, %v1001
        %v1003 = vpop.f32.mrb[0].mxu0
        %v1004 = vadd.f32 0.0, %v1003
        %1005 = vdwg.mxu0
        %vm1012 = vcmask 1045504
        %v1013 = vrot.slane %v990, 2
        %v1014 = vrot.slane %v996, 2
        %v1015 = vsel %vm1012, %v1013, %v1014
        %v1016 = vrot.slane %v992, 2
        %v1017 = vrot.slane %v998, 2
        %v1018 = vsel %vm1012, %v1016, %v1017
        %v1019 = vrot.slane %v1002, 2
        %v1020 = vsel %vm1012, %v1014, %v1019
        %v1021 = vrot.slane %v1004, 2
        %v1022 = vsel %vm1012, %v1017, %v1021
        %v1031 = vsel %vm1012, %v1019, %v1013
        %v1032 = vsel %vm1012, %v1021, %v1016
        %v1033 = vadd.f32 %v890, %v1015
        %v1034 = vadd.f32 %v892, %v1018
        %v1035 = vadd.f32 %v896, %v1020
        %v1036 = vadd.f32 %v898, %v1022
        %v1037 = vadd.f32 %v902, %v1031
        %v1038 = vadd.f32 %v904, %v1032
        %s1039 = scalar_lea.vmem [#allocation2], 384
        %v1040 = vld [vmem:[%s1039] sm:$0xff]
        %v1041 = vld [vmem:[%s1039 + $0x8] sm:$0xff]
        %v1042 = vld [vmem:[%s1039 + $0x10] sm:$0xff]
        %v1043 = vld [vmem:[%s1039 + $0x18] sm:$0xff]
        %v1044 = vld [vmem:[%s1039 + $0x20] sm:$0xff]
        %v1045 = vld [vmem:[%s1039 + $0x28] sm:$0xff]
        %v1046 = vld [vmem:[%s1039 + $0x30] sm:$0xff]
        %v1047 = vld [vmem:[%s1039 + $0x38] sm:$0xff]
        %v1048 = vld [vmem:[%s1039 + $0x40] sm:$0xff]
        %v1049 = vld [vmem:[%s1039 + $0x48] sm:$0xff]
        %v1050 = vld [vmem:[%s1039 + $0x50] sm:$0xff]
        %v1051 = vld [vmem:[%s1039 + $0x58] sm:$0xff]
        %v1052 = vld [vmem:[%s1039 + $0x60] sm:$0xff]
        %v1053 = vld [vmem:[%s1039 + $0x68] sm:$0xff]
        %v1054 = vld [vmem:[%s1039 + $0x70] sm:$0xff]
        %v1055 = vld [vmem:[%s1039 + $0x78] sm:$0xff]
        %1056 = vmatprep.subr.mxu0 %v1041
        %1057 = vmatpush1.msra.mxu0 %v1040
        %1058 = vmatprep.subr.mxu0 %v1043
        %1059 = vmatpush1.msra.mxu0 %v1042
        %1060 = vmatprep.subr.mxu0 %v1045
        %1061 = vmatpush1.msra.mxu0 %v1044
        %1062 = vmatprep.subr.mxu0 %v1047
        %1063 = vmatpush1.msra.mxu0 %v1046
        %1064 = vmatprep.subr.mxu0 %v1049
        %1065 = vmatpush1.msra.mxu0 %v1048
        %1066 = vmatprep.subr.mxu0 %v1051
        %1067 = vmatpush1.msra.mxu0 %v1050
        %1068 = vmatprep.subr.mxu0 %v1053
        %1069 = vmatpush1.msra.mxu0 %v1052
        %1070 = vmatprep.subr.mxu0 %v1055
        %1071 = vmatpush1.msra.mxu0 %v1054
        %1072 = vmatprep.subr.mxu0 0.0
        %1073 = vmatpush1.msra.mxu0 0.0
        %1074 = vmatprep.subr.mxu0 0.0
        %1075 = vmatpush1.msra.mxu0 0.0
        %1076 = vmatprep.subr.mxu0 0.0
        %1077 = vmatpush1.msra.mxu0 0.0
        %1078 = vmatprep.subr.mxu0 0.0
        %1079 = vmatpush1.msra.mxu0 0.0
        %1080 = vmatprep.subr.mxu0 0.0
        %1081 = vmatpush1.msra.mxu0 0.0
        %1082 = vmatprep.subr.mxu0 0.0
        %1083 = vmatpush1.msra.mxu0 0.0
        %1084 = vmatprep.subr.mxu0 0.0
        %1085 = vmatpush1.msra.mxu0 0.0
        %1086 = vmatprep.subr.mxu0 0.0
        %1087 = vmatpush1.msra.mxu0 0.0
        %1088 = vmatprep.subr.mxu0 0.0
        %1089 = vmatpush1.msra.mxu0 0.0
        %1090 = vmatprep.subr.mxu0 0.0
        %1091 = vmatpush1.msra.mxu0 0.0
        %1092 = vmatprep.subr.mxu0 0.0
        %1093 = vmatpush1.msra.mxu0 0.0
        %1094 = vmatprep.subr.mxu0 0.0
        %1095 = vmatpush1.msra.mxu0 0.0
        %1096 = vmatprep.subr.mxu0 0.0
        %1097 = vmatpush1.msra.mxu0 0.0
        %1098 = vmatprep.subr.mxu0 0.0
        %1099 = vmatpush1.msra.mxu0 0.0
        %1100 = vmatprep.subr.mxu0 0.0
        %1101 = vmatpush1.msra.mxu0 0.0
        %1102 = vmatprep.subr.mxu0 0.0
        %1103 = vmatpush1.msra.mxu0 0.0
        %1104 = vmatprep.subr.mxu0 0.0
        %1105 = vmatpush1.msra.mxu0 0.0
        %1106 = vmatprep.subr.mxu0 0.0
        %1107 = vmatpush1.msra.mxu0 0.0
        %1108 = vmatprep.subr.mxu0 0.0
        %1109 = vmatpush1.msra.mxu0 0.0
        %1110 = vmatprep.subr.mxu0 0.0
        %1111 = vmatpush1.msra.mxu0 0.0
        %1112 = vmatprep.subr.mxu0 0.0
        %1113 = vmatpush1.msra.mxu0 0.0
        %1114 = vmatprep.subr.mxu0 0.0
        %1115 = vmatpush1.msra.mxu0 0.0
        %1116 = vmatprep.subr.mxu0 0.0
        %1117 = vmatpush1.msra.mxu0 0.0
        %1118 = vmatprep.subr.mxu0 0.0
        %1119 = vmatpush1.msra.mxu0 0.0
        %1120 = vmatprep.mubr.f32.mxu0 0.0
        %1121 = vmatmul.mubr.f32.gmra.mrb[0].mxu0 %v705
        %v1122 = vpop.f32.mrb[0].mxu0
        %v1123 = vadd.f32 0.0, %v1122
        %v1124 = vpop.f32.mrb[0].mxu0
        %v1125 = vadd.f32 0.0, %v1124
        %1126 = vmatprep.mubr.f32.mxu0 0.0
        %1127 = vmatmul.mubr.f32.gmra.mrb[0].mxu0 %v708
        %v1128 = vpop.f32.mrb[0].mxu0
        %v1129 = vadd.f32 0.0, %v1128
        %v1130 = vpop.f32.mrb[0].mxu0
        %v1131 = vadd.f32 0.0, %v1130
        %1132 = vmatprep.mubr.f32.mxu0 0.0
        %1133 = vmatmul.mubr.f32.gmra.mrb[0].mxu0 %v711
        %v1134 = vpop.f32.mrb[0].mxu0
        %v1135 = vadd.f32 0.0, %v1134
        %v1136 = vpop.f32.mrb[0].mxu0
        %v1137 = vadd.f32 0.0, %v1136
        %1138 = vdwg.mxu0
        %vm1145 = vcmask 1044480
        %v1146 = vrot.slane %v1123, 3
        %v1147 = vrot.slane %v1129, 3
        %v1148 = vsel %vm1145, %v1146, %v1147
        %v1149 = vrot.slane %v1125, 3
        %v1150 = vrot.slane %v1131, 3
        %v1151 = vsel %vm1145, %v1149, %v1150
        %v1152 = vrot.slane %v1135, 3
        %v1153 = vsel %vm1145, %v1147, %v1152
        %v1154 = vrot.slane %v1137, 3
        %v1155 = vsel %vm1145, %v1150, %v1154
        %v1164 = vsel %vm1145, %v1152, %v1146
        %v1165 = vsel %vm1145, %v1154, %v1149
        %v1166 = vadd.f32 %v1033, %v1148
        %v1167 = vadd.f32 %v1034, %v1151
        %v1168 = vadd.f32 %v1035, %v1153
        %v1169 = vadd.f32 %v1036, %v1155
        %v1170 = vadd.f32 %v1037, %v1164
        %v1171 = vadd.f32 %v1038, %v1165
        %v1172 = vmax.f32 %v1166, %v1167
        %v1173 = vmax.f32 %v1168, %v1169
        %v1174 = vmax.f32 %v1170, %v1171
        %v1178 = vrot.slane %v1172, 1
        %v1179 = vrot.slane %v1173, 1
        %v1180 = vsel %vm802, %v1178, %v1179
        %v1181 = vrot.slane %v1174, 1
        %v1182 = vsel %vm802, %v1179, %v1181
        %v1187 = vsel %vm802, %v1181, %v1178
        %v1188 = vmax.f32 %v1172, %v1180
        %v1189 = vmax.f32 %v1173, %v1182
        %v1190 = vmax.f32 %v1174, %v1187
        %v1191 = vld [vmem:[#allocation5] sm:$0x1]
        %v1193 = vlaneseq
        %v1194 = vshrl.u32 %v1193, 7
        %v1195 = vsub.s32 0, %v1194
        %v1196 = vrot.slane %v1191, %v1195
        %v1198 = vadd.f32 %v1188, %v1196
        %v1199 = vadd.f32 %v1189, %v1196
        %v1200 = vadd.f32 %v1190, %v1196
        %vm1201 = vcmp.ge.f32.partialorder %v1198, 0.0
        %vm1202 = vcmp.ge.f32.partialorder %v1199, 0.0
        %vm1203 = vcmp.ge.f32.partialorder %v1200, 0.0
        %v1204 = vmul.f32 %v1198, 0.01
        %v1205 = vmul.f32 %v1199, 0.01
        %v1206 = vmul.f32 %v1200, 0.01
        %v1207 = vsel %vm1201, %v1198, %v1204
        %v1208 = vsel %vm1202, %v1199, %v1205
        %v1209 = vsel %vm1203, %v1200, %v1206
        %v1210 = vld [vmem:[#allocation7] sm:$0xff]
        %v1211 = vld [vmem:[#allocation7 + $0x8] sm:$0xff]
        %vm1212 = vcmask 195584
        %v1214 = vsel %vm1212, %v1210, 0
        %v1217 = vsel %vm1212, %v1211, 0
        %1219 = vmatprep.subr.mxu0 0.0
        %1220 = vmatpush1.msra.mxu0 %v1207
        %1221 = vmatprep.subr.mxu0 0.0
        %1222 = vmatpush1.msra.mxu0 %v1208
        %1223 = vmatprep.subr.mxu0 0.0
        %1224 = vmatpush1.msra.mxu0 %v1209
        %1225 = vmatprep.subr.mxu0 0.0
        %1226 = vmatpush1.msra.mxu0 0.0
        %1227 = vmatprep.subr.mxu0 0.0
        %1228 = vmatpush1.msra.mxu0 0.0
        %1229 = vmatprep.subr.mxu0 0.0
        %1230 = vmatpush1.msra.mxu0 0.0
        %1231 = vmatprep.subr.mxu0 0.0
        %1232 = vmatpush1.msra.mxu0 0.0
        %1233 = vmatprep.subr.mxu0 0.0
        %1234 = vmatpush1.msra.mxu0 0.0
        %1235 = vmatprep.subr.mxu0 0.0
        %1236 = vmatpush1.msra.mxu0 0.0
        %1237 = vmatprep.subr.mxu0 0.0
        %1238 = vmatpush1.msra.mxu0 0.0
        %1239 = vmatprep.subr.mxu0 0.0
        %1240 = vmatpush1.msra.mxu0 0.0
        %1241 = vmatprep.subr.mxu0 0.0
        %1242 = vmatpush1.msra.mxu0 0.0
        %1243 = vmatprep.subr.mxu0 0.0
        %1244 = vmatpush1.msra.mxu0 0.0
        %1245 = vmatprep.subr.mxu0 0.0
        %1246 = vmatpush1.msra.mxu0 0.0
        %1247 = vmatprep.subr.mxu0 0.0
        %1248 = vmatpush1.msra.mxu0 0.0
        %1249 = vmatprep.subr.mxu0 0.0
        %1250 = vmatpush1.msra.mxu0 0.0
        %1251 = vmatprep.subr.mxu0 0.0
        %1252 = vmatpush1.msra.mxu0 0.0
        %1253 = vmatprep.subr.mxu0 0.0
        %1254 = vmatpush1.msra.mxu0 0.0
        %1255 = vmatprep.subr.mxu0 0.0
        %1256 = vmatpush1.msra.mxu0 0.0
        %1257 = vmatprep.subr.mxu0 0.0
        %1258 = vmatpush1.msra.mxu0 0.0
        %1259 = vmatprep.subr.mxu0 0.0
        %1260 = vmatpush1.msra.mxu0 0.0
        %1261 = vmatprep.subr.mxu0 0.0
        %1262 = vmatpush1.msra.mxu0 0.0
        %1263 = vmatprep.subr.mxu0 0.0
        %1264 = vmatpush1.msra.mxu0 0.0
        %1265 = vmatprep.subr.mxu0 0.0
        %1266 = vmatpush1.msra.mxu0 0.0
        %1267 = vmatprep.subr.mxu0 0.0
        %1268 = vmatpush1.msra.mxu0 0.0
        %1269 = vmatprep.subr.mxu0 0.0
        %1270 = vmatpush1.msra.mxu0 0.0
        %1271 = vmatprep.subr.mxu0 0.0
        %1272 = vmatpush1.msra.mxu0 0.0
        %1273 = vmatprep.subr.mxu0 0.0
        %1274 = vmatpush1.msra.mxu0 0.0
        %1275 = vmatprep.subr.mxu0 0.0
        %1276 = vmatpush1.msra.mxu0 0.0
        %1277 = vmatprep.subr.mxu0 0.0
        %1278 = vmatpush1.msra.mxu0 0.0
        %1279 = vmatprep.subr.mxu0 0.0
        %1280 = vmatpush1.msra.mxu0 0.0
        %1281 = vmatprep.subr.mxu0 0.0
        %1282 = vmatpush1.msra.mxu0 0.0
        %1283 = vmatprep.mubr.f32.mxu0 0.0
        %1284 = vmatmul.mubr.f32.gmra.mrb[0].mxu0 %v1214
        %v1285 = vpop.f32.mrb[0].mxu0
        %v1286 = vadd.f32 0.0, %v1285
        %v1287 = vpop.f32.mrb[0].mxu0
        %1288 = vmatprep.mubr.f32.mxu0 0.0
        %1289 = vmatmul.mubr.f32.gmra.mrb[0].mxu0 %v1217
        %v1290 = vpop.f32.mrb[0].mxu0
        %v1291 = vadd.f32 0.0, %v1290
        %v1292 = vpop.f32.mrb[0].mxu0
        %1293 = vdwg.mxu0
        %v1294 = vld [vmem:[#allocation8] sm:$0xff]
        %v1295 = vld [vmem:[#allocation8 + $0x8] sm:$0xff]
        %v1296 = vld [vmem:[#allocation8 + $0x10] sm:$0xff]
        %v1297 = vld [vmem:[#allocation8 + $0x18] sm:$0xff]
        %v1298 = vld [vmem:[#allocation8 + $0x20] sm:$0xff]
        %v1299 = vld [vmem:[#allocation8 + $0x28] sm:$0xff]
        %v1300 = vld [vmem:[#allocation8 + $0x30] sm:$0xff]
        %v1301 = vld [vmem:[#allocation8 + $0x38] sm:$0xff]
        %v1302 = vld [vmem:[#allocation8 + $0x40] sm:$0xff]
        %v1303 = vld [vmem:[#allocation8 + $0x48] sm:$0xff]
        %v1304 = vld [vmem:[#allocation8 + $0x50] sm:$0xff]
        %v1305 = vld [vmem:[#allocation8 + $0x58] sm:$0xff]
        %v1306 = vld [vmem:[#allocation8 + $0x60] sm:$0xff]
        %v1307 = vld [vmem:[#allocation8 + $0x68] sm:$0xff]
        %v1308 = vld [vmem:[#allocation8 + $0x70] sm:$0xff]
        %v1309 = vld [vmem:[#allocation8 + $0x78] sm:$0xff]
        %v1310 = vld [vmem:[#allocation8 + $0x80] sm:$0xff]
        %v1311 = vld [vmem:[#allocation8 + $0x88] sm:$0xff]
        %v1312 = vld [vmem:[#allocation8 + $0x90] sm:$0xff]
        %v1313 = vld [vmem:[#allocation8 + $0x98] sm:$0xff]
        %v1314 = vld [vmem:[#allocation8 + $0xa0] sm:$0xff]
        %v1315 = vld [vmem:[#allocation8 + $0xa8] sm:$0xff]
        %v1316 = vld [vmem:[#allocation8 + $0xb0] sm:$0xff]
        %v1317 = vld [vmem:[#allocation8 + $0xb8] sm:$0xff]
        %v1318 = vld [vmem:[#allocation8 + $0xc0] sm:$0xff]
        %v1319 = vld [vmem:[#allocation8 + $0xc8] sm:$0xff]
        %v1320 = vld [vmem:[#allocation8 + $0xd0] sm:$0xff]
        %v1321 = vld [vmem:[#allocation8 + $0xd8] sm:$0xff]
        %v1322 = vld [vmem:[#allocation8 + $0xe0] sm:$0xff]
        %v1323 = vld [vmem:[#allocation8 + $0xe8] sm:$0xff]
        %v1324 = vld [vmem:[#allocation8 + $0xf0] sm:$0xff]
        %v1325 = vld [vmem:[#allocation8 + $0xf8] sm:$0xff]
        %s1326 = scalar_lea.vmem [#allocation8], 256
        %v1327 = vld [vmem:[%s1326] sm:$0xff]
        %v1328 = vld [vmem:[%s1326 + $0x8] sm:$0xff]
        %v1329 = vld [vmem:[%s1326 + $0x10] sm:$0xff]
        %v1330 = vld [vmem:[%s1326 + $0x18] sm:$0xff]
        %v1331 = vld [vmem:[%s1326 + $0x20] sm:$0xff]
        %v1332 = vld [vmem:[%s1326 + $0x28] sm:$0xff]
        %v1333 = vld [vmem:[%s1326 + $0x30] sm:$0xff]
        %v1334 = vld [vmem:[%s1326 + $0x38] sm:$0xff]
        %v1335 = vld [vmem:[%s1326 + $0x40] sm:$0xff]
        %v1336 = vld [vmem:[%s1326 + $0x48] sm:$0xff]
        %v1337 = vld [vmem:[%s1326 + $0x50] sm:$0xff]
        %v1338 = vld [vmem:[%s1326 + $0x58] sm:$0xff]
        %v1339 = vld [vmem:[%s1326 + $0x60] sm:$0xff]
        %v1340 = vld [vmem:[%s1326 + $0x68] sm:$0xff]
        %v1341 = vld [vmem:[%s1326 + $0x70] sm:$0xff]
        %v1342 = vld [vmem:[%s1326 + $0x78] sm:$0xff]
        %v1343 = vld [vmem:[%s1326 + $0x80] sm:$0xff]
        %v1344 = vld [vmem:[%s1326 + $0x88] sm:$0xff]
        %v1345 = vld [vmem:[%s1326 + $0x90] sm:$0xff]
        %v1346 = vld [vmem:[%s1326 + $0x98] sm:$0xff]
        %v1347 = vld [vmem:[%s1326 + $0xa0] sm:$0xff]
        %v1348 = vld [vmem:[%s1326 + $0xa8] sm:$0xff]
        %v1349 = vld [vmem:[%s1326 + $0xb0] sm:$0xff]
        %v1350 = vld [vmem:[%s1326 + $0xb8] sm:$0xff]
        %v1351 = vld [vmem:[%s1326 + $0xc0] sm:$0xff]
        %v1352 = vld [vmem:[%s1326 + $0xc8] sm:$0xff]
        %v1353 = vld [vmem:[%s1326 + $0xd0] sm:$0xff]
        %v1354 = vld [vmem:[%s1326 + $0xd8] sm:$0xff]
        %v1355 = vld [vmem:[%s1326 + $0xe0] sm:$0xff]
        %v1356 = vld [vmem:[%s1326 + $0xe8] sm:$0xff]
        %v1357 = vld [vmem:[%s1326 + $0xf0] sm:$0xff]
        %v1358 = vld [vmem:[%s1326 + $0xf8] sm:$0xff]
        %1359 = vmatprep.subr.mxu0 %v1328
        %1360 = vmatpush1.msra.mxu0 %v1327
        %1361 = vmatprep.subr.mxu0 %v1330
        %1362 = vmatpush1.msra.mxu0 %v1329
        %1363 = vmatprep.subr.mxu0 %v1332
        %1364 = vmatpush1.msra.mxu0 %v1331
        %1365 = vmatprep.subr.mxu0 %v1334
        %1366 = vmatpush1.msra.mxu0 %v1333
        %1367 = vmatprep.subr.mxu0 %v1336
        %1368 = vmatpush1.msra.mxu0 %v1335
        %1369 = vmatprep.subr.mxu0 %v1338
        %1370 = vmatpush1.msra.mxu0 %v1337
        %1371 = vmatprep.subr.mxu0 %v1340
        %1372 = vmatpush1.msra.mxu0 %v1339
        %1373 = vmatprep.subr.mxu0 %v1342
        %1374 = vmatpush1.msra.mxu0 %v1341
        %1375 = vmatprep.subr.mxu0 %v1344
        %1376 = vmatpush1.msra.mxu0 %v1343
        %1377 = vmatprep.subr.mxu0 %v1346
        %1378 = vmatpush1.msra.mxu0 %v1345
        %1379 = vmatprep.subr.mxu0 %v1348
        %1380 = vmatpush1.msra.mxu0 %v1347
        %1381 = vmatprep.subr.mxu0 %v1350
        %1382 = vmatpush1.msra.mxu0 %v1349
        %1383 = vmatprep.subr.mxu0 %v1352
        %1384 = vmatpush1.msra.mxu0 %v1351
        %1385 = vmatprep.subr.mxu0 %v1354
        %1386 = vmatpush1.msra.mxu0 %v1353
        %1387 = vmatprep.subr.mxu0 %v1356
        %1388 = vmatpush1.msra.mxu0 %v1355
        %1389 = vmatprep.subr.mxu0 %v1358
        %1390 = vmatpush1.msra.mxu0 %v1357
        %1391 = vmatprep.subr.mxu0 0.0
        %1392 = vmatpush1.msra.mxu0 0.0
        %1393 = vmatprep.subr.mxu0 0.0
        %1394 = vmatpush1.msra.mxu0 0.0
        %1395 = vmatprep.subr.mxu0 0.0
        %1396 = vmatpush1.msra.mxu0 0.0
        %1397 = vmatprep.subr.mxu0 0.0
        %1398 = vmatpush1.msra.mxu0 0.0
        %1399 = vmatprep.subr.mxu0 0.0
        %1400 = vmatpush1.msra.mxu0 0.0
        %1401 = vmatprep.subr.mxu0 0.0
        %1402 = vmatpush1.msra.mxu0 0.0
        %1403 = vmatprep.subr.mxu0 0.0
        %1404 = vmatpush1.msra.mxu0 0.0
        %1405 = vmatprep.subr.mxu0 0.0
        %1406 = vmatpush1.msra.mxu0 0.0
        %1407 = vmatprep.subr.mxu0 0.0
        %1408 = vmatpush1.msra.mxu0 0.0
        %1409 = vmatprep.subr.mxu0 0.0
        %1410 = vmatpush1.msra.mxu0 0.0
        %1411 = vmatprep.subr.mxu0 0.0
        %1412 = vmatpush1.msra.mxu0 0.0
        %1413 = vmatprep.subr.mxu0 0.0
        %1414 = vmatpush1.msra.mxu0 0.0
        %1415 = vmatprep.subr.mxu0 0.0
        %1416 = vmatpush1.msra.mxu0 0.0
        %1417 = vmatprep.subr.mxu0 0.0
        %1418 = vmatpush1.msra.mxu0 0.0
        %1419 = vmatprep.subr.mxu0 0.0
        %1420 = vmatpush1.msra.mxu0 0.0
        %1421 = vmatprep.subr.mxu0 0.0
        %1422 = vmatpush1.msra.mxu0 0.0
        %1423 = vmatprep.mubr.f32.mxu0 0.0
        %1424 = vmatmul.mubr.f32.gmra.mrb[0].mxu0 %v1286
        %v1425 = vpop.f32.mrb[0].mxu0
        %v1426 = vadd.f32 0.0, %v1425
        %v1427 = vpop.f32.mrb[0].mxu0
        %v1428 = vadd.f32 0.0, %v1427
        %1429 = vmatprep.mubr.f32.mxu0 0.0
        %1430 = vmatmul.mubr.f32.gmra.mrb[0].mxu0 %v1291
        %v1431 = vpop.f32.mrb[0].mxu0
        %v1432 = vadd.f32 0.0, %v1431
        %v1433 = vpop.f32.mrb[0].mxu0
        %v1434 = vadd.f32 0.0, %v1433
        %1435 = vdwg.mxu0
        %v1440 = vrot.slane %v1426, 1
        %v1441 = vrot.slane %v1432, 1
        %v1442 = vsel %vm802, %v1440, %v1441
        %v1443 = vrot.slane %v1428, 1
        %v1444 = vrot.slane %v1434, 1
        %v1445 = vsel %vm802, %v1443, %v1444
        %v1452 = vsel %vm802, %v1441, %v1440
        %v1453 = vsel %vm802, %v1444, %v1443
        %1454 = vmatprep.subr.mxu0 %v1295
        %1455 = vmatpush1.msra.mxu0 %v1294
        %1456 = vmatprep.subr.mxu0 %v1297
        %1457 = vmatpush1.msra.mxu0 %v1296
        %1458 = vmatprep.subr.mxu0 %v1299
        %1459 = vmatpush1.msra.mxu0 %v1298
        %1460 = vmatprep.subr.mxu0 %v1301
        %1461 = vmatpush1.msra.mxu0 %v1300
        %1462 = vmatprep.subr.mxu0 %v1303
        %1463 = vmatpush1.msra.mxu0 %v1302
        %1464 = vmatprep.subr.mxu0 %v1305
        %1465 = vmatpush1.msra.mxu0 %v1304
        %1466 = vmatprep.subr.mxu0 %v1307
        %1467 = vmatpush1.msra.mxu0 %v1306
        %1468 = vmatprep.subr.mxu0 %v1309
        %1469 = vmatpush1.msra.mxu0 %v1308
        %1470 = vmatprep.subr.mxu0 %v1311
        %1471 = vmatpush1.msra.mxu0 %v1310
        %1472 = vmatprep.subr.mxu0 %v1313
        %1473 = vmatpush1.msra.mxu0 %v1312
        %1474 = vmatprep.subr.mxu0 %v1315
        %1475 = vmatpush1.msra.mxu0 %v1314
        %1476 = vmatprep.subr.mxu0 %v1317
        %1477 = vmatpush1.msra.mxu0 %v1316
        %1478 = vmatprep.subr.mxu0 %v1319
        %1479 = vmatpush1.msra.mxu0 %v1318
        %1480 = vmatprep.subr.mxu0 %v1321
        %1481 = vmatpush1.msra.mxu0 %v1320
        %1482 = vmatprep.subr.mxu0 %v1323
        %1483 = vmatpush1.msra.mxu0 %v1322
        %1484 = vmatprep.subr.mxu0 %v1325
        %1485 = vmatpush1.msra.mxu0 %v1324
        %1486 = vmatprep.subr.mxu0 0.0
        %1487 = vmatpush1.msra.mxu0 0.0
        %1488 = vmatprep.subr.mxu0 0.0
        %1489 = vmatpush1.msra.mxu0 0.0
        %1490 = vmatprep.subr.mxu0 0.0
        %1491 = vmatpush1.msra.mxu0 0.0
        %1492 = vmatprep.subr.mxu0 0.0
        %1493 = vmatpush1.msra.mxu0 0.0
        %1494 = vmatprep.subr.mxu0 0.0
        %1495 = vmatpush1.msra.mxu0 0.0
        %1496 = vmatprep.subr.mxu0 0.0
        %1497 = vmatpush1.msra.mxu0 0.0
        %1498 = vmatprep.subr.mxu0 0.0
        %1499 = vmatpush1.msra.mxu0 0.0
        %1500 = vmatprep.subr.mxu0 0.0
        %1501 = vmatpush1.msra.mxu0 0.0
        %1502 = vmatprep.subr.mxu0 0.0
        %1503 = vmatpush1.msra.mxu0 0.0
        %1504 = vmatprep.subr.mxu0 0.0
        %1505 = vmatpush1.msra.mxu0 0.0
        %1506 = vmatprep.subr.mxu0 0.0
        %1507 = vmatpush1.msra.mxu0 0.0
        %1508 = vmatprep.subr.mxu0 0.0
        %1509 = vmatpush1.msra.mxu0 0.0
        %1510 = vmatprep.subr.mxu0 0.0
        %1511 = vmatpush1.msra.mxu0 0.0
        %1512 = vmatprep.subr.mxu0 0.0
        %1513 = vmatpush1.msra.mxu0 0.0
        %1514 = vmatprep.subr.mxu0 0.0
        %1515 = vmatpush1.msra.mxu0 0.0
        %1516 = vmatprep.subr.mxu0 0.0
        %1517 = vmatpush1.msra.mxu0 0.0
        %1518 = vmatprep.mubr.f32.mxu0 0.0
        %1519 = vmatmul.mubr.f32.gmra.mrb[0].mxu0 %v1286
        %v1520 = vpop.f32.mrb[0].mxu0
        %v1521 = vadd.f32 %v1442, %v1520
        %v1522 = vpop.f32.mrb[0].mxu0
        %v1523 = vadd.f32 %v1445, %v1522
        %1524 = vmatprep.mubr.f32.mxu0 0.0
        %1525 = vmatmul.mubr.f32.gmra.mrb[0].mxu0 %v1291
        %v1526 = vpop.f32.mrb[0].mxu0
        %v1527 = vadd.f32 %v1452, %v1526
        %v1528 = vpop.f32.mrb[0].mxu0
        %v1529 = vadd.f32 %v1453, %v1528
        %1530 = vdwg.mxu0
        %s1531 = scalar_lea.vmem [#allocation8], 512
        %v1532 = vld [vmem:[%s1531] sm:$0xff]
        %v1533 = vld [vmem:[%s1531 + $0x8] sm:$0xff]
        %v1534 = vld [vmem:[%s1531 + $0x10] sm:$0xff]
        %v1535 = vld [vmem:[%s1531 + $0x18] sm:$0xff]
        %v1536 = vld [vmem:[%s1531 + $0x20] sm:$0xff]
        %v1537 = vld [vmem:[%s1531 + $0x28] sm:$0xff]
        %v1538 = vld [vmem:[%s1531 + $0x30] sm:$0xff]
        %v1539 = vld [vmem:[%s1531 + $0x38] sm:$0xff]
        %v1540 = vld [vmem:[%s1531 + $0x40] sm:$0xff]
        %v1541 = vld [vmem:[%s1531 + $0x48] sm:$0xff]
        %v1542 = vld [vmem:[%s1531 + $0x50] sm:$0xff]
        %v1543 = vld [vmem:[%s1531 + $0x58] sm:$0xff]
        %v1544 = vld [vmem:[%s1531 + $0x60] sm:$0xff]
        %v1545 = vld [vmem:[%s1531 + $0x68] sm:$0xff]
        %v1546 = vld [vmem:[%s1531 + $0x70] sm:$0xff]
        %v1547 = vld [vmem:[%s1531 + $0x78] sm:$0xff]
        %v1548 = vld [vmem:[%s1531 + $0x80] sm:$0xff]
        %v1549 = vld [vmem:[%s1531 + $0x88] sm:$0xff]
        %v1550 = vld [vmem:[%s1531 + $0x90] sm:$0xff]
        %v1551 = vld [vmem:[%s1531 + $0x98] sm:$0xff]
        %v1552 = vld [vmem:[%s1531 + $0xa0] sm:$0xff]
        %v1553 = vld [vmem:[%s1531 + $0xa8] sm:$0xff]
        %v1554 = vld [vmem:[%s1531 + $0xb0] sm:$0xff]
        %v1555 = vld [vmem:[%s1531 + $0xb8] sm:$0xff]
        %v1556 = vld [vmem:[%s1531 + $0xc0] sm:$0xff]
        %v1557 = vld [vmem:[%s1531 + $0xc8] sm:$0xff]
        %v1558 = vld [vmem:[%s1531 + $0xd0] sm:$0xff]
        %v1559 = vld [vmem:[%s1531 + $0xd8] sm:$0xff]
        %v1560 = vld [vmem:[%s1531 + $0xe0] sm:$0xff]
        %v1561 = vld [vmem:[%s1531 + $0xe8] sm:$0xff]
        %v1562 = vld [vmem:[%s1531 + $0xf0] sm:$0xff]
        %v1563 = vld [vmem:[%s1531 + $0xf8] sm:$0xff]
        %1564 = vmatprep.subr.mxu0 %v1533
        %1565 = vmatpush1.msra.mxu0 %v1532
        %1566 = vmatprep.subr.mxu0 %v1535
        %1567 = vmatpush1.msra.mxu0 %v1534
        %1568 = vmatprep.subr.mxu0 %v1537
        %1569 = vmatpush1.msra.mxu0 %v1536
        %1570 = vmatprep.subr.mxu0 %v1539
        %1571 = vmatpush1.msra.mxu0 %v1538
        %1572 = vmatprep.subr.mxu0 %v1541
        %1573 = vmatpush1.msra.mxu0 %v1540
        %1574 = vmatprep.subr.mxu0 %v1543
        %1575 = vmatpush1.msra.mxu0 %v1542
        %1576 = vmatprep.subr.mxu0 %v1545
        %1577 = vmatpush1.msra.mxu0 %v1544
        %1578 = vmatprep.subr.mxu0 %v1547
        %1579 = vmatpush1.msra.mxu0 %v1546
        %1580 = vmatprep.subr.mxu0 %v1549
        %1581 = vmatpush1.msra.mxu0 %v1548
        %1582 = vmatprep.subr.mxu0 %v1551
        %1583 = vmatpush1.msra.mxu0 %v1550
        %1584 = vmatprep.subr.mxu0 %v1553
        %1585 = vmatpush1.msra.mxu0 %v1552
        %1586 = vmatprep.subr.mxu0 %v1555
        %1587 = vmatpush1.msra.mxu0 %v1554
        %1588 = vmatprep.subr.mxu0 %v1557
        %1589 = vmatpush1.msra.mxu0 %v1556
        %1590 = vmatprep.subr.mxu0 %v1559
        %1591 = vmatpush1.msra.mxu0 %v1558
        %1592 = vmatprep.subr.mxu0 %v1561
        %1593 = vmatpush1.msra.mxu0 %v1560
        %1594 = vmatprep.subr.mxu0 %v1563
        %1595 = vmatpush1.msra.mxu0 %v1562
        %1596 = vmatprep.subr.mxu0 0.0
        %1597 = vmatpush1.msra.mxu0 0.0
        %1598 = vmatprep.subr.mxu0 0.0
        %1599 = vmatpush1.msra.mxu0 0.0
        %1600 = vmatprep.subr.mxu0 0.0
        %1601 = vmatpush1.msra.mxu0 0.0
        %1602 = vmatprep.subr.mxu0 0.0
        %1603 = vmatpush1.msra.mxu0 0.0
        %1604 = vmatprep.subr.mxu0 0.0
        %1605 = vmatpush1.msra.mxu0 0.0
        %1606 = vmatprep.subr.mxu0 0.0
        %1607 = vmatpush1.msra.mxu0 0.0
        %1608 = vmatprep.subr.mxu0 0.0
        %1609 = vmatpush1.msra.mxu0 0.0
        %1610 = vmatprep.subr.mxu0 0.0
        %1611 = vmatpush1.msra.mxu0 0.0
        %1612 = vmatprep.subr.mxu0 0.0
        %1613 = vmatpush1.msra.mxu0 0.0
        %1614 = vmatprep.subr.mxu0 0.0
        %1615 = vmatpush1.msra.mxu0 0.0
        %1616 = vmatprep.subr.mxu0 0.0
        %1617 = vmatpush1.msra.mxu0 0.0
        %1618 = vmatprep.subr.mxu0 0.0
        %1619 = vmatpush1.msra.mxu0 0.0
        %1620 = vmatprep.subr.mxu0 0.0
        %1621 = vmatpush1.msra.mxu0 0.0
        %1622 = vmatprep.subr.mxu0 0.0
        %1623 = vmatpush1.msra.mxu0 0.0
        %1624 = vmatprep.subr.mxu0 0.0
        %1625 = vmatpush1.msra.mxu0 0.0
        %1626 = vmatprep.subr.mxu0 0.0
        %1627 = vmatpush1.msra.mxu0 0.0
        %1628 = vmatprep.mubr.f32.mxu0 0.0
        %1629 = vmatmul.mubr.f32.gmra.mrb[0].mxu0 %v1286
        %v1630 = vpop.f32.mrb[0].mxu0
        %v1631 = vadd.f32 0.0, %v1630
        %v1632 = vpop.f32.mrb[0].mxu0
        %v1633 = vadd.f32 0.0, %v1632
        %1634 = vmatprep.mubr.f32.mxu0 0.0
        %1635 = vmatmul.mubr.f32.gmra.mrb[0].mxu0 %v1291
        %v1636 = vpop.f32.mrb[0].mxu0
        %v1637 = vadd.f32 0.0, %v1636
        %v1638 = vpop.f32.mrb[0].mxu0
        %v1639 = vadd.f32 0.0, %v1638
        %1640 = vdwg.mxu0
        %v1645 = vrot.slane %v1631, 2
        %v1646 = vrot.slane %v1637, 2
        %v1647 = vsel %vm1012, %v1645, %v1646
        %v1648 = vrot.slane %v1633, 2
        %v1649 = vrot.slane %v1639, 2
        %v1650 = vsel %vm1012, %v1648, %v1649
        %v1657 = vsel %vm1012, %v1646, %v1645
        %v1658 = vsel %vm1012, %v1649, %v1648
        %v1659 = vadd.f32 %v1521, %v1647
        %v1660 = vadd.f32 %v1523, %v1650
        %v1661 = vadd.f32 %v1527, %v1657
        %v1662 = vadd.f32 %v1529, %v1658
        %s1663 = scalar_lea.vmem [#allocation8], 768
        %v1664 = vld [vmem:[%s1663] sm:$0xff]
        %v1665 = vld [vmem:[%s1663 + $0x8] sm:$0xff]
        %v1666 = vld [vmem:[%s1663 + $0x10] sm:$0xff]
        %v1667 = vld [vmem:[%s1663 + $0x18] sm:$0xff]
        %v1668 = vld [vmem:[%s1663 + $0x20] sm:$0xff]
        %v1669 = vld [vmem:[%s1663 + $0x28] sm:$0xff]
        %v1670 = vld [vmem:[%s1663 + $0x30] sm:$0xff]
        %v1671 = vld [vmem:[%s1663 + $0x38] sm:$0xff]
        %v1672 = vld [vmem:[%s1663 + $0x40] sm:$0xff]
        %v1673 = vld [vmem:[%s1663 + $0x48] sm:$0xff]
        %v1674 = vld [vmem:[%s1663 + $0x50] sm:$0xff]
        %v1675 = vld [vmem:[%s1663 + $0x58] sm:$0xff]
        %v1676 = vld [vmem:[%s1663 + $0x60] sm:$0xff]
        %v1677 = vld [vmem:[%s1663 + $0x68] sm:$0xff]
        %v1678 = vld [vmem:[%s1663 + $0x70] sm:$0xff]
        %v1679 = vld [vmem:[%s1663 + $0x78] sm:$0xff]
        %v1680 = vld [vmem:[%s1663 + $0x80] sm:$0xff]
        %v1681 = vld [vmem:[%s1663 + $0x88] sm:$0xff]
        %v1682 = vld [vmem:[%s1663 + $0x90] sm:$0xff]
        %v1683 = vld [vmem:[%s1663 + $0x98] sm:$0xff]
        %v1684 = vld [vmem:[%s1663 + $0xa0] sm:$0xff]
        %v1685 = vld [vmem:[%s1663 + $0xa8] sm:$0xff]
        %v1686 = vld [vmem:[%s1663 + $0xb0] sm:$0xff]
        %v1687 = vld [vmem:[%s1663 + $0xb8] sm:$0xff]
        %v1688 = vld [vmem:[%s1663 + $0xc0] sm:$0xff]
        %v1689 = vld [vmem:[%s1663 + $0xc8] sm:$0xff]
        %v1690 = vld [vmem:[%s1663 + $0xd0] sm:$0xff]
        %v1691 = vld [vmem:[%s1663 + $0xd8] sm:$0xff]
        %v1692 = vld [vmem:[%s1663 + $0xe0] sm:$0xff]
        %v1693 = vld [vmem:[%s1663 + $0xe8] sm:$0xff]
        %v1694 = vld [vmem:[%s1663 + $0xf0] sm:$0xff]
        %v1695 = vld [vmem:[%s1663 + $0xf8] sm:$0xff]
        %1696 = vmatprep.subr.mxu0 %v1665
        %1697 = vmatpush1.msra.mxu0 %v1664
        %1698 = vmatprep.subr.mxu0 %v1667
        %1699 = vmatpush1.msra.mxu0 %v1666
        %1700 = vmatprep.subr.mxu0 %v1669
        %1701 = vmatpush1.msra.mxu0 %v1668
        %1702 = vmatprep.subr.mxu0 %v1671
        %1703 = vmatpush1.msra.mxu0 %v1670
        %1704 = vmatprep.subr.mxu0 %v1673
        %1705 = vmatpush1.msra.mxu0 %v1672
        %1706 = vmatprep.subr.mxu0 %v1675
        %1707 = vmatpush1.msra.mxu0 %v1674
        %1708 = vmatprep.subr.mxu0 %v1677
        %1709 = vmatpush1.msra.mxu0 %v1676
        %1710 = vmatprep.subr.mxu0 %v1679
        %1711 = vmatpush1.msra.mxu0 %v1678
        %1712 = vmatprep.subr.mxu0 %v1681
        %1713 = vmatpush1.msra.mxu0 %v1680
        %1714 = vmatprep.subr.mxu0 %v1683
        %1715 = vmatpush1.msra.mxu0 %v1682
        %1716 = vmatprep.subr.mxu0 %v1685
        %1717 = vmatpush1.msra.mxu0 %v1684
        %1718 = vmatprep.subr.mxu0 %v1687
        %1719 = vmatpush1.msra.mxu0 %v1686
        %1720 = vmatprep.subr.mxu0 %v1689
        %1721 = vmatpush1.msra.mxu0 %v1688
        %1722 = vmatprep.subr.mxu0 %v1691
        %1723 = vmatpush1.msra.mxu0 %v1690
        %1724 = vmatprep.subr.mxu0 %v1693
        %1725 = vmatpush1.msra.mxu0 %v1692
        %1726 = vmatprep.subr.mxu0 %v1695
        %1727 = vmatpush1.msra.mxu0 %v1694
        %1728 = vmatprep.subr.mxu0 0.0
        %1729 = vmatpush1.msra.mxu0 0.0
        %1730 = vmatprep.subr.mxu0 0.0
        %1731 = vmatpush1.msra.mxu0 0.0
        %1732 = vmatprep.subr.mxu0 0.0
        %1733 = vmatpush1.msra.mxu0 0.0
        %1734 = vmatprep.subr.mxu0 0.0
        %1735 = vmatpush1.msra.mxu0 0.0
        %1736 = vmatprep.subr.mxu0 0.0
        %1737 = vmatpush1.msra.mxu0 0.0
        %1738 = vmatprep.subr.mxu0 0.0
        %1739 = vmatpush1.msra.mxu0 0.0
        %1740 = vmatprep.subr.mxu0 0.0
        %1741 = vmatpush1.msra.mxu0 0.0
        %1742 = vmatprep.subr.mxu0 0.0
        %1743 = vmatpush1.msra.mxu0 0.0
        %1744 = vmatprep.subr.mxu0 0.0
        %1745 = vmatpush1.msra.mxu0 0.0
        %1746 = vmatprep.subr.mxu0 0.0
        %1747 = vmatpush1.msra.mxu0 0.0
        %1748 = vmatprep.subr.mxu0 0.0
        %1749 = vmatpush1.msra.mxu0 0.0
        %1750 = vmatprep.subr.mxu0 0.0
        %1751 = vmatpush1.msra.mxu0 0.0
        %1752 = vmatprep.subr.mxu0 0.0
        %1753 = vmatpush1.msra.mxu0 0.0
        %1754 = vmatprep.subr.mxu0 0.0
        %1755 = vmatpush1.msra.mxu0 0.0
        %1756 = vmatprep.subr.mxu0 0.0
        %1757 = vmatpush1.msra.mxu0 0.0
        %1758 = vmatprep.subr.mxu0 0.0
        %1759 = vmatpush1.msra.mxu0 0.0
        %1760 = vmatprep.mubr.f32.mxu0 0.0
        %1761 = vmatmul.mubr.f32.gmra.mrb[0].mxu0 %v1286
        %v1762 = vpop.f32.mrb[0].mxu0
        %v1763 = vadd.f32 0.0, %v1762
        %v1764 = vpop.f32.mrb[0].mxu0
        %v1765 = vadd.f32 0.0, %v1764
        %1766 = vmatprep.mubr.f32.mxu0 0.0
        %1767 = vmatmul.mubr.f32.gmra.mrb[0].mxu0 %v1291
        %v1768 = vpop.f32.mrb[0].mxu0
        %v1769 = vadd.f32 0.0, %v1768
        %v1770 = vpop.f32.mrb[0].mxu0
        %v1771 = vadd.f32 0.0, %v1770
        %1772 = vdwg.mxu0
        %v1777 = vrot.slane %v1763, 3
        %v1778 = vrot.slane %v1769, 3
        %v1779 = vsel %vm1145, %v1777, %v1778
        %v1780 = vrot.slane %v1765, 3
        %v1781 = vrot.slane %v1771, 3
        %v1782 = vsel %vm1145, %v1780, %v1781
        %v1789 = vsel %vm1145, %v1778, %v1777
        %v1790 = vsel %vm1145, %v1781, %v1780
        %v1791 = vadd.f32 %v1659, %v1779
        %v1792 = vadd.f32 %v1660, %v1782
        %v1793 = vadd.f32 %v1661, %v1789
        %v1794 = vadd.f32 %v1662, %v1790
        %v1795 = vmax.f32 %v1791, %v1792
        %v1796 = vmax.f32 %v1793, %v1794
        %v1799 = vrot.slane %v1795, 1
        %v1800 = vrot.slane %v1796, 1
        %v1801 = vsel %vm802, %v1799, %v1800
        %v1805 = vsel %vm802, %v1800, %v1799
        %v1806 = vmax.f32 %v1795, %v1801
        %v1807 = vmax.f32 %v1796, %v1805
        %v1808 = vld [vmem:[#allocation10] sm:$0x1]
        %v1810 = vlaneseq
        %v1811 = vshrl.u32 %v1810, 7
        %v1812 = vsub.s32 0, %v1811
        %v1813 = vrot.slane %v1808, %v1812
        %v1815 = vadd.f32 %v1806, %v1813
        %v1816 = vadd.f32 %v1807, %v1813
        %vm1817 = vcmp.ge.f32.partialorder %v1815, 0.0
        %vm1818 = vcmp.ge.f32.partialorder %v1816, 0.0
        %v1819 = vmul.f32 %v1815, 0.01
        %v1820 = vmul.f32 %v1816, 0.01
        %v1821 = vsel %vm1817, %v1815, %v1819
        %v1822 = vsel %vm1818, %v1816, %v1820
        %v1823 = vld [vmem:[#allocation11] sm:$0xff]
        %vm1824 = vcmask 130048
        %v1826 = vsel %vm1824, %v1823, 0
        %1828 = vmatprep.subr.mxu0 0.0
        %1829 = vmatpush1.msra.mxu0 %v1821
        %1830 = vmatprep.subr.mxu0 0.0
        %1831 = vmatpush1.msra.mxu0 %v1822
        %1832 = vmatprep.subr.mxu0 0.0
        %1833 = vmatpush1.msra.mxu0 0.0
        %1834 = vmatprep.subr.mxu0 0.0
        %1835 = vmatpush1.msra.mxu0 0.0
        %1836 = vmatprep.subr.mxu0 0.0
        %1837 = vmatpush1.msra.mxu0 0.0
        %1838 = vmatprep.subr.mxu0 0.0
        %1839 = vmatpush1.msra.mxu0 0.0
        %1840 = vmatprep.subr.mxu0 0.0
        %1841 = vmatpush1.msra.mxu0 0.0
        %1842 = vmatprep.subr.mxu0 0.0
        %1843 = vmatpush1.msra.mxu0 0.0
        %1844 = vmatprep.subr.mxu0 0.0
        %1845 = vmatpush1.msra.mxu0 0.0
        %1846 = vmatprep.subr.mxu0 0.0
        %1847 = vmatpush1.msra.mxu0 0.0
        %1848 = vmatprep.subr.mxu0 0.0
        %1849 = vmatpush1.msra.mxu0 0.0
        %1850 = vmatprep.subr.mxu0 0.0
        %1851 = vmatpush1.msra.mxu0 0.0
        %1852 = vmatprep.subr.mxu0 0.0
        %1853 = vmatpush1.msra.mxu0 0.0
        %1854 = vmatprep.subr.mxu0 0.0
        %1855 = vmatpush1.msra.mxu0 0.0
        %1856 = vmatprep.subr.mxu0 0.0
        %1857 = vmatpush1.msra.mxu0 0.0
        %1858 = vmatprep.subr.mxu0 0.0
        %1859 = vmatpush1.msra.mxu0 0.0
        %1860 = vmatprep.subr.mxu0 0.0
        %1861 = vmatpush1.msra.mxu0 0.0
        %1862 = vmatprep.subr.mxu0 0.0
        %1863 = vmatpush1.msra.mxu0 0.0
        %1864 = vmatprep.subr.mxu0 0.0
        %1865 = vmatpush1.msra.mxu0 0.0
        %1866 = vmatprep.subr.mxu0 0.0
        %1867 = vmatpush1.msra.mxu0 0.0
        %1868 = vmatprep.subr.mxu0 0.0
        %1869 = vmatpush1.msra.mxu0 0.0
        %1870 = vmatprep.subr.mxu0 0.0
        %1871 = vmatpush1.msra.mxu0 0.0
        %1872 = vmatprep.subr.mxu0 0.0
        %1873 = vmatpush1.msra.mxu0 0.0
        %1874 = vmatprep.subr.mxu0 0.0
        %1875 = vmatpush1.msra.mxu0 0.0
        %1876 = vmatprep.subr.mxu0 0.0
        %1877 = vmatpush1.msra.mxu0 0.0
        %1878 = vmatprep.subr.mxu0 0.0
        %1879 = vmatpush1.msra.mxu0 0.0
        %1880 = vmatprep.subr.mxu0 0.0
        %1881 = vmatpush1.msra.mxu0 0.0
        %1882 = vmatprep.subr.mxu0 0.0
        %1883 = vmatpush1.msra.mxu0 0.0
        %1884 = vmatprep.subr.mxu0 0.0
        %1885 = vmatpush1.msra.mxu0 0.0
        %1886 = vmatprep.subr.mxu0 0.0
        %1887 = vmatpush1.msra.mxu0 0.0
        %1888 = vmatprep.subr.mxu0 0.0
        %1889 = vmatpush1.msra.mxu0 0.0
        %1890 = vmatprep.subr.mxu0 0.0
        %1891 = vmatpush1.msra.mxu0 0.0
        %1892 = vmatprep.mubr.f32.mxu0 0.0
        %1893 = vmatmul.mubr.f32.gmra.mrb[0].mxu0 %v1826
        %v1894 = vpop.f32.mrb[0].mxu0
        %v1895 = vadd.f32 0.0, %v1894
        %v1896 = vpop.f32.mrb[0].mxu0
        %1897 = vdwg.mxu0
        %v1898 = vld [vmem:[%s7] sm:$0xff]
        %v1899 = vld [vmem:[%s7 + $0x8] sm:$0xff]
        %v1900 = vld [vmem:[%s7 + $0x10] sm:$0xff]
        %v1901 = vld [vmem:[%s7 + $0x18] sm:$0xff]
        %v1902 = vld [vmem:[%s7 + $0x20] sm:$0xff]
        %v1903 = vld [vmem:[%s7 + $0x28] sm:$0xff]
        %v1904 = vld [vmem:[%s7 + $0x30] sm:$0xff]
        %v1905 = vld [vmem:[%s7 + $0x38] sm:$0xff]
        %v1906 = vld [vmem:[%s7 + $0x40] sm:$0xff]
        %v1907 = vld [vmem:[%s7 + $0x48] sm:$0xff]
        %v1908 = vld [vmem:[%s7 + $0x50] sm:$0xff]
        %v1909 = vld [vmem:[%s7 + $0x58] sm:$0xff]
        %v1910 = vld [vmem:[%s7 + $0x60] sm:$0xff]
        %v1911 = vld [vmem:[%s7 + $0x68] sm:$0xff]
        %v1912 = vld [vmem:[%s7 + $0x70] sm:$0xff]
        %v1913 = vld [vmem:[%s7 + $0x78] sm:$0xff]
        %s1914 = scalar_lea.vmem %s7, 128
        %v1915 = vld [vmem:[%s1914] sm:$0xff]
        %v1916 = vld [vmem:[%s1914 + $0x8] sm:$0xff]
        %v1917 = vld [vmem:[%s1914 + $0x10] sm:$0xff]
        %v1918 = vld [vmem:[%s1914 + $0x18] sm:$0xff]
        %v1919 = vld [vmem:[%s1914 + $0x20] sm:$0xff]
        %v1920 = vld [vmem:[%s1914 + $0x28] sm:$0xff]
        %v1921 = vld [vmem:[%s1914 + $0x30] sm:$0xff]
        %v1922 = vld [vmem:[%s1914 + $0x38] sm:$0xff]
        %v1923 = vld [vmem:[%s1914 + $0x40] sm:$0xff]
        %v1924 = vld [vmem:[%s1914 + $0x48] sm:$0xff]
        %v1925 = vld [vmem:[%s1914 + $0x50] sm:$0xff]
        %v1926 = vld [vmem:[%s1914 + $0x58] sm:$0xff]
        %v1927 = vld [vmem:[%s1914 + $0x60] sm:$0xff]
        %v1928 = vld [vmem:[%s1914 + $0x68] sm:$0xff]
        %v1929 = vld [vmem:[%s1914 + $0x70] sm:$0xff]
        %v1930 = vld [vmem:[%s1914 + $0x78] sm:$0xff]
        %1931 = vmatprep.subr.mxu0 0.0
        %1932 = vmatpush1.msra.mxu0 %v1915
        %1933 = vmatprep.subr.mxu0 0.0
        %1934 = vmatpush1.msra.mxu0 %v1916
        %1935 = vmatprep.subr.mxu0 0.0
        %1936 = vmatpush1.msra.mxu0 %v1917
        %1937 = vmatprep.subr.mxu0 0.0
        %1938 = vmatpush1.msra.mxu0 %v1918
        %1939 = vmatprep.subr.mxu0 0.0
        %1940 = vmatpush1.msra.mxu0 %v1919
        %1941 = vmatprep.subr.mxu0 0.0
        %1942 = vmatpush1.msra.mxu0 %v1920
        %1943 = vmatprep.subr.mxu0 0.0
        %1944 = vmatpush1.msra.mxu0 %v1921
        %1945 = vmatprep.subr.mxu0 0.0
        %1946 = vmatpush1.msra.mxu0 %v1922
        %1947 = vmatprep.subr.mxu0 0.0
        %1948 = vmatpush1.msra.mxu0 %v1923
        %1949 = vmatprep.subr.mxu0 0.0
        %1950 = vmatpush1.msra.mxu0 %v1924
        %1951 = vmatprep.subr.mxu0 0.0
        %1952 = vmatpush1.msra.mxu0 %v1925
        %1953 = vmatprep.subr.mxu0 0.0
        %1954 = vmatpush1.msra.mxu0 %v1926
        %1955 = vmatprep.subr.mxu0 0.0
        %1956 = vmatpush1.msra.mxu0 %v1927
        %1957 = vmatprep.subr.mxu0 0.0
        %1958 = vmatpush1.msra.mxu0 %v1928
        %1959 = vmatprep.subr.mxu0 0.0
        %1960 = vmatpush1.msra.mxu0 %v1929
        %1961 = vmatprep.subr.mxu0 0.0
        %1962 = vmatpush1.msra.mxu0 %v1930
        %1963 = vmatprep.subr.mxu0 0.0
        %1964 = vmatpush1.msra.mxu0 0.0
        %1965 = vmatprep.subr.mxu0 0.0
        %1966 = vmatpush1.msra.mxu0 0.0
        %1967 = vmatprep.subr.mxu0 0.0
        %1968 = vmatpush1.msra.mxu0 0.0
        %1969 = vmatprep.subr.mxu0 0.0
        %1970 = vmatpush1.msra.mxu0 0.0
        %1971 = vmatprep.subr.mxu0 0.0
        %1972 = vmatpush1.msra.mxu0 0.0
        %1973 = vmatprep.subr.mxu0 0.0
        %1974 = vmatpush1.msra.mxu0 0.0
        %1975 = vmatprep.subr.mxu0 0.0
        %1976 = vmatpush1.msra.mxu0 0.0
        %1977 = vmatprep.subr.mxu0 0.0
        %1978 = vmatpush1.msra.mxu0 0.0
        %1979 = vmatprep.subr.mxu0 0.0
        %1980 = vmatpush1.msra.mxu0 0.0
        %1981 = vmatprep.subr.mxu0 0.0
        %1982 = vmatpush1.msra.mxu0 0.0
        %1983 = vmatprep.subr.mxu0 0.0
        %1984 = vmatpush1.msra.mxu0 0.0
        %1985 = vmatprep.subr.mxu0 0.0
        %1986 = vmatpush1.msra.mxu0 0.0
        %1987 = vmatprep.subr.mxu0 0.0
        %1988 = vmatpush1.msra.mxu0 0.0
        %1989 = vmatprep.subr.mxu0 0.0
        %1990 = vmatpush1.msra.mxu0 0.0
        %1991 = vmatprep.subr.mxu0 0.0
        %1992 = vmatpush1.msra.mxu0 0.0
        %1993 = vmatprep.subr.mxu0 0.0
        %1994 = vmatpush1.msra.mxu0 0.0
        %1995 = vmatprep.mubr.f32.mxu0 0.0
        %1996 = vmatmul.mubr.f32.gmra.mrb[0].mxu0 %v1895
        %v1997 = vpop.f32.mrb[0].mxu0
        %v1998 = vadd.f32 0.0, %v1997
        %v1999 = vpop.f32.mrb[0].mxu0
        %2000 = vdwg.mxu0
        %v2002 = vrot.slane %v1998, 1
        %v2004 = vsel %vm802, %v2002, %v2002
        %2005 = vmatprep.subr.mxu0 0.0
        %2006 = vmatpush1.msra.mxu0 %v1898
        %2007 = vmatprep.subr.mxu0 0.0
        %2008 = vmatpush1.msra.mxu0 %v1899
        %2009 = vmatprep.subr.mxu0 0.0
        %2010 = vmatpush1.msra.mxu0 %v1900
        %2011 = vmatprep.subr.mxu0 0.0
        %2012 = vmatpush1.msra.mxu0 %v1901
        %2013 = vmatprep.subr.mxu0 0.0
        %2014 = vmatpush1.msra.mxu0 %v1902
        %2015 = vmatprep.subr.mxu0 0.0
        %2016 = vmatpush1.msra.mxu0 %v1903
        %2017 = vmatprep.subr.mxu0 0.0
        %2018 = vmatpush1.msra.mxu0 %v1904
        %2019 = vmatprep.subr.mxu0 0.0
        %2020 = vmatpush1.msra.mxu0 %v1905
        %2021 = vmatprep.subr.mxu0 0.0
        %2022 = vmatpush1.msra.mxu0 %v1906
        %2023 = vmatprep.subr.mxu0 0.0
        %2024 = vmatpush1.msra.mxu0 %v1907
        %2025 = vmatprep.subr.mxu0 0.0
        %2026 = vmatpush1.msra.mxu0 %v1908
        %2027 = vmatprep.subr.mxu0 0.0
        %2028 = vmatpush1.msra.mxu0 %v1909
        %2029 = vmatprep.subr.mxu0 0.0
        %2030 = vmatpush1.msra.mxu0 %v1910
        %2031 = vmatprep.subr.mxu0 0.0
        %2032 = vmatpush1.msra.mxu0 %v1911
        %2033 = vmatprep.subr.mxu0 0.0
        %2034 = vmatpush1.msra.mxu0 %v1912
        %2035 = vmatprep.subr.mxu0 0.0
        %2036 = vmatpush1.msra.mxu0 %v1913
        %2037 = vmatprep.subr.mxu0 0.0
        %2038 = vmatpush1.msra.mxu0 0.0
        %2039 = vmatprep.subr.mxu0 0.0
        %2040 = vmatpush1.msra.mxu0 0.0
        %2041 = vmatprep.subr.mxu0 0.0
        %2042 = vmatpush1.msra.mxu0 0.0
        %2043 = vmatprep.subr.mxu0 0.0
        %2044 = vmatpush1.msra.mxu0 0.0
        %2045 = vmatprep.subr.mxu0 0.0
        %2046 = vmatpush1.msra.mxu0 0.0
        %2047 = vmatprep.subr.mxu0 0.0
        %2048 = vmatpush1.msra.mxu0 0.0
        %2049 = vmatprep.subr.mxu0 0.0
        %2050 = vmatpush1.msra.mxu0 0.0
        %2051 = vmatprep.subr.mxu0 0.0
        %2052 = vmatpush1.msra.mxu0 0.0
        %2053 = vmatprep.subr.mxu0 0.0
        %2054 = vmatpush1.msra.mxu0 0.0
        %2055 = vmatprep.subr.mxu0 0.0
        %2056 = vmatpush1.msra.mxu0 0.0
        %2057 = vmatprep.subr.mxu0 0.0
        %2058 = vmatpush1.msra.mxu0 0.0
        %2059 = vmatprep.subr.mxu0 0.0
        %2060 = vmatpush1.msra.mxu0 0.0
        %2061 = vmatprep.subr.mxu0 0.0
        %2062 = vmatpush1.msra.mxu0 0.0
        %2063 = vmatprep.subr.mxu0 0.0
        %2064 = vmatpush1.msra.mxu0 0.0
        %2065 = vmatprep.subr.mxu0 0.0
        %2066 = vmatpush1.msra.mxu0 0.0
        %2067 = vmatprep.subr.mxu0 0.0
        %2068 = vmatpush1.msra.mxu0 0.0
        %2069 = vmatprep.mubr.f32.mxu0 0.0
        %2070 = vmatmul.mubr.f32.gmra.mrb[0].mxu0 %v1895
        %v2071 = vpop.f32.mrb[0].mxu0
        %v2072 = vadd.f32 %v2004, %v2071
        %v2073 = vpop.f32.mrb[0].mxu0
        %2074 = vdwg.mxu0
        %s2075 = scalar_lea.vmem %s7, 256
        %v2076 = vld [vmem:[%s2075] sm:$0xff]
        %v2077 = vld [vmem:[%s2075 + $0x8] sm:$0xff]
        %v2078 = vld [vmem:[%s2075 + $0x10] sm:$0xff]
        %v2079 = vld [vmem:[%s2075 + $0x18] sm:$0xff]
        %v2080 = vld [vmem:[%s2075 + $0x20] sm:$0xff]
        %v2081 = vld [vmem:[%s2075 + $0x28] sm:$0xff]
        %v2082 = vld [vmem:[%s2075 + $0x30] sm:$0xff]
        %v2083 = vld [vmem:[%s2075 + $0x38] sm:$0xff]
        %v2084 = vld [vmem:[%s2075 + $0x40] sm:$0xff]
        %v2085 = vld [vmem:[%s2075 + $0x48] sm:$0xff]
        %v2086 = vld [vmem:[%s2075 + $0x50] sm:$0xff]
        %v2087 = vld [vmem:[%s2075 + $0x58] sm:$0xff]
        %v2088 = vld [vmem:[%s2075 + $0x60] sm:$0xff]
        %v2089 = vld [vmem:[%s2075 + $0x68] sm:$0xff]
        %v2090 = vld [vmem:[%s2075 + $0x70] sm:$0xff]
        %v2091 = vld [vmem:[%s2075 + $0x78] sm:$0xff]
        %2092 = vmatprep.subr.mxu0 0.0
        %2093 = vmatpush1.msra.mxu0 %v2076
        %2094 = vmatprep.subr.mxu0 0.0
        %2095 = vmatpush1.msra.mxu0 %v2077
        %2096 = vmatprep.subr.mxu0 0.0
        %2097 = vmatpush1.msra.mxu0 %v2078
        %2098 = vmatprep.subr.mxu0 0.0
        %2099 = vmatpush1.msra.mxu0 %v2079
        %2100 = vmatprep.subr.mxu0 0.0
        %2101 = vmatpush1.msra.mxu0 %v2080
        %2102 = vmatprep.subr.mxu0 0.0
        %2103 = vmatpush1.msra.mxu0 %v2081
        %2104 = vmatprep.subr.mxu0 0.0
        %2105 = vmatpush1.msra.mxu0 %v2082
        %2106 = vmatprep.subr.mxu0 0.0
        %2107 = vmatpush1.msra.mxu0 %v2083
        %2108 = vmatprep.subr.mxu0 0.0
        %2109 = vmatpush1.msra.mxu0 %v2084
        %2110 = vmatprep.subr.mxu0 0.0
        %2111 = vmatpush1.msra.mxu0 %v2085
        %2112 = vmatprep.subr.mxu0 0.0
        %2113 = vmatpush1.msra.mxu0 %v2086
        %2114 = vmatprep.subr.mxu0 0.0
        %2115 = vmatpush1.msra.mxu0 %v2087
        %2116 = vmatprep.subr.mxu0 0.0
        %2117 = vmatpush1.msra.mxu0 %v2088
        %2118 = vmatprep.subr.mxu0 0.0
        %2119 = vmatpush1.msra.mxu0 %v2089
        %2120 = vmatprep.subr.mxu0 0.0
        %2121 = vmatpush1.msra.mxu0 %v2090
        %2122 = vmatprep.subr.mxu0 0.0
        %2123 = vmatpush1.msra.mxu0 %v2091
        %2124 = vmatprep.subr.mxu0 0.0
        %2125 = vmatpush1.msra.mxu0 0.0
        %2126 = vmatprep.subr.mxu0 0.0
        %2127 = vmatpush1.msra.mxu0 0.0
        %2128 = vmatprep.subr.mxu0 0.0
        %2129 = vmatpush1.msra.mxu0 0.0
        %2130 = vmatprep.subr.mxu0 0.0
        %2131 = vmatpush1.msra.mxu0 0.0
        %2132 = vmatprep.subr.mxu0 0.0
        %2133 = vmatpush1.msra.mxu0 0.0
        %2134 = vmatprep.subr.mxu0 0.0
        %2135 = vmatpush1.msra.mxu0 0.0
        %2136 = vmatprep.subr.mxu0 0.0
        %2137 = vmatpush1.msra.mxu0 0.0
        %2138 = vmatprep.subr.mxu0 0.0
        %2139 = vmatpush1.msra.mxu0 0.0
        %2140 = vmatprep.subr.mxu0 0.0
        %2141 = vmatpush1.msra.mxu0 0.0
        %2142 = vmatprep.subr.mxu0 0.0
        %2143 = vmatpush1.msra.mxu0 0.0
        %2144 = vmatprep.subr.mxu0 0.0
        %2145 = vmatpush1.msra.mxu0 0.0
        %2146 = vmatprep.subr.mxu0 0.0
        %2147 = vmatpush1.msra.mxu0 0.0
        %2148 = vmatprep.subr.mxu0 0.0
        %2149 = vmatpush1.msra.mxu0 0.0
        %2150 = vmatprep.subr.mxu0 0.0
        %2151 = vmatpush1.msra.mxu0 0.0
        %2152 = vmatprep.subr.mxu0 0.0
        %2153 = vmatpush1.msra.mxu0 0.0
        %2154 = vmatprep.subr.mxu0 0.0
        %2155 = vmatpush1.msra.mxu0 0.0
        %2156 = vmatprep.mubr.f32.mxu0 0.0
        %2157 = vmatmul.mubr.f32.gmra.mrb[0].mxu0 %v1895
        %v2158 = vpop.f32.mrb[0].mxu0
        %v2159 = vadd.f32 0.0, %v2158
        %v2160 = vpop.f32.mrb[0].mxu0
        %2161 = vdwg.mxu0
        %v2163 = vrot.slane %v2159, 2
        %v2165 = vsel %vm1012, %v2163, %v2163
        %v2166 = vadd.f32 %v2072, %v2165
        %s2167 = scalar_lea.vmem %s7, 384
        %v2168 = vld [vmem:[%s2167] sm:$0xff]
        %v2169 = vld [vmem:[%s2167 + $0x8] sm:$0xff]
        %v2170 = vld [vmem:[%s2167 + $0x10] sm:$0xff]
        %v2171 = vld [vmem:[%s2167 + $0x18] sm:$0xff]
        %v2172 = vld [vmem:[%s2167 + $0x20] sm:$0xff]
        %v2173 = vld [vmem:[%s2167 + $0x28] sm:$0xff]
        %v2174 = vld [vmem:[%s2167 + $0x30] sm:$0xff]
        %v2175 = vld [vmem:[%s2167 + $0x38] sm:$0xff]
        %v2176 = vld [vmem:[%s2167 + $0x40] sm:$0xff]
        %v2177 = vld [vmem:[%s2167 + $0x48] sm:$0xff]
        %v2178 = vld [vmem:[%s2167 + $0x50] sm:$0xff]
        %v2179 = vld [vmem:[%s2167 + $0x58] sm:$0xff]
        %v2180 = vld [vmem:[%s2167 + $0x60] sm:$0xff]
        %v2181 = vld [vmem:[%s2167 + $0x68] sm:$0xff]
        %v2182 = vld [vmem:[%s2167 + $0x70] sm:$0xff]
        %v2183 = vld [vmem:[%s2167 + $0x78] sm:$0xff]
        %2184 = vmatprep.subr.mxu0 0.0
        %2185 = vmatpush1.msra.mxu0 %v2168
        %2186 = vmatprep.subr.mxu0 0.0
        %2187 = vmatpush1.msra.mxu0 %v2169
        %2188 = vmatprep.subr.mxu0 0.0
        %2189 = vmatpush1.msra.mxu0 %v2170
        %2190 = vmatprep.subr.mxu0 0.0
        %2191 = vmatpush1.msra.mxu0 %v2171
        %2192 = vmatprep.subr.mxu0 0.0
        %2193 = vmatpush1.msra.mxu0 %v2172
        %2194 = vmatprep.subr.mxu0 0.0
        %2195 = vmatpush1.msra.mxu0 %v2173
        %2196 = vmatprep.subr.mxu0 0.0
        %2197 = vmatpush1.msra.mxu0 %v2174
        %2198 = vmatprep.subr.mxu0 0.0
        %2199 = vmatpush1.msra.mxu0 %v2175
        %2200 = vmatprep.subr.mxu0 0.0
        %2201 = vmatpush1.msra.mxu0 %v2176
        %2202 = vmatprep.subr.mxu0 0.0
        %2203 = vmatpush1.msra.mxu0 %v2177
        %2204 = vmatprep.subr.mxu0 0.0
        %2205 = vmatpush1.msra.mxu0 %v2178
        %2206 = vmatprep.subr.mxu0 0.0
        %2207 = vmatpush1.msra.mxu0 %v2179
        %2208 = vmatprep.subr.mxu0 0.0
        %2209 = vmatpush1.msra.mxu0 %v2180
        %2210 = vmatprep.subr.mxu0 0.0
        %2211 = vmatpush1.msra.mxu0 %v2181
        %2212 = vmatprep.subr.mxu0 0.0
        %2213 = vmatpush1.msra.mxu0 %v2182
        %2214 = vmatprep.subr.mxu0 0.0
        %2215 = vmatpush1.msra.mxu0 %v2183
        %2216 = vmatprep.subr.mxu0 0.0
        %2217 = vmatpush1.msra.mxu0 0.0
        %2218 = vmatprep.subr.mxu0 0.0
        %2219 = vmatpush1.msra.mxu0 0.0
        %2220 = vmatprep.subr.mxu0 0.0
        %2221 = vmatpush1.msra.mxu0 0.0
        %2222 = vmatprep.subr.mxu0 0.0
        %2223 = vmatpush1.msra.mxu0 0.0
        %2224 = vmatprep.subr.mxu0 0.0
        %2225 = vmatpush1.msra.mxu0 0.0
        %2226 = vmatprep.subr.mxu0 0.0
        %2227 = vmatpush1.msra.mxu0 0.0
        %2228 = vmatprep.subr.mxu0 0.0
        %2229 = vmatpush1.msra.mxu0 0.0
        %2230 = vmatprep.subr.mxu0 0.0
        %2231 = vmatpush1.msra.mxu0 0.0
        %2232 = vmatprep.subr.mxu0 0.0
        %2233 = vmatpush1.msra.mxu0 0.0
        %2234 = vmatprep.subr.mxu0 0.0
        %2235 = vmatpush1.msra.mxu0 0.0
        %2236 = vmatprep.subr.mxu0 0.0
        %2237 = vmatpush1.msra.mxu0 0.0
        %2238 = vmatprep.subr.mxu0 0.0
        %2239 = vmatpush1.msra.mxu0 0.0
        %2240 = vmatprep.subr.mxu0 0.0
        %2241 = vmatpush1.msra.mxu0 0.0
        %2242 = vmatprep.subr.mxu0 0.0
        %2243 = vmatpush1.msra.mxu0 0.0
        %2244 = vmatprep.subr.mxu0 0.0
        %2245 = vmatpush1.msra.mxu0 0.0
        %2246 = vmatprep.subr.mxu0 0.0
        %2247 = vmatpush1.msra.mxu0 0.0
        %2248 = vmatprep.mubr.f32.mxu0 0.0
        %2249 = vmatmul.mubr.f32.gmra.mrb[0].mxu0 %v1895
        %v2250 = vpop.f32.mrb[0].mxu0
        %v2251 = vadd.f32 0.0, %v2250
        %v2252 = vpop.f32.mrb[0].mxu0
        %2253 = vdwg.mxu0
        %v2255 = vrot.slane %v2251, 3
        %v2257 = vsel %vm1145, %v2255, %v2255
        %v2258 = vadd.f32 %v2166, %v2257
        %v2259 = vld [vmem:[#allocation13] sm:$0x1]
        %v2261 = vlaneseq
        %v2262 = vshrl.u32 %v2261, 7
        %v2263 = vsub.s32 0, %v2262
        %v2264 = vrot.slane %v2259, %v2263
        %v2266 = vadd.f32 %v2258, %v2264
        %vm2267 = vcmp.ge.f32.partialorder %v2266, 0.0
        %v2268 = vmul.f32 %v2266, 0.01
        %v2269 = vsel %vm2267, %v2266, %v2268
        %v2270 = vld [vmem:[#allocation14] sm:$0xff]
        %v2271 = vld [vmem:[#allocation14 + $0x8] sm:$0xff]
        %v2272 = vld [vmem:[#allocation14 + $0x10] sm:$0xff]
        %v2273 = vld [vmem:[#allocation14 + $0x18] sm:$0xff]
        %v2274 = vld [vmem:[#allocation14 + $0x20] sm:$0xff]
        %s2275 = scalar_lea.vmem [#allocation14], 40
        %v2276 = vld [vmem:[%s2275] sm:$0xff]
        %v2277 = vld [vmem:[%s2275 + $0x8] sm:$0xff]
        %v2278 = vld [vmem:[%s2275 + $0x10] sm:$0xff]
        %v2279 = vld [vmem:[%s2275 + $0x18] sm:$0xff]
        %v2280 = vld [vmem:[%s2275 + $0x20] sm:$0xff]
        %vm2281 = vcmask 326656
        %v2283 = vsel %vm2281, %v2269, 0
        %2285 = vmatprep.subr.mxu0 0.0
        %2286 = vmatpush1.msra.mxu0 %v2276
        %2287 = vmatprep.subr.mxu0 0.0
        %2288 = vmatpush1.msra.mxu0 %v2277
        %2289 = vmatprep.subr.mxu0 0.0
        %2290 = vmatpush1.msra.mxu0 %v2278
        %2291 = vmatprep.subr.mxu0 0.0
        %2292 = vmatpush1.msra.mxu0 %v2279
        %2293 = vmatprep.subr.mxu0 0.0
        %2294 = vmatpush1.msra.mxu0 %v2280
        %2295 = vmatprep.subr.mxu0 0.0
        %2296 = vmatpush1.msra.mxu0 0.0
        %2297 = vmatprep.subr.mxu0 0.0
        %2298 = vmatpush1.msra.mxu0 0.0
        %2299 = vmatprep.subr.mxu0 0.0
        %2300 = vmatpush1.msra.mxu0 0.0
        %2301 = vmatprep.subr.mxu0 0.0
        %2302 = vmatpush1.msra.mxu0 0.0
        %2303 = vmatprep.subr.mxu0 0.0
        %2304 = vmatpush1.msra.mxu0 0.0
        %2305 = vmatprep.subr.mxu0 0.0
        %2306 = vmatpush1.msra.mxu0 0.0
        %2307 = vmatprep.subr.mxu0 0.0
        %2308 = vmatpush1.msra.mxu0 0.0
        %2309 = vmatprep.subr.mxu0 0.0
        %2310 = vmatpush1.msra.mxu0 0.0
        %2311 = vmatprep.subr.mxu0 0.0
        %2312 = vmatpush1.msra.mxu0 0.0
        %2313 = vmatprep.subr.mxu0 0.0
        %2314 = vmatpush1.msra.mxu0 0.0
        %2315 = vmatprep.subr.mxu0 0.0
        %2316 = vmatpush1.msra.mxu0 0.0
        %2317 = vmatprep.subr.mxu0 0.0
        %2318 = vmatpush1.msra.mxu0 0.0
        %2319 = vmatprep.subr.mxu0 0.0
        %2320 = vmatpush1.msra.mxu0 0.0
        %2321 = vmatprep.subr.mxu0 0.0
        %2322 = vmatpush1.msra.mxu0 0.0
        %2323 = vmatprep.subr.mxu0 0.0
        %2324 = vmatpush1.msra.mxu0 0.0
        %2325 = vmatprep.subr.mxu0 0.0
        %2326 = vmatpush1.msra.mxu0 0.0
        %2327 = vmatprep.subr.mxu0 0.0
        %2328 = vmatpush1.msra.mxu0 0.0
        %2329 = vmatprep.subr.mxu0 0.0
        %2330 = vmatpush1.msra.mxu0 0.0
        %2331 = vmatprep.subr.mxu0 0.0
        %2332 = vmatpush1.msra.mxu0 0.0
        %2333 = vmatprep.subr.mxu0 0.0
        %2334 = vmatpush1.msra.mxu0 0.0
        %2335 = vmatprep.subr.mxu0 0.0
        %2336 = vmatpush1.msra.mxu0 0.0
        %2337 = vmatprep.subr.mxu0 0.0
        %2338 = vmatpush1.msra.mxu0 0.0
        %2339 = vmatprep.subr.mxu0 0.0
        %2340 = vmatpush1.msra.mxu0 0.0
        %2341 = vmatprep.subr.mxu0 0.0
        %2342 = vmatpush1.msra.mxu0 0.0
        %2343 = vmatprep.subr.mxu0 0.0
        %2344 = vmatpush1.msra.mxu0 0.0
        %2345 = vmatprep.subr.mxu0 0.0
        %2346 = vmatpush1.msra.mxu0 0.0
        %2347 = vmatprep.subr.mxu0 0.0
        %2348 = vmatpush1.msra.mxu0 0.0
        %2349 = vmatprep.mubr.f32.mxu0 0.0
        %2350 = vmatmul.mubr.f32.gmra.mrb[0].mxu0 %v2283
        %v2351 = vpop.f32.mrb[0].mxu0
        %v2352 = vadd.f32 0.0, %v2351
        %v2353 = vpop.f32.mrb[0].mxu0
        %2354 = vdwg.mxu0
        %v2356 = vrot.slane %v2352, 1
        %v2358 = vsel %vm802, %v2356, %v2356
        %2359 = vmatprep.subr.mxu0 0.0
        %2360 = vmatpush1.msra.mxu0 %v2270
        %2361 = vmatprep.subr.mxu0 0.0
        %2362 = vmatpush1.msra.mxu0 %v2271
        %2363 = vmatprep.subr.mxu0 0.0
        %2364 = vmatpush1.msra.mxu0 %v2272
        %2365 = vmatprep.subr.mxu0 0.0
        %2366 = vmatpush1.msra.mxu0 %v2273
        %2367 = vmatprep.subr.mxu0 0.0
        %2368 = vmatpush1.msra.mxu0 %v2274
        %2369 = vmatprep.subr.mxu0 0.0
        %2370 = vmatpush1.msra.mxu0 0.0
        %2371 = vmatprep.subr.mxu0 0.0
        %2372 = vmatpush1.msra.mxu0 0.0
        %2373 = vmatprep.subr.mxu0 0.0
        %2374 = vmatpush1.msra.mxu0 0.0
        %2375 = vmatprep.subr.mxu0 0.0
        %2376 = vmatpush1.msra.mxu0 0.0
        %2377 = vmatprep.subr.mxu0 0.0
        %2378 = vmatpush1.msra.mxu0 0.0
        %2379 = vmatprep.subr.mxu0 0.0
        %2380 = vmatpush1.msra.mxu0 0.0
        %2381 = vmatprep.subr.mxu0 0.0
        %2382 = vmatpush1.msra.mxu0 0.0
        %2383 = vmatprep.subr.mxu0 0.0
        %2384 = vmatpush1.msra.mxu0 0.0
        %2385 = vmatprep.subr.mxu0 0.0
        %2386 = vmatpush1.msra.mxu0 0.0
        %2387 = vmatprep.subr.mxu0 0.0
        %2388 = vmatpush1.msra.mxu0 0.0
        %2389 = vmatprep.subr.mxu0 0.0
        %2390 = vmatpush1.msra.mxu0 0.0
        %2391 = vmatprep.subr.mxu0 0.0
        %2392 = vmatpush1.msra.mxu0 0.0
        %2393 = vmatprep.subr.mxu0 0.0
        %2394 = vmatpush1.msra.mxu0 0.0
        %2395 = vmatprep.subr.mxu0 0.0
        %2396 = vmatpush1.msra.mxu0 0.0
        %2397 = vmatprep.subr.mxu0 0.0
        %2398 = vmatpush1.msra.mxu0 0.0
        %2399 = vmatprep.subr.mxu0 0.0
        %2400 = vmatpush1.msra.mxu0 0.0
        %2401 = vmatprep.subr.mxu0 0.0
        %2402 = vmatpush1.msra.mxu0 0.0
        %2403 = vmatprep.subr.mxu0 0.0
        %2404 = vmatpush1.msra.mxu0 0.0
        %2405 = vmatprep.subr.mxu0 0.0
        %2406 = vmatpush1.msra.mxu0 0.0
        %2407 = vmatprep.subr.mxu0 0.0
        %2408 = vmatpush1.msra.mxu0 0.0
        %2409 = vmatprep.subr.mxu0 0.0
        %2410 = vmatpush1.msra.mxu0 0.0
        %2411 = vmatprep.subr.mxu0 0.0
        %2412 = vmatpush1.msra.mxu0 0.0
        %2413 = vmatprep.subr.mxu0 0.0
        %2414 = vmatpush1.msra.mxu0 0.0
        %2415 = vmatprep.subr.mxu0 0.0
        %2416 = vmatpush1.msra.mxu0 0.0
        %2417 = vmatprep.subr.mxu0 0.0
        %2418 = vmatpush1.msra.mxu0 0.0
        %2419 = vmatprep.subr.mxu0 0.0
        %2420 = vmatpush1.msra.mxu0 0.0
        %2421 = vmatprep.subr.mxu0 0.0
        %2422 = vmatpush1.msra.mxu0 0.0
        %2423 = vmatprep.mubr.f32.mxu0 0.0
        %2424 = vmatmul.mubr.f32.gmra.mrb[0].mxu0 %v2283
        %v2425 = vpop.f32.mrb[0].mxu0
        %v2426 = vadd.f32 %v2358, %v2425
        %v2427 = vpop.f32.mrb[0].mxu0
        %2428 = vdwg.mxu0
        %s2429 = scalar_lea.vmem [#allocation14], 80
        %v2430 = vld [vmem:[%s2429] sm:$0xff]
        %v2431 = vld [vmem:[%s2429 + $0x8] sm:$0xff]
        %v2432 = vld [vmem:[%s2429 + $0x10] sm:$0xff]
        %v2433 = vld [vmem:[%s2429 + $0x18] sm:$0xff]
        %v2434 = vld [vmem:[%s2429 + $0x20] sm:$0xff]
        %2435 = vmatprep.subr.mxu0 0.0
        %2436 = vmatpush1.msra.mxu0 %v2430
        %2437 = vmatprep.subr.mxu0 0.0
        %2438 = vmatpush1.msra.mxu0 %v2431
        %2439 = vmatprep.subr.mxu0 0.0
        %2440 = vmatpush1.msra.mxu0 %v2432
        %2441 = vmatprep.subr.mxu0 0.0
        %2442 = vmatpush1.msra.mxu0 %v2433
        %2443 = vmatprep.subr.mxu0 0.0
        %2444 = vmatpush1.msra.mxu0 %v2434
        %2445 = vmatprep.subr.mxu0 0.0
        %2446 = vmatpush1.msra.mxu0 0.0
        %2447 = vmatprep.subr.mxu0 0.0
        %2448 = vmatpush1.msra.mxu0 0.0
        %2449 = vmatprep.subr.mxu0 0.0
        %2450 = vmatpush1.msra.mxu0 0.0
        %2451 = vmatprep.subr.mxu0 0.0
        %2452 = vmatpush1.msra.mxu0 0.0
        %2453 = vmatprep.subr.mxu0 0.0
        %2454 = vmatpush1.msra.mxu0 0.0
        %2455 = vmatprep.subr.mxu0 0.0
        %2456 = vmatpush1.msra.mxu0 0.0
        %2457 = vmatprep.subr.mxu0 0.0
        %2458 = vmatpush1.msra.mxu0 0.0
        %2459 = vmatprep.subr.mxu0 0.0
        %2460 = vmatpush1.msra.mxu0 0.0
        %2461 = vmatprep.subr.mxu0 0.0
        %2462 = vmatpush1.msra.mxu0 0.0
        %2463 = vmatprep.subr.mxu0 0.0
        %2464 = vmatpush1.msra.mxu0 0.0
        %2465 = vmatprep.subr.mxu0 0.0
        %2466 = vmatpush1.msra.mxu0 0.0
        %2467 = vmatprep.subr.mxu0 0.0
        %2468 = vmatpush1.msra.mxu0 0.0
        %2469 = vmatprep.subr.mxu0 0.0
        %2470 = vmatpush1.msra.mxu0 0.0
        %2471 = vmatprep.subr.mxu0 0.0
        %2472 = vmatpush1.msra.mxu0 0.0
        %2473 = vmatprep.subr.mxu0 0.0
        %2474 = vmatpush1.msra.mxu0 0.0
        %2475 = vmatprep.subr.mxu0 0.0
        %2476 = vmatpush1.msra.mxu0 0.0
        %2477 = vmatprep.subr.mxu0 0.0
        %2478 = vmatpush1.msra.mxu0 0.0
        %2479 = vmatprep.subr.mxu0 0.0
        %2480 = vmatpush1.msra.mxu0 0.0
        %2481 = vmatprep.subr.mxu0 0.0
        %2482 = vmatpush1.msra.mxu0 0.0
        %2483 = vmatprep.subr.mxu0 0.0
        %2484 = vmatpush1.msra.mxu0 0.0
        %2485 = vmatprep.subr.mxu0 0.0
        %2486 = vmatpush1.msra.mxu0 0.0
        %2487 = vmatprep.subr.mxu0 0.0
        %2488 = vmatpush1.msra.mxu0 0.0
        %2489 = vmatprep.subr.mxu0 0.0
        %2490 = vmatpush1.msra.mxu0 0.0
        %2491 = vmatprep.subr.mxu0 0.0
        %2492 = vmatpush1.msra.mxu0 0.0
        %2493 = vmatprep.subr.mxu0 0.0
        %2494 = vmatpush1.msra.mxu0 0.0
        %2495 = vmatprep.subr.mxu0 0.0
        %2496 = vmatpush1.msra.mxu0 0.0
        %2497 = vmatprep.subr.mxu0 0.0
        %2498 = vmatpush1.msra.mxu0 0.0
        %2499 = vmatprep.mubr.f32.mxu0 0.0
        %2500 = vmatmul.mubr.f32.gmra.mrb[0].mxu0 %v2283
        %v2501 = vpop.f32.mrb[0].mxu0
        %v2502 = vadd.f32 0.0, %v2501
        %v2503 = vpop.f32.mrb[0].mxu0
        %2504 = vdwg.mxu0
        %v2506 = vrot.slane %v2502, 2
        %v2508 = vsel %vm1012, %v2506, %v2506
        %v2509 = vadd.f32 %v2426, %v2508
        %s2510 = scalar_lea.vmem [#allocation14], 120
        %v2511 = vld [vmem:[%s2510] sm:$0xff]
        %v2512 = vld [vmem:[%s2510 + $0x8] sm:$0xff]
        %v2513 = vld [vmem:[%s2510 + $0x10] sm:$0xff]
        %v2514 = vld [vmem:[%s2510 + $0x18] sm:$0xff]
        %v2515 = vld [vmem:[%s2510 + $0x20] sm:$0xff]
        %2516 = vmatprep.subr.mxu0 0.0
        %2517 = vmatpush1.msra.mxu0 %v2511
        %2518 = vmatprep.subr.mxu0 0.0
        %2519 = vmatpush1.msra.mxu0 %v2512
        %2520 = vmatprep.subr.mxu0 0.0
        %2521 = vmatpush1.msra.mxu0 %v2513
        %2522 = vmatprep.subr.mxu0 0.0
        %2523 = vmatpush1.msra.mxu0 %v2514
        %2524 = vmatprep.subr.mxu0 0.0
        %2525 = vmatpush1.msra.mxu0 %v2515
        %2526 = vmatprep.subr.mxu0 0.0
        %2527 = vmatpush1.msra.mxu0 0.0
        %2528 = vmatprep.subr.mxu0 0.0
        %2529 = vmatpush1.msra.mxu0 0.0
        %2530 = vmatprep.subr.mxu0 0.0
        %2531 = vmatpush1.msra.mxu0 0.0
        %2532 = vmatprep.subr.mxu0 0.0
        %2533 = vmatpush1.msra.mxu0 0.0
        %2534 = vmatprep.subr.mxu0 0.0
        %2535 = vmatpush1.msra.mxu0 0.0
        %2536 = vmatprep.subr.mxu0 0.0
        %2537 = vmatpush1.msra.mxu0 0.0
        %2538 = vmatprep.subr.mxu0 0.0
        %2539 = vmatpush1.msra.mxu0 0.0
        %2540 = vmatprep.subr.mxu0 0.0
        %2541 = vmatpush1.msra.mxu0 0.0
        %2542 = vmatprep.subr.mxu0 0.0
        %2543 = vmatpush1.msra.mxu0 0.0
        %2544 = vmatprep.subr.mxu0 0.0
        %2545 = vmatpush1.msra.mxu0 0.0
        %2546 = vmatprep.subr.mxu0 0.0
        %2547 = vmatpush1.msra.mxu0 0.0
        %2548 = vmatprep.subr.mxu0 0.0
        %2549 = vmatpush1.msra.mxu0 0.0
        %2550 = vmatprep.subr.mxu0 0.0
        %2551 = vmatpush1.msra.mxu0 0.0
        %2552 = vmatprep.subr.mxu0 0.0
        %2553 = vmatpush1.msra.mxu0 0.0
        %2554 = vmatprep.subr.mxu0 0.0
        %2555 = vmatpush1.msra.mxu0 0.0
        %2556 = vmatprep.subr.mxu0 0.0
        %2557 = vmatpush1.msra.mxu0 0.0
        %2558 = vmatprep.subr.mxu0 0.0
        %2559 = vmatpush1.msra.mxu0 0.0
        %2560 = vmatprep.subr.mxu0 0.0
        %2561 = vmatpush1.msra.mxu0 0.0
        %2562 = vmatprep.subr.mxu0 0.0
        %2563 = vmatpush1.msra.mxu0 0.0
        %2564 = vmatprep.subr.mxu0 0.0
        %2565 = vmatpush1.msra.mxu0 0.0
        %2566 = vmatprep.subr.mxu0 0.0
        %2567 = vmatpush1.msra.mxu0 0.0
        %2568 = vmatprep.subr.mxu0 0.0
        %2569 = vmatpush1.msra.mxu0 0.0
        %2570 = vmatprep.subr.mxu0 0.0
        %2571 = vmatpush1.msra.mxu0 0.0
        %2572 = vmatprep.subr.mxu0 0.0
        %2573 = vmatpush1.msra.mxu0 0.0
        %2574 = vmatprep.subr.mxu0 0.0
        %2575 = vmatpush1.msra.mxu0 0.0
        %2576 = vmatprep.subr.mxu0 0.0
        %2577 = vmatpush1.msra.mxu0 0.0
        %2578 = vmatprep.subr.mxu0 0.0
        %2579 = vmatpush1.msra.mxu0 0.0
        %2580 = vmatprep.mubr.f32.mxu0 0.0
        %2581 = vmatmul.mubr.f32.gmra.mrb[0].mxu0 %v2283
        %v2582 = vpop.f32.mrb[0].mxu0
        %v2583 = vadd.f32 0.0, %v2582
        %v2584 = vpop.f32.mrb[0].mxu0
        %2585 = vdwg.mxu0
        %v2587 = vrot.slane %v2583, 3
        %v2589 = vsel %vm1145, %v2587, %v2587
        %v2590 = vadd.f32 %v2509, %v2589
        %s2591 = scalar_lea.vmem [#allocation14], 160
        %v2592 = vld [vmem:[%s2591] sm:$0xff]
        %v2593 = vld [vmem:[%s2591 + $0x8] sm:$0xff]
        %v2594 = vld [vmem:[%s2591 + $0x10] sm:$0xff]
        %v2595 = vld [vmem:[%s2591 + $0x18] sm:$0xff]
        %v2596 = vld [vmem:[%s2591 + $0x20] sm:$0xff]
        %2597 = vmatprep.subr.mxu0 0.0
        %2598 = vmatpush1.msra.mxu0 %v2592
        %2599 = vmatprep.subr.mxu0 0.0
        %2600 = vmatpush1.msra.mxu0 %v2593
        %2601 = vmatprep.subr.mxu0 0.0
        %2602 = vmatpush1.msra.mxu0 %v2594
        %2603 = vmatprep.subr.mxu0 0.0
        %2604 = vmatpush1.msra.mxu0 %v2595
        %2605 = vmatprep.subr.mxu0 0.0
        %2606 = vmatpush1.msra.mxu0 %v2596
        %2607 = vmatprep.subr.mxu0 0.0
        %2608 = vmatpush1.msra.mxu0 0.0
        %2609 = vmatprep.subr.mxu0 0.0
        %2610 = vmatpush1.msra.mxu0 0.0
        %2611 = vmatprep.subr.mxu0 0.0
        %2612 = vmatpush1.msra.mxu0 0.0
        %2613 = vmatprep.subr.mxu0 0.0
        %2614 = vmatpush1.msra.mxu0 0.0
        %2615 = vmatprep.subr.mxu0 0.0
        %2616 = vmatpush1.msra.mxu0 0.0
        %2617 = vmatprep.subr.mxu0 0.0
        %2618 = vmatpush1.msra.mxu0 0.0
        %2619 = vmatprep.subr.mxu0 0.0
        %2620 = vmatpush1.msra.mxu0 0.0
        %2621 = vmatprep.subr.mxu0 0.0
        %2622 = vmatpush1.msra.mxu0 0.0
        %2623 = vmatprep.subr.mxu0 0.0
        %2624 = vmatpush1.msra.mxu0 0.0
        %2625 = vmatprep.subr.mxu0 0.0
        %2626 = vmatpush1.msra.mxu0 0.0
        %2627 = vmatprep.subr.mxu0 0.0
        %2628 = vmatpush1.msra.mxu0 0.0
        %2629 = vmatprep.subr.mxu0 0.0
        %2630 = vmatpush1.msra.mxu0 0.0
        %2631 = vmatprep.subr.mxu0 0.0
        %2632 = vmatpush1.msra.mxu0 0.0
        %2633 = vmatprep.subr.mxu0 0.0
        %2634 = vmatpush1.msra.mxu0 0.0
        %2635 = vmatprep.subr.mxu0 0.0
        %2636 = vmatpush1.msra.mxu0 0.0
        %2637 = vmatprep.subr.mxu0 0.0
        %2638 = vmatpush1.msra.mxu0 0.0
        %2639 = vmatprep.subr.mxu0 0.0
        %2640 = vmatpush1.msra.mxu0 0.0
        %2641 = vmatprep.subr.mxu0 0.0
        %2642 = vmatpush1.msra.mxu0 0.0
        %2643 = vmatprep.subr.mxu0 0.0
        %2644 = vmatpush1.msra.mxu0 0.0
        %2645 = vmatprep.subr.mxu0 0.0
        %2646 = vmatpush1.msra.mxu0 0.0
        %2647 = vmatprep.subr.mxu0 0.0
        %2648 = vmatpush1.msra.mxu0 0.0
        %2649 = vmatprep.subr.mxu0 0.0
        %2650 = vmatpush1.msra.mxu0 0.0
        %2651 = vmatprep.subr.mxu0 0.0
        %2652 = vmatpush1.msra.mxu0 0.0
        %2653 = vmatprep.subr.mxu0 0.0
        %2654 = vmatpush1.msra.mxu0 0.0
        %2655 = vmatprep.subr.mxu0 0.0
        %2656 = vmatpush1.msra.mxu0 0.0
        %2657 = vmatprep.subr.mxu0 0.0
        %2658 = vmatpush1.msra.mxu0 0.0
        %2659 = vmatprep.subr.mxu0 0.0
        %2660 = vmatpush1.msra.mxu0 0.0
        %2661 = vmatprep.mubr.f32.mxu0 0.0
        %2662 = vmatmul.mubr.f32.gmra.mrb[0].mxu0 %v2283
        %v2663 = vpop.f32.mrb[0].mxu0
        %v2664 = vadd.f32 0.0, %v2663
        %v2665 = vpop.f32.mrb[0].mxu0
        %2666 = vdwg.mxu0
        %v2668 = vrot.slane %v2664, 4
        %vm2670 = vcmask 1043456
        %v2671 = vsel %vm2670, %v2668, %v2668
        %v2672 = vadd.f32 %v2590, %v2671
        %v2673 = vld [vmem:[#allocation16] sm:$0x1]
        %v2674 = vld [vmem:[#allocation17] sm:$0x1]
        %vm2675 = vcmask 64512
        %v2677 = vsel %vm2675, %v2673, 0
        %2679 = vmatprep.subr.mxu0 0.0
        %2680 = vmatpush1.msra.mxu0 %v2672
        %2681 = vmatprep.subr.mxu0 0.0
        %2682 = vmatpush1.msra.mxu0 0.0
        %2683 = vmatprep.subr.mxu0 0.0
        %2684 = vmatpush1.msra.mxu0 0.0
        %2685 = vmatprep.subr.mxu0 0.0
        %2686 = vmatpush1.msra.mxu0 0.0
        %2687 = vmatprep.subr.mxu0 0.0
        %2688 = vmatpush1.msra.mxu0 0.0
        %2689 = vmatprep.subr.mxu0 0.0
        %2690 = vmatpush1.msra.mxu0 0.0
        %2691 = vmatprep.subr.mxu0 0.0
        %2692 = vmatpush1.msra.mxu0 0.0
        %2693 = vmatprep.subr.mxu0 0.0
        %2694 = vmatpush1.msra.mxu0 0.0
        %2695 = vmatprep.subr.mxu0 0.0
        %2696 = vmatpush1.msra.mxu0 0.0
        %2697 = vmatprep.subr.mxu0 0.0
        %2698 = vmatpush1.msra.mxu0 0.0
        %2699 = vmatprep.subr.mxu0 0.0
        %2700 = vmatpush1.msra.mxu0 0.0
        %2701 = vmatprep.subr.mxu0 0.0
        %2702 = vmatpush1.msra.mxu0 0.0
        %2703 = vmatprep.subr.mxu0 0.0
        %2704 = vmatpush1.msra.mxu0 0.0
        %2705 = vmatprep.subr.mxu0 0.0
        %2706 = vmatpush1.msra.mxu0 0.0
        %2707 = vmatprep.subr.mxu0 0.0
        %2708 = vmatpush1.msra.mxu0 0.0
        %2709 = vmatprep.subr.mxu0 0.0
        %2710 = vmatpush1.msra.mxu0 0.0
        %2711 = vmatprep.subr.mxu0 0.0
        %2712 = vmatpush1.msra.mxu0 0.0
        %2713 = vmatprep.subr.mxu0 0.0
        %2714 = vmatpush1.msra.mxu0 0.0
        %2715 = vmatprep.subr.mxu0 0.0
        %2716 = vmatpush1.msra.mxu0 0.0
        %2717 = vmatprep.subr.mxu0 0.0
        %2718 = vmatpush1.msra.mxu0 0.0
        %2719 = vmatprep.subr.mxu0 0.0
        %2720 = vmatpush1.msra.mxu0 0.0
        %2721 = vmatprep.subr.mxu0 0.0
        %2722 = vmatpush1.msra.mxu0 0.0
        %2723 = vmatprep.subr.mxu0 0.0
        %2724 = vmatpush1.msra.mxu0 0.0
        %2725 = vmatprep.subr.mxu0 0.0
        %2726 = vmatpush1.msra.mxu0 0.0
        %2727 = vmatprep.subr.mxu0 0.0
        %2728 = vmatpush1.msra.mxu0 0.0
        %2729 = vmatprep.subr.mxu0 0.0
        %2730 = vmatpush1.msra.mxu0 0.0
        %2731 = vmatprep.subr.mxu0 0.0
        %2732 = vmatpush1.msra.mxu0 0.0
        %2733 = vmatprep.subr.mxu0 0.0
        %2734 = vmatpush1.msra.mxu0 0.0
        %2735 = vmatprep.subr.mxu0 0.0
        %2736 = vmatpush1.msra.mxu0 0.0
        %2737 = vmatprep.subr.mxu0 0.0
        %2738 = vmatpush1.msra.mxu0 0.0
        %2739 = vmatprep.subr.mxu0 0.0
        %2740 = vmatpush1.msra.mxu0 0.0
        %2741 = vmatprep.subr.mxu0 0.0
        %2742 = vmatpush1.msra.mxu0 0.0
        %2743 = vmatprep.mubr.f32.mxu0 0.0
        %2744 = vmatmul.mubr.f32.gmra.mrb[0].mxu0 %v2677
        %v2745 = vpop.f32.mrb[0].mxu0
        %v2746 = vadd.f32 %v2674, %v2745
        %v2747 = vpop.f32.mrb[0].mxu0
        %2748 = vdwg.mxu0
        %v2749 = vmax.f32 %v2746, 0.0
        %v2750 = vld [vmem:[#allocation19] sm:$0xff]
        %v2751 = vld [vmem:[#allocation19 + $0x8] sm:$0xff]
        %v2752 = vld [vmem:[#allocation19 + $0x10] sm:$0xff]
        %v2753 = vld [vmem:[#allocation19 + $0x18] sm:$0xff]
        %v2754 = vld [vmem:[%s13] sm:$0x1]
        %vm2755 = vcmask 261120
        %v2757 = vsel %vm2755, %v2749, 0
        %2759 = vmatprep.subr.mxu0 0.0
        %2760 = vmatpush1.msra.mxu0 %v2750
        %2761 = vmatprep.subr.mxu0 0.0
        %2762 = vmatpush1.msra.mxu0 %v2751
        %2763 = vmatprep.subr.mxu0 0.0
        %2764 = vmatpush1.msra.mxu0 %v2752
        %2765 = vmatprep.subr.mxu0 0.0
        %2766 = vmatpush1.msra.mxu0 %v2753
        %2767 = vmatprep.subr.mxu0 0.0
        %2768 = vmatpush1.msra.mxu0 0.0
        %2769 = vmatprep.subr.mxu0 0.0
        %2770 = vmatpush1.msra.mxu0 0.0
        %2771 = vmatprep.subr.mxu0 0.0
        %2772 = vmatpush1.msra.mxu0 0.0
        %2773 = vmatprep.subr.mxu0 0.0
        %2774 = vmatpush1.msra.mxu0 0.0
        %2775 = vmatprep.subr.mxu0 0.0
        %2776 = vmatpush1.msra.mxu0 0.0
        %2777 = vmatprep.subr.mxu0 0.0
        %2778 = vmatpush1.msra.mxu0 0.0
        %2779 = vmatprep.subr.mxu0 0.0
        %2780 = vmatpush1.msra.mxu0 0.0
        %2781 = vmatprep.subr.mxu0 0.0
        %2782 = vmatpush1.msra.mxu0 0.0
        %2783 = vmatprep.subr.mxu0 0.0
        %2784 = vmatpush1.msra.mxu0 0.0
        %2785 = vmatprep.subr.mxu0 0.0
        %2786 = vmatpush1.msra.mxu0 0.0
        %2787 = vmatprep.subr.mxu0 0.0
        %2788 = vmatpush1.msra.mxu0 0.0
        %2789 = vmatprep.subr.mxu0 0.0
        %2790 = vmatpush1.msra.mxu0 0.0
        %2791 = vmatprep.subr.mxu0 0.0
        %2792 = vmatpush1.msra.mxu0 0.0
        %2793 = vmatprep.subr.mxu0 0.0
        %2794 = vmatpush1.msra.mxu0 0.0
        %2795 = vmatprep.subr.mxu0 0.0
        %2796 = vmatpush1.msra.mxu0 0.0
        %2797 = vmatprep.subr.mxu0 0.0
        %2798 = vmatpush1.msra.mxu0 0.0
        %2799 = vmatprep.subr.mxu0 0.0
        %2800 = vmatpush1.msra.mxu0 0.0
        %2801 = vmatprep.subr.mxu0 0.0
        %2802 = vmatpush1.msra.mxu0 0.0
        %2803 = vmatprep.subr.mxu0 0.0
        %2804 = vmatpush1.msra.mxu0 0.0
        %2805 = vmatprep.subr.mxu0 0.0
        %2806 = vmatpush1.msra.mxu0 0.0
        %2807 = vmatprep.subr.mxu0 0.0
        %2808 = vmatpush1.msra.mxu0 0.0
        %2809 = vmatprep.subr.mxu0 0.0
        %2810 = vmatpush1.msra.mxu0 0.0
        %2811 = vmatprep.subr.mxu0 0.0
        %2812 = vmatpush1.msra.mxu0 0.0
        %2813 = vmatprep.subr.mxu0 0.0
        %2814 = vmatpush1.msra.mxu0 0.0
        %2815 = vmatprep.subr.mxu0 0.0
        %2816 = vmatpush1.msra.mxu0 0.0
        %2817 = vmatprep.subr.mxu0 0.0
        %2818 = vmatpush1.msra.mxu0 0.0
        %2819 = vmatprep.subr.mxu0 0.0
        %2820 = vmatpush1.msra.mxu0 0.0
        %2821 = vmatprep.subr.mxu0 0.0
        %2822 = vmatpush1.msra.mxu0 0.0
        %2823 = vmatprep.mubr.f32.mxu0 0.0
        %2824 = vmatmul.mubr.f32.gmra.mrb[0].mxu0 %v2757
        %v2825 = vpop.f32.mrb[0].mxu0
        %v2826 = vadd.f32 %v2754, %v2825
        %v2827 = vpop.f32.mrb[0].mxu0
        %2828 = vdwg.mxu0
        %v2829 = vmax.f32 %v2826, 0.0
        %v2830 = vld [vmem:[%s14] sm:$0xff]
        %v2831 = vld [vmem:[%s14 + $0x8] sm:$0xff]
        %v2832 = vld [vmem:[%s14 + $0x10] sm:$0xff]
        %v2833 = vld [vmem:[%s14 + $0x18] sm:$0xff]
        %v2834 = vld [vmem:[%s15] sm:$0x1]
        %v2836 = vsel %vm2755, %v2829, 0
        %2838 = vmatprep.subr.mxu0 0.0
        %2839 = vmatpush1.msra.mxu0 %v2830
        %2840 = vmatprep.subr.mxu0 0.0
        %2841 = vmatpush1.msra.mxu0 %v2831
        %2842 = vmatprep.subr.mxu0 0.0
        %2843 = vmatpush1.msra.mxu0 %v2832
        %2844 = vmatprep.subr.mxu0 0.0
        %2845 = vmatpush1.msra.mxu0 %v2833
        %2846 = vmatprep.subr.mxu0 0.0
        %2847 = vmatpush1.msra.mxu0 0.0
        %2848 = vmatprep.subr.mxu0 0.0
        %2849 = vmatpush1.msra.mxu0 0.0
        %2850 = vmatprep.subr.mxu0 0.0
        %2851 = vmatpush1.msra.mxu0 0.0
        %2852 = vmatprep.subr.mxu0 0.0
        %2853 = vmatpush1.msra.mxu0 0.0
        %2854 = vmatprep.subr.mxu0 0.0
        %2855 = vmatpush1.msra.mxu0 0.0
        %2856 = vmatprep.subr.mxu0 0.0
        %2857 = vmatpush1.msra.mxu0 0.0
        %2858 = vmatprep.subr.mxu0 0.0
        %2859 = vmatpush1.msra.mxu0 0.0
        %2860 = vmatprep.subr.mxu0 0.0
        %2861 = vmatpush1.msra.mxu0 0.0
        %2862 = vmatprep.subr.mxu0 0.0
        %2863 = vmatpush1.msra.mxu0 0.0
        %2864 = vmatprep.subr.mxu0 0.0
        %2865 = vmatpush1.msra.mxu0 0.0
        %2866 = vmatprep.subr.mxu0 0.0
        %2867 = vmatpush1.msra.mxu0 0.0
        %2868 = vmatprep.subr.mxu0 0.0
        %2869 = vmatpush1.msra.mxu0 0.0
        %2870 = vmatprep.subr.mxu0 0.0
        %2871 = vmatpush1.msra.mxu0 0.0
        %2872 = vmatprep.subr.mxu0 0.0
        %2873 = vmatpush1.msra.mxu0 0.0
        %2874 = vmatprep.subr.mxu0 0.0
        %2875 = vmatpush1.msra.mxu0 0.0
        %2876 = vmatprep.subr.mxu0 0.0
        %2877 = vmatpush1.msra.mxu0 0.0
        %2878 = vmatprep.subr.mxu0 0.0
        %2879 = vmatpush1.msra.mxu0 0.0
        %2880 = vmatprep.subr.mxu0 0.0
        %2881 = vmatpush1.msra.mxu0 0.0
        %2882 = vmatprep.subr.mxu0 0.0
        %2883 = vmatpush1.msra.mxu0 0.0
        %2884 = vmatprep.subr.mxu0 0.0
        %2885 = vmatpush1.msra.mxu0 0.0
        %2886 = vmatprep.subr.mxu0 0.0
        %2887 = vmatpush1.msra.mxu0 0.0
        %2888 = vmatprep.subr.mxu0 0.0
        %2889 = vmatpush1.msra.mxu0 0.0
        %2890 = vmatprep.subr.mxu0 0.0
        %2891 = vmatpush1.msra.mxu0 0.0
        %2892 = vmatprep.subr.mxu0 0.0
        %2893 = vmatpush1.msra.mxu0 0.0
        %2894 = vmatprep.subr.mxu0 0.0
        %2895 = vmatpush1.msra.mxu0 0.0
        %2896 = vmatprep.subr.mxu0 0.0
        %2897 = vmatpush1.msra.mxu0 0.0
        %2898 = vmatprep.subr.mxu0 0.0
        %2899 = vmatpush1.msra.mxu0 0.0
        %2900 = vmatprep.subr.mxu0 0.0
        %2901 = vmatpush1.msra.mxu0 0.0
        %2902 = vmatprep.mubr.f32.mxu0 0.0
        %2903 = vmatmul.mubr.f32.gmra.mrb[0].mxu0 %v2836
        %v2904 = vpop.f32.mrb[0].mxu0
        %v2905 = vadd.f32 %v2834, %v2904
        %v2906 = vpop.f32.mrb[0].mxu0
        %2907 = vdwg.mxu0
        %2908 = vst [vmem:[%s661] sm:$0x1] %v2905
        %s2909 = sand.u32 %s385, 1
        %s2910 = scalar_lea.sflag [#allocation4], %s2909
        %s2911 = sand.u32 %s385, 1
        %s2912 = scalar_lea.vmem [#allocation20], %s2911
        // Predicated region
        $region129: #{_lambda_.1} parent=83 // pred_check
          %p2913 = pneg %p395
        $region130: #{_lambda_.1} parent=83 // pred_check_branch
          %2915 = sbr.rel (%p2913) target = $region132
        $region131: #{_lambda_.1} parent=83 // pred_region
          %s2917 = ssub.s32 16, 16
          %2918 = vsyncadd %s2910, %s2917
          %s2919 = smul.addr %s36, 16
          %s2920 = scalar_lea.hbm %s16, %s2919
          %s2922 = sshll.u32 %s2912, 4
          %s2923 = int_to_ptr.vmem [resolvable:$true] %s2922
          %2925 = dma.vmem_to_hbm [thread:$0]  %s2923, 16, %s2920, %s2910
        $region132: #{_lambda_.1} parent=83 // pred_fallthru
          _
      $region84: #{_lambda_.1} parent=5 // pred_fallthru
        _
      %p2926 = scmp.le.s32.totalorder 2, %s31
      // Predicated region
      $region133: #{_lambda_.1} parent=5 // pred_check
        %p2927 = pneg %p2926
      $region134: #{_lambda_.1} parent=5 // pred_check_branch
        %2929 = sbr.rel (%p2927) target = $region136
      $region135: #{_lambda_.1} parent=5 // pred_region
        %s2930 = ssub.s32 %s31, 2
        // Predicated region
        $region137: #{_lambda_.1} parent=135 // pred_check
          %p2931 = pneg %p401
        $region138: #{_lambda_.1} parent=135 // pred_check_branch
          %2933 = sbr.rel (%p2931) target = $region140
        $region139: #{_lambda_.1} parent=135 // pred_region
          %s2934 = sand.u32 %s386, 1
          %s2935 = scalar_lea.sflag [#allocation4], %s2934
          %s2936 = sand.u32 %s386, 1
          %s2937 = scalar_lea.vmem [#allocation20], %s2936
          %2938 = dma.done %s2935, 16
        $region140: #{_lambda_.1} parent=135 // pred_fallthru
          _
      $region136: #{_lambda_.1} parent=5 // pred_fallthru
        _
    $region6: #{_lambda_.1} parent=1 // loop_footer
      %s35 = sadd.s32 1, %s31
    $region7: #{_lambda_.1} parent=1 // loop_footer_branch
      %30 = sbr.rel target = $region3
    $region8: #{_lambda_.1} parent=1 // loop_exit
      _
    %2939 = vsyncpa [#allocation3], 1
    %s2940 = scalar_lea.sflag [#allocation3], 1
    %2941 = vsyncpa %s2940, 1
    %2942 = vsyncpa [#allocation6], 1
    %2943 = vsyncpa [#allocation9], 1
    %2944 = vsyncpa [#allocation12], 1
    %2945 = vsyncpa [#allocation15], 1
    %2946 = vsyncpa [#allocation18], 1
    %2947 = vsyncpa [#allocation4], 1
    %s2948 = scalar_lea.sflag [#allocation4], 1
    %2949 = vsyncpa %s2948, 1

</llo_original>
